<compile_context>
chip_gen: v6e
topology: v6e:2x2x1
jax: 0.10.0
libtpu: 0.0.40
codegen_flags: <defaults>
</compile_context>

<pallas_src>
import math
import functools

import jax
import jax.numpy as jnp
from jax import lax
from jax.experimental import pallas as pl
from jax.experimental.pallas import tpu as pltpu

LN_EPS = 1e-5  # torch.nn.LayerNorm default


# ------------------------------ fused kernel ------------------------------

def _layernorm(h, w, b):
    # biased variance, like torch.nn.LayerNorm
    mean = jnp.mean(h, axis=-1, keepdims=True)
    c = h - mean
    var = jnp.mean(c * c, axis=-1, keepdims=True)
    return c * lax.rsqrt(var + LN_EPS) * w + b


def fused_forward_kernel(x_ref, pe_ref, in_w_ref, in_b_ref,
                         qkv_w_ref, qkv_b_ref, out_w_ref, out_b_ref,
                         ln1_w_ref, ln1_b_ref,
                         w1_ref, b1_ref, w2_ref, b2_ref,
                         ln2_w_ref, ln2_b_ref,
                         head_w_ref, head_b_ref,
                         o_ref, *, batch, seq, num_heads, head_dim, num_layers):
    D = num_heads * head_dim
    rows = batch * seq
    f32, bf16 = jnp.float32, jnp.bfloat16
    dn2d = (((1,), (0,)), ((), ()))          # plain (M,K)@(K,N)

    # ---- input projection + positional encoding (fused, PE tiled in VMEM) ----
    h = (lax.dot_general(x_ref[...].astype(bf16), in_w_ref[...],
                         dimension_numbers=dn2d, preferred_element_type=f32)
         + in_b_ref[...]
         + jnp.tile(pe_ref[...], (batch, 1)))                    # (rows, D) f32

    # ---- attention mask, hoisted once across all layers / heads ----
    # batch_first=False: row i (= b*seq + s) attends to row j only if same s.
    ri = lax.broadcasted_iota(jnp.int32, (rows, rows), 0)
    rj = lax.broadcasted_iota(jnp.int32, (rows, rows), 1)
    same_n = (ri % seq) == (rj % seq)
    inv_scale = 1.0 / math.sqrt(head_dim)                        # torch MHA scaling

    def split_heads(m):                                          # (rows, D) -> (H, rows, hd)
        return jnp.stack(
            [m[:, i * head_dim:(i + 1) * head_dim] for i in range(num_heads)]
        ).astype(bf16)

    for li in range(num_layers):
        # --- fused QKV proj -> head-batched MHA -> out proj -> residual -> LayerNorm1 ---
        qkv = lax.dot_general(h.astype(bf16), qkv_w_ref[li],
                              dimension_numbers=dn2d,
                              preferred_element_type=f32) + qkv_b_ref[li]
        q3 = split_heads(qkv[:, :D] * inv_scale)
        k3 = split_heads(qkv[:, D:2 * D])
        v3 = split_heads(qkv[:, 2 * D:])
        s = jnp.einsum('hqd,hkd->hqk', q3, k3, preferred_element_type=f32)  # (H, rows, rows)
        s = jnp.where(same_n[None], s, -1e30)
        s = s - jnp.max(s, axis=-1, keepdims=True)
        p = jnp.exp(s)
        p = p * pl.reciprocal(jnp.sum(p, axis=-1, keepdims=True), approx=True)
        o3 = jnp.einsum('hqk,hkd->hqd', p.astype(bf16), v3,
                        preferred_element_type=f32)              # (H, rows, hd)
        attn = jnp.concatenate([o3[i] for i in range(num_heads)], axis=-1)  # (rows, D)
        attn = lax.dot_general(attn.astype(bf16), out_w_ref[li],
                               dimension_numbers=dn2d,
                               preferred_element_type=f32) + out_b_ref[li]
        # TODO(synk): nn.Dropout layers in the encoder layer are identity (eval mode).
        h = _layernorm(h + attn, ln1_w_ref[li], ln1_b_ref[li])

        # --- fused FFN (linear1 + ReLU + linear2) -> residual -> LayerNorm2 ---
        t = lax.dot_general(h.astype(bf16), w1_ref[li],
                            dimension_numbers=dn2d,
                            preferred_element_type=f32) + b1_ref[li]
        t = jnp.maximum(t, 0.0)
        y = lax.dot_general(t.astype(bf16), w2_ref[li],
                            dimension_numbers=dn2d,
                            preferred_element_type=f32) + b2_ref[li]
        h = _layernorm(h + y, ln2_w_ref[li], ln2_b_ref[li])

    # ---- x[:, -1, :] + output_layer, folded into the same kernel ----
    last = jnp.concatenate(
        [h[b * seq + seq - 1: b * seq + seq, :] for b in range(batch)], axis=0)  # (B, D)
    o_ref[...] = (lax.dot_general(last.astype(bf16), head_w_ref[...],
                                  dimension_numbers=dn2d,
                                  preferred_element_type=f32) + head_b_ref[...])


# ------------------------------ pallas_call wrapper ------------------------------

def _full(shape):
    n = len(shape)
    return pl.BlockSpec(shape, lambda i, n=n: (0,) * n)


@functools.partial(jax.jit, static_argnames=("num_heads", "num_outputs"))
def forward(x, params, *, num_heads, num_outputs):
    B, S, C = x.shape
    D = params['in_w'].shape[1]
    L = params['qkv_w'].shape[0]
    rows = B * S
    NP = params['head_w'].shape[1]

    kern = functools.partial(fused_forward_kernel, batch=B, seq=S,
                             num_heads=num_heads, head_dim=D // num_heads,
                             num_layers=L)
    args = (x.reshape(rows, C), params['pe'][:S],
            params['in_w'], params['in_b'],
            params['qkv_w'], params['qkv_b'], params['out_w'], params['out_b'],
            params['ln1_w'], params['ln1_b'],
            params['w1'], params['b1'], params['w2'], params['b2'],
            params['ln2_w'], params['ln2_b'],
            params['head_w'], params['head_b'])

    out = pl.pallas_call(
        kern,
        out_shape=jax.ShapeDtypeStruct((B, NP), jnp.float32),
        grid=(1,),
        in_specs=[_full(a.shape) for a in args],
        out_specs=_full((B, NP)),
        compiler_params=pltpu.CompilerParams(
            dimension_semantics=("arbitrary",),
            vmem_limit_bytes=32 * 1024 * 1024),   # explicit: safe under v5e's smaller default
    )(*args)
    return out[:, :num_outputs]


# ------------------------------ deterministic parameter setup ------------------------------

def _init_linear(key, out_f, in_f):
    k1, k2 = jax.random.split(key)
    bound = 1.0 / math.sqrt(in_f)
    w = jax.random.uniform(k1, (out_f, in_f), jnp.float32, -bound, bound)
    b = jax.random.uniform(k2, (1, out_f), jnp.float32, -bound, bound)
    return w, b


def _make_pe(max_len, d_model):
    position = jnp.arange(max_len, dtype=jnp.float32)[:, None]
    div_term = jnp.exp(jnp.arange(0, d_model, 2, dtype=jnp.float32)
                       * (-math.log(10000.0) / d_model))
    pe = jnp.zeros((max_len, d_model), jnp.float32)
    pe = pe.at[:, 0::2].set(jnp.sin(position * div_term))
    pe = pe.at[:, 1::2].set(jnp.cos(position * div_term))
    return pe


def init_params(key, *, num_channels, d_model, num_heads, num_layers,
                dim_feedforward, num_outputs, window_size):
    """Torch-convention parameters (Linear weights are (out_features, in_features))."""
    del num_heads  # head split happens inside the fused kernel
    keys = jax.random.split(key, 2 + num_layers)
    in_w, in_b = _init_linear(keys[0], d_model, num_channels)
    out_w, out_b = _init_linear(keys[1], num_outputs, d_model)
    layers = []
    for li in range(num_layers):
        k = jax.random.split(keys[2 + li], 4)
        qkv_w, qkv_b = _init_linear(k[0], 3 * d_model, d_model)   # in_proj
        o_w, o_b = _init_linear(k[1], d_model, d_model)           # out_proj
        w1, b1 = _init_linear(k[2], dim_feedforward, d_model)     # linear1
        w2, b2 = _init_linear(k[3], d_model, dim_feedforward)     # linear2
        layers.append(dict(qkv_w=qkv_w, qkv_b=qkv_b, out_w=o_w, out_b=o_b,
                           w1=w1, b1=b1, w2=w2, b2=b2,
                           ln1_w=jnp.ones((1, d_model), jnp.float32),
                           ln1_b=jnp.zeros((1, d_model), jnp.float32),
                           ln2_w=jnp.ones((1, d_model), jnp.float32),
                           ln2_b=jnp.zeros((1, d_model), jnp.float32)))
    return dict(in_w=in_w, in_b=in_b, out_w=out_w, out_b=out_b,
                pe=_make_pe(window_size, d_model), layers=layers)


def prepare_params(p):
    """Kernel-ready params: matmul weights pre-transposed to (K, N) bf16 (f32 accumulation
    in-kernel), per-layer weights stacked with a leading layer axis, and the output head
    lane-padded to 128 columns."""
    t16 = lambda w: jnp.asarray(w.T, jnp.bfloat16)
    Ls = p['layers']
    stacked = dict(
        qkv_w=jnp.stack([t16(L['qkv_w']) for L in Ls]),   # (L, D, 3D) bf16
        qkv_b=jnp.stack([L['qkv_b'] for L in Ls]),         # (L, 1, 3D) f32
        out_w=jnp.stack([t16(L['out_w']) for L in Ls]),    # (L, D, D)
        out_b=jnp.stack([L['out_b'] for L in Ls]),
        w1=jnp.stack([t16(L['w1']) for L in Ls]),           # (L, D, FF)
        b1=jnp.stack([L['b1'] for L in Ls]),
        w2=jnp.stack([t16(L['w2']) for L in Ls]),            # (L, FF, D)
        b2=jnp.stack([L['b2'] for L in Ls]),
        ln1_w=jnp.stack([L['ln1_w'] for L in Ls]),
        ln1_b=jnp.stack([L['ln1_b'] for L in Ls]),
        ln2_w=jnp.stack([L['ln2_w'] for L in Ls]),
        ln2_b=jnp.stack([L['ln2_b'] for L in Ls]),
    )
    n_out, D = p['out_w'].shape
    n_pad = ((n_out + 127) // 128) * 128
    head_w = jnp.zeros((D, n_pad), jnp.float32).at[:, :n_out].set(p['out_w'].T)
    head_b = jnp.zeros((1, n_pad), jnp.float32).at[:, :n_out].set(p['out_b'])
    return dict(in_w=t16(p['in_w']), in_b=p['in_b'], pe=p['pe'],
                head_w=head_w.astype(jnp.bfloat16), head_b=head_b, **stacked)


if __name__ == "__main__":
    # Small shapes consistent with the module's constructor arguments.
    B, S = 2, 8                 # batch, window_size (sequence length)
    NUM_CHANNELS = 16
    D_MODEL, NUM_HEADS = 64, 4
    NUM_LAYERS, DIM_FF = 2, 128
    NUM_OUTPUTS = 5

    key = jax.random.PRNGKey(0)
    k_x, k_p = jax.random.split(key)
    x = jax.random.normal(k_x, (B, S, NUM_CHANNELS), jnp.float32)
    params = prepare_params(init_params(
        k_p, num_channels=NUM_CHANNELS, d_model=D_MODEL, num_heads=NUM_HEADS,
        num_layers=NUM_LAYERS, dim_feedforward=DIM_FF,
        num_outputs=NUM_OUTPUTS, window_size=S))

    y = forward(x, params, num_heads=NUM_HEADS, num_outputs=NUM_OUTPUTS)
    y = jax.block_until_ready(y)
    assert y.shape == (B, NUM_OUTPUTS) and y.dtype == jnp.float32
    print("KERNEL_OK")
</pallas_src>

<mosaic_0001>
module attributes {stable_mosaic.version = 11 : i64} {
  func.func @fused_forward_kernel(%arg0: i32, %arg1: memref<16x16xf32, #tpu.memory_space<vmem>>, %arg2: memref<8x64xf32, #tpu.memory_space<vmem>>, %arg3: memref<16x64xbf16, #tpu.memory_space<vmem>>, %arg4: memref<1x64xf32, #tpu.memory_space<vmem>>, %arg5: memref<2x64x192xbf16, #tpu.memory_space<vmem>>, %arg6: memref<2x1x192xf32, #tpu.memory_space<vmem>>, %arg7: memref<2x64x64xbf16, #tpu.memory_space<vmem>>, %arg8: memref<2x1x64xf32, #tpu.memory_space<vmem>>, %arg9: memref<2x1x64xf32, #tpu.memory_space<vmem>>, %arg10: memref<2x1x64xf32, #tpu.memory_space<vmem>>, %arg11: memref<2x64x128xbf16, #tpu.memory_space<vmem>>, %arg12: memref<2x1x128xf32, #tpu.memory_space<vmem>>, %arg13: memref<2x128x64xbf16, #tpu.memory_space<vmem>>, %arg14: memref<2x1x64xf32, #tpu.memory_space<vmem>>, %arg15: memref<2x1x64xf32, #tpu.memory_space<vmem>>, %arg16: memref<2x1x64xf32, #tpu.memory_space<vmem>>, %arg17: memref<64x128xbf16, #tpu.memory_space<vmem>>, %arg18: memref<1x128xf32, #tpu.memory_space<vmem>>, %arg19: memref<2x128xf32, #tpu.memory_space<vmem>>) attributes {dimension_semantics = [#tpu.dimension_semantics<arbitrary>], iteration_bounds = array<i64: 1>, scalar_prefetch = 0 : i64, scratch_operands = 0 : i64, tpu.core_type = #tpu.core_type<tc>, window_params = [{pipeline_mode = #tpu.pipeline_mode<synchronous>, transform_indices = @transform_0, window_bounds = array<i64: 16, 16>}, {pipeline_mode = #tpu.pipeline_mode<synchronous>, transform_indices = @transform_1, window_bounds = array<i64: 8, 64>}, {pipeline_mode = #tpu.pipeline_mode<synchronous>, transform_indices = @transform_2, window_bounds = array<i64: 16, 64>}, {pipeline_mode = #tpu.pipeline_mode<synchronous>, transform_indices = @transform_3, window_bounds = array<i64: 1, 64>}, {pipeline_mode = #tpu.pipeline_mode<synchronous>, transform_indices = @transform_4, window_bounds = array<i64: 2, 64, 192>}, {pipeline_mode = #tpu.pipeline_mode<synchronous>, transform_indices = @transform_5, window_bounds = array<i64: 2, 1, 192>}, {pipeline_mode = #tpu.pipeline_mode<synchronous>, transform_indices = @transform_6, window_bounds = array<i64: 2, 64, 64>}, {pipeline_mode = #tpu.pipeline_mode<synchronous>, transform_indices = @transform_7, window_bounds = array<i64: 2, 1, 64>}, {pipeline_mode = #tpu.pipeline_mode<synchronous>, transform_indices = @transform_8, window_bounds = array<i64: 2, 1, 64>}, {pipeline_mode = #tpu.pipeline_mode<synchronous>, transform_indices = @transform_9, window_bounds = array<i64: 2, 1, 64>}, {pipeline_mode = #tpu.pipeline_mode<synchronous>, transform_indices = @transform_10, window_bounds = array<i64: 2, 64, 128>}, {pipeline_mode = #tpu.pipeline_mode<synchronous>, transform_indices = @transform_11, window_bounds = array<i64: 2, 1, 128>}, {pipeline_mode = #tpu.pipeline_mode<synchronous>, transform_indices = @transform_12, window_bounds = array<i64: 2, 128, 64>}, {pipeline_mode = #tpu.pipeline_mode<synchronous>, transform_indices = @transform_13, window_bounds = array<i64: 2, 1, 64>}, {pipeline_mode = #tpu.pipeline_mode<synchronous>, transform_indices = @transform_14, window_bounds = array<i64: 2, 1, 64>}, {pipeline_mode = #tpu.pipeline_mode<synchronous>, transform_indices = @transform_15, window_bounds = array<i64: 2, 1, 64>}, {pipeline_mode = #tpu.pipeline_mode<synchronous>, transform_indices = @transform_16, window_bounds = array<i64: 64, 128>}, {pipeline_mode = #tpu.pipeline_mode<synchronous>, transform_indices = @transform_17, window_bounds = array<i64: 1, 128>}, {pipeline_mode = #tpu.pipeline_mode<synchronous>, transform_indices = @transform_18, window_bounds = array<i64: 2, 128>}]} {
    %c0 = arith.constant 0 : index
    %c0_0 = arith.constant 0 : index
    %0 = vector.load %arg1[%c0, %c0_0] : memref<16x16xf32, #tpu.memory_space<vmem>>, vector<16x16xf32>
    %1 = arith.truncf %0 : vector<16x16xf32> to vector<16x16xbf16>
    %c0_1 = arith.constant 0 : index
    %c0_2 = arith.constant 0 : index
    %2 = vector.load %arg3[%c0_1, %c0_2] : memref<16x64xbf16, #tpu.memory_space<vmem>>, vector<16x64xbf16>
    %cst = arith.constant dense<0.000000e+00> : vector<16x64xf32>
    %3 = tpu.matmul %1, %2, %cst {dimension_numbers = #tpu.dot_dimension_numbers<[1], [0], [0], [1], [0, 0, 1, 1], [], []>} : vector<16x16xbf16>, vector<16x64xbf16>, vector<16x64xf32> -> vector<16x64xf32>
    %c0_3 = arith.constant 0 : index
    %c0_4 = arith.constant 0 : index
    %4 = vector.load %arg4[%c0_3, %c0_4] : memref<1x64xf32, #tpu.memory_space<vmem>>, vector<1x64xf32>
    %5 = vector.broadcast %4 : vector<1x64xf32> to vector<16x64xf32>
    %6 = arith.addf %3, %5 : vector<16x64xf32>
    %c0_5 = arith.constant 0 : index
    %c0_6 = arith.constant 0 : index
    %7 = vector.load %arg2[%c0_5, %c0_6] : memref<8x64xf32, #tpu.memory_space<vmem>>, vector<8x64xf32>
    %8 = tpu.concatenate %7, %7 in 0 : vector<8x64xf32>, vector<8x64xf32> -> vector<16x64xf32>
    %9 = arith.addf %6, %8 : vector<16x64xf32>
    %10 = tpu.iota {dimensions = array<i32: 0>} : vector<16x16xi32>
    %11 = tpu.iota {dimensions = array<i32: 1>} : vector<16x16xi32>
    %c8_i32 = arith.constant 8 : i32
    %c0_i32 = arith.constant 0 : i32
    %12 = arith.cmpi eq, %c8_i32, %c0_i32 : i32
    %c1_i32 = arith.constant 1 : i32
    %13 = arith.select %12, %c1_i32, %c8_i32 : i32
    %14 = vector.broadcast %13 : i32 to vector<16x16xi32>
    %15 = arith.remsi %10, %14 : vector<16x16xi32>
    %c0_i32_7 = arith.constant 0 : i32
    %16 = vector.broadcast %c0_i32_7 : i32 to vector<16x16xi32>
    %17 = arith.cmpi ne, %15, %16 : vector<16x16xi32>
    %c0_i32_8 = arith.constant 0 : i32
    %18 = vector.broadcast %c0_i32_8 : i32 to vector<16x16xi32>
    %19 = arith.cmpi slt, %15, %18 : vector<16x16xi32>
    %c0_i32_9 = arith.constant 0 : i32
    %20 = arith.cmpi slt, %13, %c0_i32_9 : i32
    %21 = vector.broadcast %20 : i1 to vector<16x16xi1>
    %22 = vector.broadcast %21 : vector<16x16xi1> to vector<16x16xi1>
    %23 = arith.xori %19, %22 : vector<16x16xi1>
    %24 = arith.andi %23, %17 : vector<16x16xi1>
    %25 = vector.broadcast %13 : i32 to vector<16x16xi32>
    %26 = arith.addi %15, %25 : vector<16x16xi32>
    %27 = arith.select %24, %26, %15 : vector<16x16xi1>, vector<16x16xi32>
    %c8_i32_10 = arith.constant 8 : i32
    %c0_i32_11 = arith.constant 0 : i32
    %28 = arith.cmpi eq, %c8_i32_10, %c0_i32_11 : i32
    %c1_i32_12 = arith.constant 1 : i32
    %29 = arith.select %28, %c1_i32_12, %c8_i32_10 : i32
    %30 = vector.broadcast %29 : i32 to vector<16x16xi32>
    %31 = arith.remsi %11, %30 : vector<16x16xi32>
    %c0_i32_13 = arith.constant 0 : i32
    %32 = vector.broadcast %c0_i32_13 : i32 to vector<16x16xi32>
    %33 = arith.cmpi ne, %31, %32 : vector<16x16xi32>
    %c0_i32_14 = arith.constant 0 : i32
    %34 = vector.broadcast %c0_i32_14 : i32 to vector<16x16xi32>
    %35 = arith.cmpi slt, %31, %34 : vector<16x16xi32>
    %c0_i32_15 = arith.constant 0 : i32
    %36 = arith.cmpi slt, %29, %c0_i32_15 : i32
    %37 = vector.broadcast %36 : i1 to vector<16x16xi1>
    %38 = vector.broadcast %37 : vector<16x16xi1> to vector<16x16xi1>
    %39 = arith.xori %35, %38 : vector<16x16xi1>
    %40 = arith.andi %39, %33 : vector<16x16xi1>
    %41 = vector.broadcast %29 : i32 to vector<16x16xi32>
    %42 = arith.addi %31, %41 : vector<16x16xi32>
    %43 = arith.select %40, %42, %31 : vector<16x16xi1>, vector<16x16xi32>
    %44 = arith.cmpi eq, %27, %43 : vector<16x16xi32>
    %45 = arith.truncf %9 : vector<16x64xf32> to vector<16x64xbf16>
    %c0_16 = arith.constant 0 : index
    %c0_17 = arith.constant 0 : index
    %c0_18 = arith.constant 0 : index
    %46 = vector.load %arg5[%c0_16, %c0_17, %c0_18] : memref<2x64x192xbf16, #tpu.memory_space<vmem>>, vector<1x64x192xbf16>
    %47 = vector.shape_cast %46 : vector<1x64x192xbf16> to vector<64x192xbf16>
    %cst_19 = arith.constant dense<0.000000e+00> : vector<16x192xf32>
    %48 = tpu.matmul %45, %47, %cst_19 {dimension_numbers = #tpu.dot_dimension_numbers<[1], [0], [0], [1], [0, 0, 1, 1], [], []>} : vector<16x64xbf16>, vector<64x192xbf16>, vector<16x192xf32> -> vector<16x192xf32>
    %c0_20 = arith.constant 0 : index
    %c0_21 = arith.constant 0 : index
    %c0_22 = arith.constant 0 : index
    %49 = vector.load %arg6[%c0_20, %c0_21, %c0_22] : memref<2x1x192xf32, #tpu.memory_space<vmem>>, vector<1x1x192xf32>
    %50 = vector.shape_cast %49 : vector<1x1x192xf32> to vector<1x192xf32>
    %51 = vector.broadcast %50 : vector<1x192xf32> to vector<16x192xf32>
    %52 = arith.addf %48, %51 : vector<16x192xf32>
    %53 = vector.extract_strided_slice %52 {offsets = [0, 0], sizes = [16, 64], strides = [1, 1]} : vector<16x192xf32> to vector<16x64xf32>
    %cst_23 = arith.constant 2.500000e-01 : f32
    %54 = vector.broadcast %cst_23 : f32 to vector<16x64xf32>
    %55 = arith.mulf %53, %54 : vector<16x64xf32>
    %56 = vector.extract_strided_slice %55 {offsets = [0, 0], sizes = [16, 16], strides = [1, 1]} : vector<16x64xf32> to vector<16x16xf32>
    %57 = vector.extract_strided_slice %55 {offsets = [0, 16], sizes = [16, 16], strides = [1, 1]} : vector<16x64xf32> to vector<16x16xf32>
    %58 = vector.extract_strided_slice %55 {offsets = [0, 32], sizes = [16, 16], strides = [1, 1]} : vector<16x64xf32> to vector<16x16xf32>
    %59 = vector.extract_strided_slice %55 {offsets = [0, 48], sizes = [16, 16], strides = [1, 1]} : vector<16x64xf32> to vector<16x16xf32>
    %60 = vector.shape_cast %56 : vector<16x16xf32> to vector<1x16x16xf32>
    %61 = vector.shape_cast %57 : vector<16x16xf32> to vector<1x16x16xf32>
    %62 = vector.shape_cast %58 : vector<16x16xf32> to vector<1x16x16xf32>
    %63 = vector.shape_cast %59 : vector<16x16xf32> to vector<1x16x16xf32>
    %64 = tpu.concatenate %60, %61, %62, %63 in 0 : vector<1x16x16xf32>, vector<1x16x16xf32>, vector<1x16x16xf32>, vector<1x16x16xf32> -> vector<4x16x16xf32>
    %65 = arith.truncf %64 : vector<4x16x16xf32> to vector<4x16x16xbf16>
    %66 = vector.extract_strided_slice %52 {offsets = [0, 64], sizes = [16, 64], strides = [1, 1]} : vector<16x192xf32> to vector<16x64xf32>
    %67 = vector.extract_strided_slice %66 {offsets = [0, 0], sizes = [16, 16], strides = [1, 1]} : vector<16x64xf32> to vector<16x16xf32>
    %68 = vector.extract_strided_slice %66 {offsets = [0, 16], sizes = [16, 16], strides = [1, 1]} : vector<16x64xf32> to vector<16x16xf32>
    %69 = vector.extract_strided_slice %66 {offsets = [0, 32], sizes = [16, 16], strides = [1, 1]} : vector<16x64xf32> to vector<16x16xf32>
    %70 = vector.extract_strided_slice %66 {offsets = [0, 48], sizes = [16, 16], strides = [1, 1]} : vector<16x64xf32> to vector<16x16xf32>
    %71 = vector.shape_cast %67 : vector<16x16xf32> to vector<1x16x16xf32>
    %72 = vector.shape_cast %68 : vector<16x16xf32> to vector<1x16x16xf32>
    %73 = vector.shape_cast %69 : vector<16x16xf32> to vector<1x16x16xf32>
    %74 = vector.shape_cast %70 : vector<16x16xf32> to vector<1x16x16xf32>
    %75 = tpu.concatenate %71, %72, %73, %74 in 0 : vector<1x16x16xf32>, vector<1x16x16xf32>, vector<1x16x16xf32>, vector<1x16x16xf32> -> vector<4x16x16xf32>
    %76 = arith.truncf %75 : vector<4x16x16xf32> to vector<4x16x16xbf16>
    %77 = vector.extract_strided_slice %52 {offsets = [0, 128], sizes = [16, 64], strides = [1, 1]} : vector<16x192xf32> to vector<16x64xf32>
    %78 = vector.extract_strided_slice %77 {offsets = [0, 0], sizes = [16, 16], strides = [1, 1]} : vector<16x64xf32> to vector<16x16xf32>
    %79 = vector.extract_strided_slice %77 {offsets = [0, 16], sizes = [16, 16], strides = [1, 1]} : vector<16x64xf32> to vector<16x16xf32>
    %80 = vector.extract_strided_slice %77 {offsets = [0, 32], sizes = [16, 16], strides = [1, 1]} : vector<16x64xf32> to vector<16x16xf32>
    %81 = vector.extract_strided_slice %77 {offsets = [0, 48], sizes = [16, 16], strides = [1, 1]} : vector<16x64xf32> to vector<16x16xf32>
    %82 = vector.shape_cast %78 : vector<16x16xf32> to vector<1x16x16xf32>
    %83 = vector.shape_cast %79 : vector<16x16xf32> to vector<1x16x16xf32>
    %84 = vector.shape_cast %80 : vector<16x16xf32> to vector<1x16x16xf32>
    %85 = vector.shape_cast %81 : vector<16x16xf32> to vector<1x16x16xf32>
    %86 = tpu.concatenate %82, %83, %84, %85 in 0 : vector<1x16x16xf32>, vector<1x16x16xf32>, vector<1x16x16xf32>, vector<1x16x16xf32> -> vector<4x16x16xf32>
    %87 = arith.truncf %86 : vector<4x16x16xf32> to vector<4x16x16xbf16>
    "tpu.trace_start"() <{level = 10 : i32, message = "hqd,hkd->hqk"}> : () -> ()
    %cst_24 = arith.constant dense<0.000000e+00> : vector<4x16x16xf32>
    %88 = tpu.matmul %65, %76, %cst_24 {dimension_numbers = #tpu.dot_dimension_numbers<[2], [2], [1], [1], [0, 0, 0, 1, 1, 1], [0], [0]>} : vector<4x16x16xbf16>, vector<4x16x16xbf16>, vector<4x16x16xf32> -> vector<4x16x16xf32>
    "tpu.trace_stop"() : () -> ()
    %89 = vector.shape_cast %44 : vector<16x16xi1> to vector<1x16x16xi1>
    %cst_25 = arith.constant -1.000000e+30 : f32
    %90 = vector.shape_cast %89 : vector<1x16x16xi1> to vector<1x16x16xi1>
    %91 = vector.broadcast %90 : vector<1x16x16xi1> to vector<4x16x16xi1>
    %92 = vector.broadcast %cst_25 : f32 to vector<4x16x16xf32>
    %93 = arith.select %91, %88, %92 : vector<4x16x16xi1>, vector<4x16x16xf32>
    %cst_26 = arith.constant dense<0xFF800000> : vector<4x16xf32>
    %94 = vector.multi_reduction <maximumf>, %93, %cst_26 [2] : vector<4x16x16xf32> to vector<4x16xf32>
    %95 = vector.shape_cast %94 : vector<4x16xf32> to vector<4x16x1xf32>
    %96 = vector.broadcast %95 : vector<4x16x1xf32> to vector<4x16x16xf32>
    %97 = arith.subf %93, %96 : vector<4x16x16xf32>
    %98 = math.exp %97 : vector<4x16x16xf32>
    %cst_27 = arith.constant dense<0.000000e+00> : vector<4x16xf32>
    %99 = vector.multi_reduction <add>, %98, %cst_27 [2] : vector<4x16x16xf32> to vector<4x16xf32>
    %100 = vector.shape_cast %99 : vector<4x16xf32> to vector<4x16x1xf32>
    %101 = tpu.reciprocal %100 {approx = true} : vector<4x16x1xf32> -> vector<4x16x1xf32>
    %102 = vector.broadcast %101 : vector<4x16x1xf32> to vector<4x16x16xf32>
    %103 = arith.mulf %98, %102 : vector<4x16x16xf32>
    %104 = arith.truncf %103 : vector<4x16x16xf32> to vector<4x16x16xbf16>
    "tpu.trace_start"() <{level = 10 : i32, message = "hqk,hkd->hqd"}> : () -> ()
    %cst_28 = arith.constant dense<0.000000e+00> : vector<4x16x16xf32>
    %105 = tpu.matmul %104, %87, %cst_28 {dimension_numbers = #tpu.dot_dimension_numbers<[2], [1], [1], [2], [0, 0, 0, 1, 1, 2], [0], [0]>} : vector<4x16x16xbf16>, vector<4x16x16xbf16>, vector<4x16x16xf32> -> vector<4x16x16xf32>
    "tpu.trace_stop"() : () -> ()
    %106 = vector.extract_strided_slice %105 {offsets = [0, 0, 0], sizes = [1, 16, 16], strides = [1, 1, 1]} : vector<4x16x16xf32> to vector<1x16x16xf32>
    %107 = vector.shape_cast %106 : vector<1x16x16xf32> to vector<16x16xf32>
    %108 = vector.extract_strided_slice %105 {offsets = [1, 0, 0], sizes = [1, 16, 16], strides = [1, 1, 1]} : vector<4x16x16xf32> to vector<1x16x16xf32>
    %109 = vector.shape_cast %108 : vector<1x16x16xf32> to vector<16x16xf32>
    %110 = vector.extract_strided_slice %105 {offsets = [2, 0, 0], sizes = [1, 16, 16], strides = [1, 1, 1]} : vector<4x16x16xf32> to vector<1x16x16xf32>
    %111 = vector.shape_cast %110 : vector<1x16x16xf32> to vector<16x16xf32>
    %112 = vector.extract_strided_slice %105 {offsets = [3, 0, 0], sizes = [1, 16, 16], strides = [1, 1, 1]} : vector<4x16x16xf32> to vector<1x16x16xf32>
    %113 = vector.shape_cast %112 : vector<1x16x16xf32> to vector<16x16xf32>
    %114 = tpu.concatenate %107, %109, %111, %113 in 1 : vector<16x16xf32>, vector<16x16xf32>, vector<16x16xf32>, vector<16x16xf32> -> vector<16x64xf32>
    %115 = arith.truncf %114 : vector<16x64xf32> to vector<16x64xbf16>
    %c0_29 = arith.constant 0 : index
    %c0_30 = arith.constant 0 : index
    %c0_31 = arith.constant 0 : index
    %116 = vector.load %arg7[%c0_29, %c0_30, %c0_31] : memref<2x64x64xbf16, #tpu.memory_space<vmem>>, vector<1x64x64xbf16>
    %117 = vector.shape_cast %116 : vector<1x64x64xbf16> to vector<64x64xbf16>
    %cst_32 = arith.constant dense<0.000000e+00> : vector<16x64xf32>
    %118 = tpu.matmul %115, %117, %cst_32 {dimension_numbers = #tpu.dot_dimension_numbers<[1], [0], [0], [1], [0, 0, 1, 1], [], []>} : vector<16x64xbf16>, vector<64x64xbf16>, vector<16x64xf32> -> vector<16x64xf32>
    %c0_33 = arith.constant 0 : index
    %c0_34 = arith.constant 0 : index
    %c0_35 = arith.constant 0 : index
    %119 = vector.load %arg8[%c0_33, %c0_34, %c0_35] : memref<2x1x64xf32, #tpu.memory_space<vmem>>, vector<1x1x64xf32>
    %120 = vector.shape_cast %119 : vector<1x1x64xf32> to vector<1x64xf32>
    %121 = vector.broadcast %120 : vector<1x64xf32> to vector<16x64xf32>
    %122 = arith.addf %118, %121 : vector<16x64xf32>
    %123 = arith.addf %9, %122 : vector<16x64xf32>
    %c0_36 = arith.constant 0 : index
    %c0_37 = arith.constant 0 : index
    %c0_38 = arith.constant 0 : index
    %124 = vector.load %arg9[%c0_36, %c0_37, %c0_38] : memref<2x1x64xf32, #tpu.memory_space<vmem>>, vector<1x1x64xf32>
    %125 = vector.shape_cast %124 : vector<1x1x64xf32> to vector<1x64xf32>
    %c0_39 = arith.constant 0 : index
    %c0_40 = arith.constant 0 : index
    %c0_41 = arith.constant 0 : index
    %126 = vector.load %arg10[%c0_39, %c0_40, %c0_41] : memref<2x1x64xf32, #tpu.memory_space<vmem>>, vector<1x1x64xf32>
    %127 = vector.shape_cast %126 : vector<1x1x64xf32> to vector<1x64xf32>
    %cst_42 = arith.constant dense<0.000000e+00> : vector<16xf32>
    %128 = vector.multi_reduction <add>, %123, %cst_42 [1] : vector<16x64xf32> to vector<16xf32>
    %129 = vector.shape_cast %128 : vector<16xf32> to vector<16x1xf32>
    %cst_43 = arith.constant 6.400000e+01 : f32
    %130 = vector.broadcast %cst_43 : f32 to vector<16x1xf32>
    %131 = arith.divf %129, %130 : vector<16x1xf32>
    %132 = vector.broadcast %131 : vector<16x1xf32> to vector<16x64xf32>
    %133 = arith.subf %123, %132 : vector<16x64xf32>
    %134 = arith.mulf %133, %133 : vector<16x64xf32>
    %cst_44 = arith.constant dense<0.000000e+00> : vector<16xf32>
    %135 = vector.multi_reduction <add>, %134, %cst_44 [1] : vector<16x64xf32> to vector<16xf32>
    %136 = vector.shape_cast %135 : vector<16xf32> to vector<16x1xf32>
    %cst_45 = arith.constant 6.400000e+01 : f32
    %137 = vector.broadcast %cst_45 : f32 to vector<16x1xf32>
    %138 = arith.divf %136, %137 : vector<16x1xf32>
    %cst_46 = arith.constant 9.99999974E-6 : f32
    %139 = vector.broadcast %cst_46 : f32 to vector<16x1xf32>
    %140 = arith.addf %138, %139 : vector<16x1xf32>
    %141 = math.rsqrt %140 : vector<16x1xf32>
    %142 = vector.broadcast %141 : vector<16x1xf32> to vector<16x64xf32>
    %143 = arith.mulf %133, %142 : vector<16x64xf32>
    %144 = vector.broadcast %125 : vector<1x64xf32> to vector<16x64xf32>
    %145 = arith.mulf %143, %144 : vector<16x64xf32>
    %146 = vector.broadcast %127 : vector<1x64xf32> to vector<16x64xf32>
    %147 = arith.addf %145, %146 : vector<16x64xf32>
    %148 = arith.truncf %147 : vector<16x64xf32> to vector<16x64xbf16>
    %c0_47 = arith.constant 0 : index
    %c0_48 = arith.constant 0 : index
    %c0_49 = arith.constant 0 : index
    %149 = vector.load %arg11[%c0_47, %c0_48, %c0_49] : memref<2x64x128xbf16, #tpu.memory_space<vmem>>, vector<1x64x128xbf16>
    %150 = vector.shape_cast %149 : vector<1x64x128xbf16> to vector<64x128xbf16>
    %cst_50 = arith.constant dense<0.000000e+00> : vector<16x128xf32>
    %151 = tpu.matmul %148, %150, %cst_50 {dimension_numbers = #tpu.dot_dimension_numbers<[1], [0], [0], [1], [0, 0, 1, 1], [], []>} : vector<16x64xbf16>, vector<64x128xbf16>, vector<16x128xf32> -> vector<16x128xf32>
    %c0_51 = arith.constant 0 : index
    %c0_52 = arith.constant 0 : index
    %c0_53 = arith.constant 0 : index
    %152 = vector.load %arg12[%c0_51, %c0_52, %c0_53] : memref<2x1x128xf32, #tpu.memory_space<vmem>>, vector<1x1x128xf32>
    %153 = vector.shape_cast %152 : vector<1x1x128xf32> to vector<1x128xf32>
    %154 = vector.broadcast %153 : vector<1x128xf32> to vector<16x128xf32>
    %155 = arith.addf %151, %154 : vector<16x128xf32>
    %cst_54 = arith.constant 0.000000e+00 : f32
    %156 = vector.broadcast %cst_54 : f32 to vector<16x128xf32>
    %157 = arith.maximumf %155, %156 : vector<16x128xf32>
    %158 = arith.truncf %157 : vector<16x128xf32> to vector<16x128xbf16>
    %c0_55 = arith.constant 0 : index
    %c0_56 = arith.constant 0 : index
    %c0_57 = arith.constant 0 : index
    %159 = vector.load %arg13[%c0_55, %c0_56, %c0_57] : memref<2x128x64xbf16, #tpu.memory_space<vmem>>, vector<1x128x64xbf16>
    %160 = vector.shape_cast %159 : vector<1x128x64xbf16> to vector<128x64xbf16>
    %cst_58 = arith.constant dense<0.000000e+00> : vector<16x64xf32>
    %161 = tpu.matmul %158, %160, %cst_58 {dimension_numbers = #tpu.dot_dimension_numbers<[1], [0], [0], [1], [0, 0, 1, 1], [], []>} : vector<16x128xbf16>, vector<128x64xbf16>, vector<16x64xf32> -> vector<16x64xf32>
    %c0_59 = arith.constant 0 : index
    %c0_60 = arith.constant 0 : index
    %c0_61 = arith.constant 0 : index
    %162 = vector.load %arg14[%c0_59, %c0_60, %c0_61] : memref<2x1x64xf32, #tpu.memory_space<vmem>>, vector<1x1x64xf32>
    %163 = vector.shape_cast %162 : vector<1x1x64xf32> to vector<1x64xf32>
    %164 = vector.broadcast %163 : vector<1x64xf32> to vector<16x64xf32>
    %165 = arith.addf %161, %164 : vector<16x64xf32>
    %166 = arith.addf %147, %165 : vector<16x64xf32>
    %c0_62 = arith.constant 0 : index
    %c0_63 = arith.constant 0 : index
    %c0_64 = arith.constant 0 : index
    %167 = vector.load %arg15[%c0_62, %c0_63, %c0_64] : memref<2x1x64xf32, #tpu.memory_space<vmem>>, vector<1x1x64xf32>
    %168 = vector.shape_cast %167 : vector<1x1x64xf32> to vector<1x64xf32>
    %c0_65 = arith.constant 0 : index
    %c0_66 = arith.constant 0 : index
    %c0_67 = arith.constant 0 : index
    %169 = vector.load %arg16[%c0_65, %c0_66, %c0_67] : memref<2x1x64xf32, #tpu.memory_space<vmem>>, vector<1x1x64xf32>
    %170 = vector.shape_cast %169 : vector<1x1x64xf32> to vector<1x64xf32>
    %cst_68 = arith.constant dense<0.000000e+00> : vector<16xf32>
    %171 = vector.multi_reduction <add>, %166, %cst_68 [1] : vector<16x64xf32> to vector<16xf32>
    %172 = vector.shape_cast %171 : vector<16xf32> to vector<16x1xf32>
    %cst_69 = arith.constant 6.400000e+01 : f32
    %173 = vector.broadcast %cst_69 : f32 to vector<16x1xf32>
    %174 = arith.divf %172, %173 : vector<16x1xf32>
    %175 = vector.broadcast %174 : vector<16x1xf32> to vector<16x64xf32>
    %176 = arith.subf %166, %175 : vector<16x64xf32>
    %177 = arith.mulf %176, %176 : vector<16x64xf32>
    %cst_70 = arith.constant dense<0.000000e+00> : vector<16xf32>
    %178 = vector.multi_reduction <add>, %177, %cst_70 [1] : vector<16x64xf32> to vector<16xf32>
    %179 = vector.shape_cast %178 : vector<16xf32> to vector<16x1xf32>
    %cst_71 = arith.constant 6.400000e+01 : f32
    %180 = vector.broadcast %cst_71 : f32 to vector<16x1xf32>
    %181 = arith.divf %179, %180 : vector<16x1xf32>
    %cst_72 = arith.constant 9.99999974E-6 : f32
    %182 = vector.broadcast %cst_72 : f32 to vector<16x1xf32>
    %183 = arith.addf %181, %182 : vector<16x1xf32>
    %184 = math.rsqrt %183 : vector<16x1xf32>
    %185 = vector.broadcast %184 : vector<16x1xf32> to vector<16x64xf32>
    %186 = arith.mulf %176, %185 : vector<16x64xf32>
    %187 = vector.broadcast %168 : vector<1x64xf32> to vector<16x64xf32>
    %188 = arith.mulf %186, %187 : vector<16x64xf32>
    %189 = vector.broadcast %170 : vector<1x64xf32> to vector<16x64xf32>
    %190 = arith.addf %188, %189 : vector<16x64xf32>
    %191 = arith.truncf %190 : vector<16x64xf32> to vector<16x64xbf16>
    %c1 = arith.constant 1 : index
    %c0_73 = arith.constant 0 : index
    %c0_74 = arith.constant 0 : index
    %192 = vector.load %arg5[%c1, %c0_73, %c0_74] : memref<2x64x192xbf16, #tpu.memory_space<vmem>>, vector<1x64x192xbf16>
    %193 = vector.shape_cast %192 : vector<1x64x192xbf16> to vector<64x192xbf16>
    %cst_75 = arith.constant dense<0.000000e+00> : vector<16x192xf32>
    %194 = tpu.matmul %191, %193, %cst_75 {dimension_numbers = #tpu.dot_dimension_numbers<[1], [0], [0], [1], [0, 0, 1, 1], [], []>} : vector<16x64xbf16>, vector<64x192xbf16>, vector<16x192xf32> -> vector<16x192xf32>
    %c1_76 = arith.constant 1 : index
    %c0_77 = arith.constant 0 : index
    %c0_78 = arith.constant 0 : index
    %195 = vector.load %arg6[%c1_76, %c0_77, %c0_78] : memref<2x1x192xf32, #tpu.memory_space<vmem>>, vector<1x1x192xf32>
    %196 = vector.shape_cast %195 : vector<1x1x192xf32> to vector<1x192xf32>
    %197 = vector.broadcast %196 : vector<1x192xf32> to vector<16x192xf32>
    %198 = arith.addf %194, %197 : vector<16x192xf32>
    %199 = vector.extract_strided_slice %198 {offsets = [0, 0], sizes = [16, 64], strides = [1, 1]} : vector<16x192xf32> to vector<16x64xf32>
    %cst_79 = arith.constant 2.500000e-01 : f32
    %200 = vector.broadcast %cst_79 : f32 to vector<16x64xf32>
    %201 = arith.mulf %199, %200 : vector<16x64xf32>
    %202 = vector.extract_strided_slice %201 {offsets = [0, 0], sizes = [16, 16], strides = [1, 1]} : vector<16x64xf32> to vector<16x16xf32>
    %203 = vector.extract_strided_slice %201 {offsets = [0, 16], sizes = [16, 16], strides = [1, 1]} : vector<16x64xf32> to vector<16x16xf32>
    %204 = vector.extract_strided_slice %201 {offsets = [0, 32], sizes = [16, 16], strides = [1, 1]} : vector<16x64xf32> to vector<16x16xf32>
    %205 = vector.extract_strided_slice %201 {offsets = [0, 48], sizes = [16, 16], strides = [1, 1]} : vector<16x64xf32> to vector<16x16xf32>
    %206 = vector.shape_cast %202 : vector<16x16xf32> to vector<1x16x16xf32>
    %207 = vector.shape_cast %203 : vector<16x16xf32> to vector<1x16x16xf32>
    %208 = vector.shape_cast %204 : vector<16x16xf32> to vector<1x16x16xf32>
    %209 = vector.shape_cast %205 : vector<16x16xf32> to vector<1x16x16xf32>
    %210 = tpu.concatenate %206, %207, %208, %209 in 0 : vector<1x16x16xf32>, vector<1x16x16xf32>, vector<1x16x16xf32>, vector<1x16x16xf32> -> vector<4x16x16xf32>
    %211 = arith.truncf %210 : vector<4x16x16xf32> to vector<4x16x16xbf16>
    %212 = vector.extract_strided_slice %198 {offsets = [0, 64], sizes = [16, 64], strides = [1, 1]} : vector<16x192xf32> to vector<16x64xf32>
    %213 = vector.extract_strided_slice %212 {offsets = [0, 0], sizes = [16, 16], strides = [1, 1]} : vector<16x64xf32> to vector<16x16xf32>
    %214 = vector.extract_strided_slice %212 {offsets = [0, 16], sizes = [16, 16], strides = [1, 1]} : vector<16x64xf32> to vector<16x16xf32>
    %215 = vector.extract_strided_slice %212 {offsets = [0, 32], sizes = [16, 16], strides = [1, 1]} : vector<16x64xf32> to vector<16x16xf32>
    %216 = vector.extract_strided_slice %212 {offsets = [0, 48], sizes = [16, 16], strides = [1, 1]} : vector<16x64xf32> to vector<16x16xf32>
    %217 = vector.shape_cast %213 : vector<16x16xf32> to vector<1x16x16xf32>
    %218 = vector.shape_cast %214 : vector<16x16xf32> to vector<1x16x16xf32>
    %219 = vector.shape_cast %215 : vector<16x16xf32> to vector<1x16x16xf32>
    %220 = vector.shape_cast %216 : vector<16x16xf32> to vector<1x16x16xf32>
    %221 = tpu.concatenate %217, %218, %219, %220 in 0 : vector<1x16x16xf32>, vector<1x16x16xf32>, vector<1x16x16xf32>, vector<1x16x16xf32> -> vector<4x16x16xf32>
    %222 = arith.truncf %221 : vector<4x16x16xf32> to vector<4x16x16xbf16>
    %223 = vector.extract_strided_slice %198 {offsets = [0, 128], sizes = [16, 64], strides = [1, 1]} : vector<16x192xf32> to vector<16x64xf32>
    %224 = vector.extract_strided_slice %223 {offsets = [0, 0], sizes = [16, 16], strides = [1, 1]} : vector<16x64xf32> to vector<16x16xf32>
    %225 = vector.extract_strided_slice %223 {offsets = [0, 16], sizes = [16, 16], strides = [1, 1]} : vector<16x64xf32> to vector<16x16xf32>
    %226 = vector.extract_strided_slice %223 {offsets = [0, 32], sizes = [16, 16], strides = [1, 1]} : vector<16x64xf32> to vector<16x16xf32>
    %227 = vector.extract_strided_slice %223 {offsets = [0, 48], sizes = [16, 16], strides = [1, 1]} : vector<16x64xf32> to vector<16x16xf32>
    %228 = vector.shape_cast %224 : vector<16x16xf32> to vector<1x16x16xf32>
    %229 = vector.shape_cast %225 : vector<16x16xf32> to vector<1x16x16xf32>
    %230 = vector.shape_cast %226 : vector<16x16xf32> to vector<1x16x16xf32>
    %231 = vector.shape_cast %227 : vector<16x16xf32> to vector<1x16x16xf32>
    %232 = tpu.concatenate %228, %229, %230, %231 in 0 : vector<1x16x16xf32>, vector<1x16x16xf32>, vector<1x16x16xf32>, vector<1x16x16xf32> -> vector<4x16x16xf32>
    %233 = arith.truncf %232 : vector<4x16x16xf32> to vector<4x16x16xbf16>
    "tpu.trace_start"() <{level = 10 : i32, message = "hqd,hkd->hqk"}> : () -> ()
    %cst_80 = arith.constant dense<0.000000e+00> : vector<4x16x16xf32>
    %234 = tpu.matmul %211, %222, %cst_80 {dimension_numbers = #tpu.dot_dimension_numbers<[2], [2], [1], [1], [0, 0, 0, 1, 1, 1], [0], [0]>} : vector<4x16x16xbf16>, vector<4x16x16xbf16>, vector<4x16x16xf32> -> vector<4x16x16xf32>
    "tpu.trace_stop"() : () -> ()
    %235 = vector.shape_cast %44 : vector<16x16xi1> to vector<1x16x16xi1>
    %cst_81 = arith.constant -1.000000e+30 : f32
    %236 = vector.shape_cast %235 : vector<1x16x16xi1> to vector<1x16x16xi1>
    %237 = vector.broadcast %236 : vector<1x16x16xi1> to vector<4x16x16xi1>
    %238 = vector.broadcast %cst_81 : f32 to vector<4x16x16xf32>
    %239 = arith.select %237, %234, %238 : vector<4x16x16xi1>, vector<4x16x16xf32>
    %cst_82 = arith.constant dense<0xFF800000> : vector<4x16xf32>
    %240 = vector.multi_reduction <maximumf>, %239, %cst_82 [2] : vector<4x16x16xf32> to vector<4x16xf32>
    %241 = vector.shape_cast %240 : vector<4x16xf32> to vector<4x16x1xf32>
    %242 = vector.broadcast %241 : vector<4x16x1xf32> to vector<4x16x16xf32>
    %243 = arith.subf %239, %242 : vector<4x16x16xf32>
    %244 = math.exp %243 : vector<4x16x16xf32>
    %cst_83 = arith.constant dense<0.000000e+00> : vector<4x16xf32>
    %245 = vector.multi_reduction <add>, %244, %cst_83 [2] : vector<4x16x16xf32> to vector<4x16xf32>
    %246 = vector.shape_cast %245 : vector<4x16xf32> to vector<4x16x1xf32>
    %247 = tpu.reciprocal %246 {approx = true} : vector<4x16x1xf32> -> vector<4x16x1xf32>
    %248 = vector.broadcast %247 : vector<4x16x1xf32> to vector<4x16x16xf32>
    %249 = arith.mulf %244, %248 : vector<4x16x16xf32>
    %250 = arith.truncf %249 : vector<4x16x16xf32> to vector<4x16x16xbf16>
    "tpu.trace_start"() <{level = 10 : i32, message = "hqk,hkd->hqd"}> : () -> ()
    %cst_84 = arith.constant dense<0.000000e+00> : vector<4x16x16xf32>
    %251 = tpu.matmul %250, %233, %cst_84 {dimension_numbers = #tpu.dot_dimension_numbers<[2], [1], [1], [2], [0, 0, 0, 1, 1, 2], [0], [0]>} : vector<4x16x16xbf16>, vector<4x16x16xbf16>, vector<4x16x16xf32> -> vector<4x16x16xf32>
    "tpu.trace_stop"() : () -> ()
    %252 = vector.extract_strided_slice %251 {offsets = [0, 0, 0], sizes = [1, 16, 16], strides = [1, 1, 1]} : vector<4x16x16xf32> to vector<1x16x16xf32>
    %253 = vector.shape_cast %252 : vector<1x16x16xf32> to vector<16x16xf32>
    %254 = vector.extract_strided_slice %251 {offsets = [1, 0, 0], sizes = [1, 16, 16], strides = [1, 1, 1]} : vector<4x16x16xf32> to vector<1x16x16xf32>
    %255 = vector.shape_cast %254 : vector<1x16x16xf32> to vector<16x16xf32>
    %256 = vector.extract_strided_slice %251 {offsets = [2, 0, 0], sizes = [1, 16, 16], strides = [1, 1, 1]} : vector<4x16x16xf32> to vector<1x16x16xf32>
    %257 = vector.shape_cast %256 : vector<1x16x16xf32> to vector<16x16xf32>
    %258 = vector.extract_strided_slice %251 {offsets = [3, 0, 0], sizes = [1, 16, 16], strides = [1, 1, 1]} : vector<4x16x16xf32> to vector<1x16x16xf32>
    %259 = vector.shape_cast %258 : vector<1x16x16xf32> to vector<16x16xf32>
    %260 = tpu.concatenate %253, %255, %257, %259 in 1 : vector<16x16xf32>, vector<16x16xf32>, vector<16x16xf32>, vector<16x16xf32> -> vector<16x64xf32>
    %261 = arith.truncf %260 : vector<16x64xf32> to vector<16x64xbf16>
    %c1_85 = arith.constant 1 : index
    %c0_86 = arith.constant 0 : index
    %c0_87 = arith.constant 0 : index
    %262 = vector.load %arg7[%c1_85, %c0_86, %c0_87] : memref<2x64x64xbf16, #tpu.memory_space<vmem>>, vector<1x64x64xbf16>
    %263 = vector.shape_cast %262 : vector<1x64x64xbf16> to vector<64x64xbf16>
    %cst_88 = arith.constant dense<0.000000e+00> : vector<16x64xf32>
    %264 = tpu.matmul %261, %263, %cst_88 {dimension_numbers = #tpu.dot_dimension_numbers<[1], [0], [0], [1], [0, 0, 1, 1], [], []>} : vector<16x64xbf16>, vector<64x64xbf16>, vector<16x64xf32> -> vector<16x64xf32>
    %c1_89 = arith.constant 1 : index
    %c0_90 = arith.constant 0 : index
    %c0_91 = arith.constant 0 : index
    %265 = vector.load %arg8[%c1_89, %c0_90, %c0_91] : memref<2x1x64xf32, #tpu.memory_space<vmem>>, vector<1x1x64xf32>
    %266 = vector.shape_cast %265 : vector<1x1x64xf32> to vector<1x64xf32>
    %267 = vector.broadcast %266 : vector<1x64xf32> to vector<16x64xf32>
    %268 = arith.addf %264, %267 : vector<16x64xf32>
    %269 = arith.addf %190, %268 : vector<16x64xf32>
    %c1_92 = arith.constant 1 : index
    %c0_93 = arith.constant 0 : index
    %c0_94 = arith.constant 0 : index
    %270 = vector.load %arg9[%c1_92, %c0_93, %c0_94] : memref<2x1x64xf32, #tpu.memory_space<vmem>>, vector<1x1x64xf32>
    %271 = vector.shape_cast %270 : vector<1x1x64xf32> to vector<1x64xf32>
    %c1_95 = arith.constant 1 : index
    %c0_96 = arith.constant 0 : index
    %c0_97 = arith.constant 0 : index
    %272 = vector.load %arg10[%c1_95, %c0_96, %c0_97] : memref<2x1x64xf32, #tpu.memory_space<vmem>>, vector<1x1x64xf32>
    %273 = vector.shape_cast %272 : vector<1x1x64xf32> to vector<1x64xf32>
    %cst_98 = arith.constant dense<0.000000e+00> : vector<16xf32>
    %274 = vector.multi_reduction <add>, %269, %cst_98 [1] : vector<16x64xf32> to vector<16xf32>
    %275 = vector.shape_cast %274 : vector<16xf32> to vector<16x1xf32>
    %cst_99 = arith.constant 6.400000e+01 : f32
    %276 = vector.broadcast %cst_99 : f32 to vector<16x1xf32>
    %277 = arith.divf %275, %276 : vector<16x1xf32>
    %278 = vector.broadcast %277 : vector<16x1xf32> to vector<16x64xf32>
    %279 = arith.subf %269, %278 : vector<16x64xf32>
    %280 = arith.mulf %279, %279 : vector<16x64xf32>
    %cst_100 = arith.constant dense<0.000000e+00> : vector<16xf32>
    %281 = vector.multi_reduction <add>, %280, %cst_100 [1] : vector<16x64xf32> to vector<16xf32>
    %282 = vector.shape_cast %281 : vector<16xf32> to vector<16x1xf32>
    %cst_101 = arith.constant 6.400000e+01 : f32
    %283 = vector.broadcast %cst_101 : f32 to vector<16x1xf32>
    %284 = arith.divf %282, %283 : vector<16x1xf32>
    %cst_102 = arith.constant 9.99999974E-6 : f32
    %285 = vector.broadcast %cst_102 : f32 to vector<16x1xf32>
    %286 = arith.addf %284, %285 : vector<16x1xf32>
    %287 = math.rsqrt %286 : vector<16x1xf32>
    %288 = vector.broadcast %287 : vector<16x1xf32> to vector<16x64xf32>
    %289 = arith.mulf %279, %288 : vector<16x64xf32>
    %290 = vector.broadcast %271 : vector<1x64xf32> to vector<16x64xf32>
    %291 = arith.mulf %289, %290 : vector<16x64xf32>
    %292 = vector.broadcast %273 : vector<1x64xf32> to vector<16x64xf32>
    %293 = arith.addf %291, %292 : vector<16x64xf32>
    %294 = arith.truncf %293 : vector<16x64xf32> to vector<16x64xbf16>
    %c1_103 = arith.constant 1 : index
    %c0_104 = arith.constant 0 : index
    %c0_105 = arith.constant 0 : index
    %295 = vector.load %arg11[%c1_103, %c0_104, %c0_105] : memref<2x64x128xbf16, #tpu.memory_space<vmem>>, vector<1x64x128xbf16>
    %296 = vector.shape_cast %295 : vector<1x64x128xbf16> to vector<64x128xbf16>
    %cst_106 = arith.constant dense<0.000000e+00> : vector<16x128xf32>
    %297 = tpu.matmul %294, %296, %cst_106 {dimension_numbers = #tpu.dot_dimension_numbers<[1], [0], [0], [1], [0, 0, 1, 1], [], []>} : vector<16x64xbf16>, vector<64x128xbf16>, vector<16x128xf32> -> vector<16x128xf32>
    %c1_107 = arith.constant 1 : index
    %c0_108 = arith.constant 0 : index
    %c0_109 = arith.constant 0 : index
    %298 = vector.load %arg12[%c1_107, %c0_108, %c0_109] : memref<2x1x128xf32, #tpu.memory_space<vmem>>, vector<1x1x128xf32>
    %299 = vector.shape_cast %298 : vector<1x1x128xf32> to vector<1x128xf32>
    %300 = vector.broadcast %299 : vector<1x128xf32> to vector<16x128xf32>
    %301 = arith.addf %297, %300 : vector<16x128xf32>
    %cst_110 = arith.constant 0.000000e+00 : f32
    %302 = vector.broadcast %cst_110 : f32 to vector<16x128xf32>
    %303 = arith.maximumf %301, %302 : vector<16x128xf32>
    %304 = arith.truncf %303 : vector<16x128xf32> to vector<16x128xbf16>
    %c1_111 = arith.constant 1 : index
    %c0_112 = arith.constant 0 : index
    %c0_113 = arith.constant 0 : index
    %305 = vector.load %arg13[%c1_111, %c0_112, %c0_113] : memref<2x128x64xbf16, #tpu.memory_space<vmem>>, vector<1x128x64xbf16>
    %306 = vector.shape_cast %305 : vector<1x128x64xbf16> to vector<128x64xbf16>
    %cst_114 = arith.constant dense<0.000000e+00> : vector<16x64xf32>
    %307 = tpu.matmul %304, %306, %cst_114 {dimension_numbers = #tpu.dot_dimension_numbers<[1], [0], [0], [1], [0, 0, 1, 1], [], []>} : vector<16x128xbf16>, vector<128x64xbf16>, vector<16x64xf32> -> vector<16x64xf32>
    %c1_115 = arith.constant 1 : index
    %c0_116 = arith.constant 0 : index
    %c0_117 = arith.constant 0 : index
    %308 = vector.load %arg14[%c1_115, %c0_116, %c0_117] : memref<2x1x64xf32, #tpu.memory_space<vmem>>, vector<1x1x64xf32>
    %309 = vector.shape_cast %308 : vector<1x1x64xf32> to vector<1x64xf32>
    %310 = vector.broadcast %309 : vector<1x64xf32> to vector<16x64xf32>
    %311 = arith.addf %307, %310 : vector<16x64xf32>
    %312 = arith.addf %293, %311 : vector<16x64xf32>
    %c1_118 = arith.constant 1 : index
    %c0_119 = arith.constant 0 : index
    %c0_120 = arith.constant 0 : index
    %313 = vector.load %arg15[%c1_118, %c0_119, %c0_120] : memref<2x1x64xf32, #tpu.memory_space<vmem>>, vector<1x1x64xf32>
    %314 = vector.shape_cast %313 : vector<1x1x64xf32> to vector<1x64xf32>
    %c1_121 = arith.constant 1 : index
    %c0_122 = arith.constant 0 : index
    %c0_123 = arith.constant 0 : index
    %315 = vector.load %arg16[%c1_121, %c0_122, %c0_123] : memref<2x1x64xf32, #tpu.memory_space<vmem>>, vector<1x1x64xf32>
    %316 = vector.shape_cast %315 : vector<1x1x64xf32> to vector<1x64xf32>
    %cst_124 = arith.constant dense<0.000000e+00> : vector<16xf32>
    %317 = vector.multi_reduction <add>, %312, %cst_124 [1] : vector<16x64xf32> to vector<16xf32>
    %318 = vector.shape_cast %317 : vector<16xf32> to vector<16x1xf32>
    %cst_125 = arith.constant 6.400000e+01 : f32
    %319 = vector.broadcast %cst_125 : f32 to vector<16x1xf32>
    %320 = arith.divf %318, %319 : vector<16x1xf32>
    %321 = vector.broadcast %320 : vector<16x1xf32> to vector<16x64xf32>
    %322 = arith.subf %312, %321 : vector<16x64xf32>
    %323 = arith.mulf %322, %322 : vector<16x64xf32>
    %cst_126 = arith.constant dense<0.000000e+00> : vector<16xf32>
    %324 = vector.multi_reduction <add>, %323, %cst_126 [1] : vector<16x64xf32> to vector<16xf32>
    %325 = vector.shape_cast %324 : vector<16xf32> to vector<16x1xf32>
    %cst_127 = arith.constant 6.400000e+01 : f32
    %326 = vector.broadcast %cst_127 : f32 to vector<16x1xf32>
    %327 = arith.divf %325, %326 : vector<16x1xf32>
    %cst_128 = arith.constant 9.99999974E-6 : f32
    %328 = vector.broadcast %cst_128 : f32 to vector<16x1xf32>
    %329 = arith.addf %327, %328 : vector<16x1xf32>
    %330 = math.rsqrt %329 : vector<16x1xf32>
    %331 = vector.broadcast %330 : vector<16x1xf32> to vector<16x64xf32>
    %332 = arith.mulf %322, %331 : vector<16x64xf32>
    %333 = vector.broadcast %314 : vector<1x64xf32> to vector<16x64xf32>
    %334 = arith.mulf %332, %333 : vector<16x64xf32>
    %335 = vector.broadcast %316 : vector<1x64xf32> to vector<16x64xf32>
    %336 = arith.addf %334, %335 : vector<16x64xf32>
    %337 = vector.extract_strided_slice %336 {offsets = [7, 0], sizes = [1, 64], strides = [1, 1]} : vector<16x64xf32> to vector<1x64xf32>
    %338 = vector.extract_strided_slice %336 {offsets = [15, 0], sizes = [1, 64], strides = [1, 1]} : vector<16x64xf32> to vector<1x64xf32>
    %339 = tpu.concatenate %337, %338 in 0 : vector<1x64xf32>, vector<1x64xf32> -> vector<2x64xf32>
    %340 = arith.truncf %339 : vector<2x64xf32> to vector<2x64xbf16>
    %c0_129 = arith.constant 0 : index
    %c0_130 = arith.constant 0 : index
    %341 = vector.load %arg17[%c0_129, %c0_130] : memref<64x128xbf16, #tpu.memory_space<vmem>>, vector<64x128xbf16>
    %cst_131 = arith.constant dense<0.000000e+00> : vector<2x128xf32>
    %342 = tpu.matmul %340, %341, %cst_131 {dimension_numbers = #tpu.dot_dimension_numbers<[1], [0], [0], [1], [0, 0, 1, 1], [], []>} : vector<2x64xbf16>, vector<64x128xbf16>, vector<2x128xf32> -> vector<2x128xf32>
    %c0_132 = arith.constant 0 : index
    %c0_133 = arith.constant 0 : index
    %343 = vector.load %arg18[%c0_132, %c0_133] : memref<1x128xf32, #tpu.memory_space<vmem>>, vector<1x128xf32>
    %344 = vector.broadcast %343 : vector<1x128xf32> to vector<2x128xf32>
    %345 = arith.addf %342, %344 : vector<2x128xf32>
    %c0_134 = arith.constant 0 : index
    %c0_135 = arith.constant 0 : index
    %346 = vector.load %arg19[%c0_134, %c0_135] : memref<2x128xf32, #tpu.memory_space<vmem>>, vector<2x128xf32>
    tpu.vector_store %arg19[%c0_134, %c0_135], %345 {strides = array<i32>} : memref<2x128xf32, #tpu.memory_space<vmem>>, vector<2x128xf32>,
    return
  }
  func.func @transform_0(%arg0: i32) -> (i32, i32) {
    %c0_i32 = arith.constant 0 : i32
    %c0_i32_0 = arith.constant 0 : i32
    %c0_i32_1 = arith.constant 0 : i32
    return %c0_i32, %c0_i32_0 : i32, i32
  }
  func.func @transform_1(%arg0: i32) -> (i32, i32) {
    %c0_i32 = arith.constant 0 : i32
    %c0_i32_0 = arith.constant 0 : i32
    %c0_i32_1 = arith.constant 0 : i32
    return %c0_i32, %c0_i32_0 : i32, i32
  }
  func.func @transform_2(%arg0: i32) -> (i32, i32) {
    %c0_i32 = arith.constant 0 : i32
    %c0_i32_0 = arith.constant 0 : i32
    %c0_i32_1 = arith.constant 0 : i32
    return %c0_i32, %c0_i32_0 : i32, i32
  }
  func.func @transform_3(%arg0: i32) -> (i32, i32) {
    %c0_i32 = arith.constant 0 : i32
    %c0_i32_0 = arith.constant 0 : i32
    %c0_i32_1 = arith.constant 0 : i32
    return %c0_i32, %c0_i32_0 : i32, i32
  }
  func.func @transform_4(%arg0: i32) -> (i32, i32, i32) {
    %c0_i32 = arith.constant 0 : i32
    %c0_i32_0 = arith.constant 0 : i32
    %c0_i32_1 = arith.constant 0 : i32
    %c0_i32_2 = arith.constant 0 : i32
    return %c0_i32, %c0_i32_0, %c0_i32_1 : i32, i32, i32
  }
  func.func @transform_5(%arg0: i32) -> (i32, i32, i32) {
    %c0_i32 = arith.constant 0 : i32
    %c0_i32_0 = arith.constant 0 : i32
    %c0_i32_1 = arith.constant 0 : i32
    %c0_i32_2 = arith.constant 0 : i32
    return %c0_i32, %c0_i32_0, %c0_i32_1 : i32, i32, i32
  }
  func.func @transform_6(%arg0: i32) -> (i32, i32, i32) {
    %c0_i32 = arith.constant 0 : i32
    %c0_i32_0 = arith.constant 0 : i32
    %c0_i32_1 = arith.constant 0 : i32
    %c0_i32_2 = arith.constant 0 : i32
    return %c0_i32, %c0_i32_0, %c0_i32_1 : i32, i32, i32
  }
  func.func @transform_7(%arg0: i32) -> (i32, i32, i32) {
    %c0_i32 = arith.constant 0 : i32
    %c0_i32_0 = arith.constant 0 : i32
    %c0_i32_1 = arith.constant 0 : i32
    %c0_i32_2 = arith.constant 0 : i32
    return %c0_i32, %c0_i32_0, %c0_i32_1 : i32, i32, i32
  }
  func.func @transform_8(%arg0: i32) -> (i32, i32, i32) {
    %c0_i32 = arith.constant 0 : i32
    %c0_i32_0 = arith.constant 0 : i32
    %c0_i32_1 = arith.constant 0 : i32
    %c0_i32_2 = arith.constant 0 : i32
    return %c0_i32, %c0_i32_0, %c0_i32_1 : i32, i32, i32
  }
  func.func @transform_9(%arg0: i32) -> (i32, i32, i32) {
    %c0_i32 = arith.constant 0 : i32
    %c0_i32_0 = arith.constant 0 : i32
    %c0_i32_1 = arith.constant 0 : i32
    %c0_i32_2 = arith.constant 0 : i32
    return %c0_i32, %c0_i32_0, %c0_i32_1 : i32, i32, i32
  }
  func.func @transform_10(%arg0: i32) -> (i32, i32, i32) {
    %c0_i32 = arith.constant 0 : i32
    %c0_i32_0 = arith.constant 0 : i32
    %c0_i32_1 = arith.constant 0 : i32
    %c0_i32_2 = arith.constant 0 : i32
    return %c0_i32, %c0_i32_0, %c0_i32_1 : i32, i32, i32
  }
  func.func @transform_11(%arg0: i32) -> (i32, i32, i32) {
    %c0_i32 = arith.constant 0 : i32
    %c0_i32_0 = arith.constant 0 : i32
    %c0_i32_1 = arith.constant 0 : i32
    %c0_i32_2 = arith.constant 0 : i32
    return %c0_i32, %c0_i32_0, %c0_i32_1 : i32, i32, i32
  }
  func.func @transform_12(%arg0: i32) -> (i32, i32, i32) {
    %c0_i32 = arith.constant 0 : i32
    %c0_i32_0 = arith.constant 0 : i32
    %c0_i32_1 = arith.constant 0 : i32
    %c0_i32_2 = arith.constant 0 : i32
    return %c0_i32, %c0_i32_0, %c0_i32_1 : i32, i32, i32
  }
  func.func @transform_13(%arg0: i32) -> (i32, i32, i32) {
    %c0_i32 = arith.constant 0 : i32
    %c0_i32_0 = arith.constant 0 : i32
    %c0_i32_1 = arith.constant 0 : i32
    %c0_i32_2 = arith.constant 0 : i32
    return %c0_i32, %c0_i32_0, %c0_i32_1 : i32, i32, i32
  }
  func.func @transform_14(%arg0: i32) -> (i32, i32, i32) {
    %c0_i32 = arith.constant 0 : i32
    %c0_i32_0 = arith.constant 0 : i32
    %c0_i32_1 = arith.constant 0 : i32
    %c0_i32_2 = arith.constant 0 : i32
    return %c0_i32, %c0_i32_0, %c0_i32_1 : i32, i32, i32
  }
  func.func @transform_15(%arg0: i32) -> (i32, i32, i32) {
    %c0_i32 = arith.constant 0 : i32
    %c0_i32_0 = arith.constant 0 : i32
    %c0_i32_1 = arith.constant 0 : i32
    %c0_i32_2 = arith.constant 0 : i32
    return %c0_i32, %c0_i32_0, %c0_i32_1 : i32, i32, i32
  }
  func.func @transform_16(%arg0: i32) -> (i32, i32) {
    %c0_i32 = arith.constant 0 : i32
    %c0_i32_0 = arith.constant 0 : i32
    %c0_i32_1 = arith.constant 0 : i32
    return %c0_i32, %c0_i32_0 : i32, i32
  }
  func.func @transform_17(%arg0: i32) -> (i32, i32) {
    %c0_i32 = arith.constant 0 : i32
    %c0_i32_0 = arith.constant 0 : i32
    %c0_i32_1 = arith.constant 0 : i32
    return %c0_i32, %c0_i32_0 : i32, i32
  }
  func.func @transform_18(%arg0: i32) -> (i32, i32) {
    %c0_i32 = arith.constant 0 : i32
    %c0_i32_0 = arith.constant 0 : i32
    %c0_i32_1 = arith.constant 0 : i32
    return %c0_i32, %c0_i32_0 : i32, i32
  }
}

</mosaic_0001>

<llo_original>
// kernel: forward.1
$region0: #{forward.1}
  #allocation0 [shape = 'u32[]', space=smem, size = 0x4, offset = 0x4, fixed_abs, tag = 'smem constant byte address 0x4 - core index']
  #allocation1 [shape = 'u32[144,128]{1,0:T(1,128)}', space=vmem, size = 0x12000, scoped, tag = 'internal scratch']
  %s0 = inlined_call_operand.vmem [shape: f32[16,16], index: 0, kind: input, shape index: {}]
  %s1 = inlined_call_operand.vmem [shape: f32[8,64], index: 1, kind: input, shape index: {}]
  %s2 = inlined_call_operand.hbm [shape: bf16[16,64], index: 2, kind: input, shape index: {}]
  %s3 = inlined_call_operand.vmem [shape: f32[1,64], index: 3, kind: input, shape index: {}]
  %s4 = inlined_call_operand.vmem [shape: bf16[2,64,192], index: 4, kind: input, shape index: {}]
  %s5 = inlined_call_operand.vmem [shape: f32[2,1,192], index: 5, kind: input, shape index: {}]
  %s6 = inlined_call_operand.vmem [shape: bf16[2,64,64], index: 6, kind: input, shape index: {}]
  %s7 = inlined_call_operand.hbm [shape: f32[2,1,64], index: 7, kind: input, shape index: {}]
  %s8 = inlined_call_operand.hbm [shape: f32[2,1,64], index: 8, kind: input, shape index: {}]
  %s9 = inlined_call_operand.hbm [shape: f32[2,1,64], index: 9, kind: input, shape index: {}]
  %s10 = inlined_call_operand.hbm [shape: bf16[2,64,128], index: 10, kind: input, shape index: {}]
  %s11 = inlined_call_operand.hbm [shape: f32[2,1,128], index: 11, kind: input, shape index: {}]
  %s12 = inlined_call_operand.vmem [shape: bf16[2,128,64], index: 12, kind: input, shape index: {}]
  %s13 = inlined_call_operand.hbm [shape: f32[2,1,64], index: 13, kind: input, shape index: {}]
  %s14 = inlined_call_operand.hbm [shape: f32[2,1,64], index: 14, kind: input, shape index: {}]
  %s15 = inlined_call_operand.hbm [shape: f32[2,1,64], index: 15, kind: input, shape index: {}]
  %s16 = inlined_call_operand.hbm [shape: bf16[64,128], index: 16, kind: input, shape index: {}]
  %s17 = inlined_call_operand.hbm [shape: f32[1,128], index: 17, kind: input, shape index: {}]
  %s18 = inlined_call_operand.hbm [shape: f32[2,128], index: 18, kind: output, shape index: {}]
  %s19 = sld [smem:[#allocation0]]
  $region126: #{forward.1} parent=0
    _
  %s21 = ssub.s32 1, %s19
  %s22 = scalar_select 0, %s21, %s19
  $region1: #{forward.1} parent=0
    #allocation2 [shape = 'u8[4096]{0}', space=vmem, size = 0x1000, scoped, tag = 'input window, operand 2, single buffered']
    #allocation3 [shape = 's32[1]{0}', space=sflag, size = 0x4, scoped, tag = 'scoped memory for forward.1']
    #allocation4 [shape = 's32[1]{0}', space=sflag, size = 0x4, scoped, tag = 'scoped memory for forward.1']
    #allocation5 [shape = 'u8[1024]{0}', space=vmem, size = 0x400, scoped, tag = 'input window, operand 7, single buffered']
    #allocation6 [shape = 's32[1]{0}', space=sflag, size = 0x4, scoped, tag = 'scoped memory for forward.1']
    #allocation7 [shape = 'u8[1024]{0}', space=vmem, size = 0x400, scoped, tag = 'input window, operand 8, single buffered']
    #allocation8 [shape = 'u8[1024]{0}', space=vmem, size = 0x400, scoped, tag = 'input window, operand 9, single buffered']
    #allocation9 [shape = 's32[1]{0}', space=sflag, size = 0x4, scoped, tag = 'scoped memory for forward.1']
    #allocation10 [shape = 'u8[32768]{0}', space=vmem, size = 0x8000, scoped, tag = 'input window, operand 10, single buffered']
    #allocation11 [shape = 'u8[1024]{0}', space=vmem, size = 0x400, scoped, tag = 'input window, operand 11, single buffered']
    #allocation12 [shape = 's32[1]{0}', space=sflag, size = 0x4, scoped, tag = 'scoped memory for forward.1']
    #allocation13 [shape = 'u8[1024]{0}', space=vmem, size = 0x400, scoped, tag = 'input window, operand 13, single buffered']
    #allocation14 [shape = 'u8[1024]{0}', space=vmem, size = 0x400, scoped, tag = 'input window, operand 14, single buffered']
    #allocation15 [shape = 's32[1]{0}', space=sflag, size = 0x4, scoped, tag = 'scoped memory for forward.1']
    #allocation16 [shape = 'u8[1024]{0}', space=vmem, size = 0x400, scoped, tag = 'input window, operand 15, single buffered']
    #allocation17 [shape = 'u8[16384]{0}', space=vmem, size = 0x4000, scoped, tag = 'input window, operand 16, single buffered']
    #allocation18 [shape = 's32[1]{0}', space=sflag, size = 0x4, scoped, tag = 'scoped memory for forward.1']
    #allocation19 [shape = 'u8[512]{0}', space=vmem, size = 0x400, scoped, tag = 'input window, operand 17, single buffered']
    #allocation20 [shape = 'u8[1024]{0}', space=vmem, size = 0x400, scoped, tag = 'output window, operand 0, single buffered']
    %23 = vsyncpa [#allocation3], 0
    %24 = vsyncpa [#allocation6], 0
    %25 = vsyncpa [#allocation9], 0
    %26 = vsyncpa [#allocation12], 0
    %27 = vsyncpa [#allocation15], 0
    %28 = vsyncpa [#allocation18], 0
    %29 = vsyncpa [#allocation4], 0
    // Predicated region
    $region2: #{forward.1} parent=1 // pred_check
      _
    $region3: #{forward.1} parent=1 // pred_check_branch
      %31 = sbr.rel (0) target = $region5
    $region4: #{forward.1} parent=1 // pred_region
      _
    $region5: #{forward.1} parent=1 // pred_fallthru
      _
    // Predicated region
    $region6: #{forward.1} parent=1 // pred_check
      _
    $region7: #{forward.1} parent=1 // pred_check_branch
      %33 = sbr.rel (0) target = $region9
    $region8: #{forward.1} parent=1 // pred_region
      _
    $region9: #{forward.1} parent=1 // pred_fallthru
      _
    // Predicated region
    $region10: #{forward.1} parent=1 // pred_check
      _
    $region11: #{forward.1} parent=1 // pred_check_branch
      %35 = sbr.rel (0) target = $region13
    $region12: #{forward.1} parent=1 // pred_region
      %s37 = ssub.s32 128, 128
      %38 = vsyncadd [#allocation3], %s37
      %s39 = sshll.u32 [#allocation2], 4
      %s40 = int_to_ptr.vmem [resolvable:$true] %s39
      %45 = dma.hbm_to_vmem [thread:$0]  %s2, 128, %s40, [#allocation3], 64, 64, 4
    $region13: #{forward.1} parent=1 // pred_fallthru
      _
    // Predicated region
    $region14: #{forward.1} parent=1 // pred_check
      _
    $region15: #{forward.1} parent=1 // pred_check_branch
      %47 = sbr.rel (0) target = $region17
    $region16: #{forward.1} parent=1 // pred_region
      _
    $region17: #{forward.1} parent=1 // pred_fallthru
      _
    // Predicated region
    $region18: #{forward.1} parent=1 // pred_check
      _
    $region19: #{forward.1} parent=1 // pred_check_branch
      %49 = sbr.rel (0) target = $region21
    $region20: #{forward.1} parent=1 // pred_region
      _
    $region21: #{forward.1} parent=1 // pred_fallthru
      _
    // Predicated region
    $region22: #{forward.1} parent=1 // pred_check
      _
    $region23: #{forward.1} parent=1 // pred_check_branch
      %51 = sbr.rel (0) target = $region25
    $region24: #{forward.1} parent=1 // pred_region
      _
    $region25: #{forward.1} parent=1 // pred_fallthru
      _
    // Predicated region
    $region26: #{forward.1} parent=1 // pred_check
      _
    $region27: #{forward.1} parent=1 // pred_check_branch
      %53 = sbr.rel (0) target = $region29
    $region28: #{forward.1} parent=1 // pred_region
      _
    $region29: #{forward.1} parent=1 // pred_fallthru
      _
    // Predicated region
    $region30: #{forward.1} parent=1 // pred_check
      _
    $region31: #{forward.1} parent=1 // pred_check_branch
      %55 = sbr.rel (0) target = $region33
    $region32: #{forward.1} parent=1 // pred_region
      %s57 = ssub.s32 32, 32
      %58 = vsyncadd [#allocation6], %s57
      %s59 = sshll.u32 [#allocation5], 4
      %s60 = int_to_ptr.vmem [resolvable:$true] %s59
      %65 = dma.hbm_to_vmem [thread:$0]  %s7, 32, %s60, [#allocation6], 16, 16, 1
    $region33: #{forward.1} parent=1 // pred_fallthru
      _
    // Predicated region
    $region34: #{forward.1} parent=1 // pred_check
      _
    $region35: #{forward.1} parent=1 // pred_check_branch
      %67 = sbr.rel (0) target = $region37
    $region36: #{forward.1} parent=1 // pred_region
      %s69 = ssub.s32 32, 32
      %70 = vsyncadd [#allocation6], %s69
      %s71 = sshll.u32 [#allocation7], 4
      %s72 = int_to_ptr.vmem [resolvable:$true] %s71
      %77 = dma.hbm_to_vmem [thread:$0]  %s8, 32, %s72, [#allocation6], 16, 16, 1
    $region37: #{forward.1} parent=1 // pred_fallthru
      _
    // Predicated region
    $region38: #{forward.1} parent=1 // pred_check
      _
    $region39: #{forward.1} parent=1 // pred_check_branch
      %79 = sbr.rel (0) target = $region41
    $region40: #{forward.1} parent=1 // pred_region
      %s81 = ssub.s32 32, 32
      %82 = vsyncadd [#allocation9], %s81
      %s83 = sshll.u32 [#allocation8], 4
      %s84 = int_to_ptr.vmem [resolvable:$true] %s83
      %89 = dma.hbm_to_vmem [thread:$0]  %s9, 32, %s84, [#allocation9], 16, 16, 1
    $region41: #{forward.1} parent=1 // pred_fallthru
      _
    // Predicated region
    $region42: #{forward.1} parent=1 // pred_check
      _
    $region43: #{forward.1} parent=1 // pred_check_branch
      %91 = sbr.rel (0) target = $region45
    $region44: #{forward.1} parent=1 // pred_region
      %s93 = ssub.s32 1024, 1024
      %94 = vsyncadd [#allocation9], %s93
      %s95 = sshll.u32 [#allocation10], 4
      %s96 = int_to_ptr.vmem [resolvable:$true] %s95
      %101 = dma.hbm_to_vmem [thread:$0]  %s10, 1024, %s96, [#allocation9], 64, 64, 4
    $region45: #{forward.1} parent=1 // pred_fallthru
      _
    // Predicated region
    $region46: #{forward.1} parent=1 // pred_check
      _
    $region47: #{forward.1} parent=1 // pred_check_branch
      %103 = sbr.rel (0) target = $region49
    $region48: #{forward.1} parent=1 // pred_region
      %s105 = ssub.s32 32, 32
      %106 = vsyncadd [#allocation12], %s105
      %s107 = sshll.u32 [#allocation11], 4
      %s108 = int_to_ptr.vmem [resolvable:$true] %s107
      %113 = dma.hbm_to_vmem [thread:$0]  %s11, 32, %s108, [#allocation12], 16, 16, 1
    $region49: #{forward.1} parent=1 // pred_fallthru
      _
    // Predicated region
    $region50: #{forward.1} parent=1 // pred_check
      _
    $region51: #{forward.1} parent=1 // pred_check_branch
      %115 = sbr.rel (0) target = $region53
    $region52: #{forward.1} parent=1 // pred_region
      _
    $region53: #{forward.1} parent=1 // pred_fallthru
      _
    // Predicated region
    $region54: #{forward.1} parent=1 // pred_check
      _
    $region55: #{forward.1} parent=1 // pred_check_branch
      %117 = sbr.rel (0) target = $region57
    $region56: #{forward.1} parent=1 // pred_region
      %s119 = ssub.s32 32, 32
      %120 = vsyncadd [#allocation12], %s119
      %s121 = sshll.u32 [#allocation13], 4
      %s122 = int_to_ptr.vmem [resolvable:$true] %s121
      %127 = dma.hbm_to_vmem [thread:$0]  %s13, 32, %s122, [#allocation12], 16, 16, 1
    $region57: #{forward.1} parent=1 // pred_fallthru
      _
    // Predicated region
    $region58: #{forward.1} parent=1 // pred_check
      _
    $region59: #{forward.1} parent=1 // pred_check_branch
      %129 = sbr.rel (0) target = $region61
    $region60: #{forward.1} parent=1 // pred_region
      %s131 = ssub.s32 32, 32
      %132 = vsyncadd [#allocation15], %s131
      %s133 = sshll.u32 [#allocation14], 4
      %s134 = int_to_ptr.vmem [resolvable:$true] %s133
      %139 = dma.hbm_to_vmem [thread:$0]  %s14, 32, %s134, [#allocation15], 16, 16, 1
    $region61: #{forward.1} parent=1 // pred_fallthru
      _
    // Predicated region
    $region62: #{forward.1} parent=1 // pred_check
      _
    $region63: #{forward.1} parent=1 // pred_check_branch
      %141 = sbr.rel (0) target = $region65
    $region64: #{forward.1} parent=1 // pred_region
      %s143 = ssub.s32 32, 32
      %144 = vsyncadd [#allocation15], %s143
      %s145 = sshll.u32 [#allocation16], 4
      %s146 = int_to_ptr.vmem [resolvable:$true] %s145
      %151 = dma.hbm_to_vmem [thread:$0]  %s15, 32, %s146, [#allocation15], 16, 16, 1
    $region65: #{forward.1} parent=1 // pred_fallthru
      _
    // Predicated region
    $region66: #{forward.1} parent=1 // pred_check
      _
    $region67: #{forward.1} parent=1 // pred_check_branch
      %153 = sbr.rel (0) target = $region69
    $region68: #{forward.1} parent=1 // pred_region
      %s155 = ssub.s32 512, 512
      %156 = vsyncadd [#allocation18], %s155
      %s157 = sshll.u32 [#allocation17], 4
      %s158 = int_to_ptr.vmem [resolvable:$true] %s157
      %163 = dma.hbm_to_vmem [thread:$0]  %s16, 512, %s158, [#allocation18], 64, 64, 4
    $region69: #{forward.1} parent=1 // pred_fallthru
      _
    // Predicated region
    $region70: #{forward.1} parent=1 // pred_check
      _
    $region71: #{forward.1} parent=1 // pred_check_branch
      %165 = sbr.rel (0) target = $region73
    $region72: #{forward.1} parent=1 // pred_region
      %s167 = ssub.s32 16, 16
      %168 = vsyncadd [#allocation18], %s167
      %s170 = sshll.u32 [#allocation19], 4
      %s171 = int_to_ptr.vmem [resolvable:$true] %s170
      %173 = dma.hbm_to_vmem [thread:$0]  %s17, 16, %s171, [#allocation18]
    $region73: #{forward.1} parent=1 // pred_fallthru
      _
    // Predicated region
    $region74: #{forward.1} parent=1 // pred_check
      _
    $region75: #{forward.1} parent=1 // pred_check_branch
      %175 = sbr.rel (0) target = $region77
    $region76: #{forward.1} parent=1 // pred_region
      %176 = dma.done [#allocation3], 128
    $region77: #{forward.1} parent=1 // pred_fallthru
      _
    // Predicated region
    $region78: #{forward.1} parent=1 // pred_check
      _
    $region79: #{forward.1} parent=1 // pred_check_branch
      %178 = sbr.rel (0) target = $region81
    $region80: #{forward.1} parent=1 // pred_region
      %179 = dma.done [#allocation6], 32
    $region81: #{forward.1} parent=1 // pred_fallthru
      _
    // Predicated region
    $region82: #{forward.1} parent=1 // pred_check
      _
    $region83: #{forward.1} parent=1 // pred_check_branch
      %181 = sbr.rel (0) target = $region85
    $region84: #{forward.1} parent=1 // pred_region
      %182 = dma.done [#allocation6], 32
    $region85: #{forward.1} parent=1 // pred_fallthru
      _
    // Predicated region
    $region86: #{forward.1} parent=1 // pred_check
      _
    $region87: #{forward.1} parent=1 // pred_check_branch
      %184 = sbr.rel (0) target = $region89
    $region88: #{forward.1} parent=1 // pred_region
      %185 = dma.done [#allocation9], 32
    $region89: #{forward.1} parent=1 // pred_fallthru
      _
    // Predicated region
    $region90: #{forward.1} parent=1 // pred_check
      _
    $region91: #{forward.1} parent=1 // pred_check_branch
      %187 = sbr.rel (0) target = $region93
    $region92: #{forward.1} parent=1 // pred_region
      %188 = dma.done [#allocation9], 1024
    $region93: #{forward.1} parent=1 // pred_fallthru
      _
    // Predicated region
    $region94: #{forward.1} parent=1 // pred_check
      _
    $region95: #{forward.1} parent=1 // pred_check_branch
      %190 = sbr.rel (0) target = $region97
    $region96: #{forward.1} parent=1 // pred_region
      %191 = dma.done [#allocation12], 32
    $region97: #{forward.1} parent=1 // pred_fallthru
      _
    // Predicated region
    $region98: #{forward.1} parent=1 // pred_check
      _
    $region99: #{forward.1} parent=1 // pred_check_branch
      %193 = sbr.rel (0) target = $region101
    $region100: #{forward.1} parent=1 // pred_region
      %194 = dma.done [#allocation12], 32
    $region101: #{forward.1} parent=1 // pred_fallthru
      _
    // Predicated region
    $region102: #{forward.1} parent=1 // pred_check
      _
    $region103: #{forward.1} parent=1 // pred_check_branch
      %196 = sbr.rel (0) target = $region105
    $region104: #{forward.1} parent=1 // pred_region
      %197 = dma.done [#allocation15], 32
    $region105: #{forward.1} parent=1 // pred_fallthru
      _
    // Predicated region
    $region106: #{forward.1} parent=1 // pred_check
      _
    $region107: #{forward.1} parent=1 // pred_check_branch
      %199 = sbr.rel (0) target = $region109
    $region108: #{forward.1} parent=1 // pred_region
      %200 = dma.done [#allocation15], 32
    $region109: #{forward.1} parent=1 // pred_fallthru
      _
    // Predicated region
    $region110: #{forward.1} parent=1 // pred_check
      _
    $region111: #{forward.1} parent=1 // pred_check_branch
      %202 = sbr.rel (0) target = $region113
    $region112: #{forward.1} parent=1 // pred_region
      %203 = dma.done [#allocation18], 512
    $region113: #{forward.1} parent=1 // pred_fallthru
      _
    // Predicated region
    $region114: #{forward.1} parent=1 // pred_check
      _
    $region115: #{forward.1} parent=1 // pred_check_branch
      %205 = sbr.rel (0) target = $region117
    $region116: #{forward.1} parent=1 // pred_region
      %206 = dma.done [#allocation18], 16
    $region117: #{forward.1} parent=1 // pred_fallthru
      _
    %v208 = vld [vmem:[%s0] sm:$0xff]
    %v209 = vld [vmem:[%s0 + $0x8] sm:$0xff]
    %v210 = vpack.c.bf16 %v209, %v208
    %v211 = vld [vmem:[#allocation2] sm:$0xf]
    %v212 = vld [vmem:[#allocation2 + $0x4] sm:$0xf]
    %v213 = vld [vmem:[%s3] sm:$0x1]
    %v215 = vlaneseq
    %v216 = vshrl.u32 %v215, 7
    %v217 = vsub.s32 0, %v216
    %v218 = vrot.slane %v213, %v217
    %v222 = vunpack.c.l.b16 %v211
    %v223 = vunpack.c.l.b16 %v212
    %v224 = vpack.c.b16 %v223, %v222
    %vm226 = vcmask 130048
    %v228 = vsel %vm226, %v210, 0
    %230 = vmatprep.subr.bf16.mxu0 0
    %231 = vmatpush1.bf16.msra.mxu0 0
    %232 = vmatprep.subr.bf16.mxu0 0
    %233 = vmatpush1.bf16.msra.mxu0 0
    %234 = vmatprep.subr.bf16.mxu0 0
    %235 = vmatpush1.bf16.msra.mxu0 0
    %236 = vmatprep.subr.bf16.mxu0 0
    %237 = vmatpush1.bf16.msra.mxu0 0
    %238 = vmatprep.subr.bf16.mxu0 0
    %239 = vmatpush1.bf16.msra.mxu0 0
    %240 = vmatprep.subr.bf16.mxu0 0
    %241 = vmatpush1.bf16.msra.mxu0 0
    %242 = vmatprep.subr.bf16.mxu0 0
    %243 = vmatpush1.bf16.msra.mxu0 0
    %244 = vmatprep.subr.bf16.mxu0 0
    %245 = vmatpush1.bf16.msra.mxu0 %v224
    %246 = vmatprep.subr.bf16.mxu0 0
    %247 = vmatpush2.bf16.msra.mxu0 0
    %248 = vmatprep.subr.bf16.mxu0 0
    %249 = vmatpush2.bf16.msra.mxu0 0
    %250 = vmatprep.subr.bf16.mxu0 0
    %251 = vmatpush2.bf16.msra.mxu0 0
    %252 = vmatprep.subr.bf16.mxu0 0
    %253 = vmatpush2.bf16.msra.mxu0 0
    %254 = vmatprep.subr.bf16.mxu0 0
    %255 = vmatpush2.bf16.msra.mxu0 0
    %256 = vmatprep.subr.bf16.mxu0 0
    %257 = vmatpush2.bf16.msra.mxu0 0
    %258 = vmatprep.subr.bf16.mxu0 0
    %259 = vmatpush2.bf16.msra.mxu0 0
    %260 = vmatprep.subr.bf16.mxu0 0
    %261 = vmatpush2.bf16.msra.mxu0 0
    %262 = vmatprep.mubr.bf16.mxu0 0
    %263 = vmatmul.mubr.bf16.gmra.mxu0 %v228
    %v264 = vpop.f32.mrf.mxu0
    %v265 = vadd.f32 %v218, %v264
    %v266 = vpop.f32.mrf.mxu0
    %v267 = vpop.f32.mrf.mxu0
    %v268 = vadd.f32 %v218, %v267
    %v269 = vpop.f32.mrf.mxu0
    %270 = vdwg.mxu0
    %v271 = vld [vmem:[%s1] sm:$0xff]
    %v272 = vadd.f32 %v265, %v271
    %v273 = vadd.f32 %v268, %v271
    %v274 = vlaneseq
    %v275 = vshrl.u32 %v274, 7
    %v276 = vadd.s32 %v275, 8
    %v277 = vlaneseq
    %v278 = vand.u32 %v277, 127
    %vm279 = vcmp.lt.s32.totalorder %v275, 0
    %v280 = vsub.s32 0, %v275
    %v281 = vsel %vm279, %v280, %v275
    %v282 = vshrl.u32 %v281, 3
    %v283 = vand.u32 %v281, 7
    %v284 = vsub.s32 0, %v283
    %v285 = vsel %vm279, %v284, %v283
    %vm286 = vcmp.lt.s32.totalorder %v276, 0
    %v287 = vsub.s32 0, %v276
    %v288 = vsel %vm286, %v287, %v276
    %v289 = vshrl.u32 %v288, 3
    %v290 = vand.u32 %v288, 7
    %v291 = vsub.s32 0, %v290
    %v292 = vsel %vm286, %v291, %v290
    %vm293 = vcmp.ne.s32.totalorder %v285, 0
    %vm294 = vcmp.ne.s32.totalorder %v292, 0
    %vm295 = vcmp.lt.s32.totalorder %v285, 0
    %vm296 = vcmp.lt.s32.totalorder %v292, 0
    %vm297 = vmand %vm295, %vm293
    %vm298 = vmand %vm296, %vm294
    %v299 = vadd.s32 %v285, 8
    %v300 = vadd.s32 %v292, 8
    %v301 = vsel %vm297, %v299, %v285
    %v302 = vsel %vm298, %v300, %v292
    %vm303 = vcmp.lt.s32.totalorder %v278, 0
    %v304 = vsub.s32 0, %v278
    %v305 = vsel %vm303, %v304, %v278
    %v306 = vshrl.u32 %v305, 3
    %v307 = vand.u32 %v305, 7
    %v308 = vsub.s32 0, %v307
    %v309 = vsel %vm303, %v308, %v307
    %vm310 = vcmp.ne.s32.totalorder %v309, 0
    %vm311 = vcmp.lt.s32.totalorder %v309, 0
    %vm312 = vmand %vm311, %vm310
    %v313 = vadd.s32 %v309, 8
    %v314 = vsel %vm312, %v313, %v309
    %vm315 = vcmp.eq.s32.totalorder %v301, %v314
    %vm316 = vcmp.eq.s32.totalorder %v302, %v314
    %v317 = vpack.c.bf16 %v273, %v272
    %v318 = vld [vmem:[%s4] sm:$0xff]
    %v319 = vld [vmem:[%s4 + $0x8] sm:$0xff]
    %v320 = vld [vmem:[%s4 + $0x10] sm:$0xff]
    %v321 = vld [vmem:[%s4 + $0x18] sm:$0xff]
    %v322 = vld [vmem:[%s4 + $0x20] sm:$0xff]
    %v323 = vld [vmem:[%s4 + $0x28] sm:$0xff]
    %v324 = vld [vmem:[%s4 + $0x30] sm:$0xff]
    %v325 = vld [vmem:[%s4 + $0x38] sm:$0xff]
    %v326 = vld [vmem:[%s5] sm:$0x3]
    %v328 = vlaneseq
    %v329 = vshrl.u32 %v328, 7
    %v330 = vsub.s32 0, %v329
    %v331 = vrot.slane %v326, %v330
    %v332 = vlaneseq
    %v333 = vshrl.u32 %v332, 7
    %v334 = vsub.s32 1, %v333
    %v335 = vrot.slane %v326, %v334
    %v346 = vunpack.c.l.b16 %v318
    %v347 = vunpack.c.h.b16 %v318
    %v348 = vunpack.c.l.b16 %v319
    %v349 = vunpack.c.h.b16 %v319
    %v350 = vunpack.c.l.b16 %v320
    %v351 = vunpack.c.h.b16 %v320
    %v352 = vunpack.c.l.b16 %v321
    %v353 = vunpack.c.h.b16 %v321
    %v354 = vunpack.c.l.b16 %v322
    %v355 = vunpack.c.h.b16 %v322
    %v356 = vunpack.c.l.b16 %v323
    %v357 = vunpack.c.h.b16 %v323
    %v358 = vunpack.c.l.b16 %v324
    %v359 = vunpack.c.h.b16 %v324
    %v360 = vunpack.c.l.b16 %v325
    %v361 = vunpack.c.h.b16 %v325
    %v362 = vpack.c.b16 %v348, %v346
    %v363 = vpack.c.b16 %v349, %v347
    %v364 = vpack.c.b16 %v352, %v350
    %v365 = vpack.c.b16 %v353, %v351
    %v366 = vpack.c.b16 %v356, %v354
    %v367 = vpack.c.b16 %v357, %v355
    %v368 = vpack.c.b16 %v360, %v358
    %v369 = vpack.c.b16 %v361, %v359
    %vm378 = vcmask 523264
    %v380 = vsel %vm378, %v317, 0
    %382 = vmatprep.subr.bf16.mxu0 0
    %383 = vmatpush1.bf16.msra.mxu0 0
    %384 = vmatprep.subr.bf16.mxu0 0
    %385 = vmatpush1.bf16.msra.mxu0 0
    %386 = vmatprep.subr.bf16.mxu0 0
    %387 = vmatpush1.bf16.msra.mxu0 0
    %388 = vmatprep.subr.bf16.mxu0 0
    %389 = vmatpush1.bf16.msra.mxu0 0
    %390 = vmatprep.subr.bf16.mxu0 %v369
    %391 = vmatpush1.bf16.msra.mxu0 %v368
    %392 = vmatprep.subr.bf16.mxu0 %v367
    %393 = vmatpush1.bf16.msra.mxu0 %v366
    %394 = vmatprep.subr.bf16.mxu0 %v365
    %395 = vmatpush1.bf16.msra.mxu0 %v364
    %396 = vmatprep.subr.bf16.mxu0 %v363
    %397 = vmatpush1.bf16.msra.mxu0 %v362
    %398 = vmatprep.subr.bf16.mxu0 0
    %399 = vmatpush2.bf16.msra.mxu0 0
    %400 = vmatprep.subr.bf16.mxu0 0
    %401 = vmatpush2.bf16.msra.mxu0 0
    %402 = vmatprep.subr.bf16.mxu0 0
    %403 = vmatpush2.bf16.msra.mxu0 0
    %404 = vmatprep.subr.bf16.mxu0 0
    %405 = vmatpush2.bf16.msra.mxu0 0
    %406 = vmatprep.subr.bf16.mxu0 0
    %407 = vmatpush2.bf16.msra.mxu0 0
    %408 = vmatprep.subr.bf16.mxu0 0
    %409 = vmatpush2.bf16.msra.mxu0 0
    %410 = vmatprep.subr.bf16.mxu0 0
    %411 = vmatpush2.bf16.msra.mxu0 0
    %412 = vmatprep.subr.bf16.mxu0 0
    %413 = vmatpush2.bf16.msra.mxu0 0
    %414 = vmatprep.mubr.bf16.mxu0 0
    %415 = vmatmul.mubr.bf16.gmra.mxu0 %v380
    %v416 = vpop.f32.mrf.mxu0
    %v417 = vadd.f32 %v331, %v416
    %v418 = vpop.f32.mrf.mxu0
    %v419 = vadd.f32 %v335, %v418
    %v420 = vpop.f32.mrf.mxu0
    %v421 = vadd.f32 %v331, %v420
    %v422 = vpop.f32.mrf.mxu0
    %v423 = vadd.f32 %v335, %v422
    %424 = vdwg.mxu0
    %v425 = vmul.f32 %v417, 0.25
    %v426 = vmul.f32 %v421, 0.25
    %429 = vrot.lane.b32.xlu0 %v425, 112
    %v430 = vpop.permute.xlu0 %429
    %431 = vrot.lane.b32.xlu0 %v426, 112
    %v432 = vpop.permute.xlu0 %431
    %435 = vrot.lane.b32.xlu0 %v425, 96
    %v436 = vpop.permute.xlu0 %435
    %437 = vrot.lane.b32.xlu0 %v426, 96
    %v438 = vpop.permute.xlu0 %437
    %441 = vrot.lane.b32.xlu0 %v425, 80
    %v442 = vpop.permute.xlu0 %441
    %443 = vrot.lane.b32.xlu0 %v426, 80
    %v444 = vpop.permute.xlu0 %443
    %v447 = vpack.c.bf16 %v426, %v425
    %v448 = vpack.c.bf16 %v432, %v430
    %v449 = vpack.c.bf16 %v438, %v436
    %v450 = vpack.c.bf16 %v444, %v442
    %453 = vrot.lane.b32.xlu0 %v417, 112
    %v454 = vpop.permute.xlu0 %453
    %455 = vrot.lane.b32.xlu0 %v421, 112
    %v456 = vpop.permute.xlu0 %455
    %459 = vrot.lane.b32.xlu0 %v417, 96
    %v460 = vpop.permute.xlu0 %459
    %461 = vrot.lane.b32.xlu0 %v421, 96
    %v462 = vpop.permute.xlu0 %461
    %465 = vrot.lane.b32.xlu0 %v417, 80
    %v466 = vpop.permute.xlu0 %465
    %467 = vrot.lane.b32.xlu0 %v421, 80
    %v468 = vpop.permute.xlu0 %467
    %v471 = vpack.c.bf16 %v421, %v417
    %v472 = vpack.c.bf16 %v456, %v454
    %v473 = vpack.c.bf16 %v462, %v460
    %v474 = vpack.c.bf16 %v468, %v466
    %477 = vrot.lane.b32.xlu0 %v419, 112
    %v478 = vpop.permute.xlu0 %477
    %479 = vrot.lane.b32.xlu0 %v423, 112
    %v480 = vpop.permute.xlu0 %479
    %483 = vrot.lane.b32.xlu0 %v419, 96
    %v484 = vpop.permute.xlu0 %483
    %485 = vrot.lane.b32.xlu0 %v423, 96
    %v486 = vpop.permute.xlu0 %485
    %489 = vrot.lane.b32.xlu0 %v419, 80
    %v490 = vpop.permute.xlu0 %489
    %491 = vrot.lane.b32.xlu0 %v423, 80
    %v492 = vpop.permute.xlu0 %491
    %v495 = vpack.c.bf16 %v423, %v419
    %v496 = vpack.c.bf16 %v480, %v478
    %v497 = vpack.c.bf16 %v486, %v484
    %v498 = vpack.c.bf16 %v492, %v490
    %500 = vrot.lane.b32.xlu0 %v471, 64
    %v501 = vpop.permute.xlu0 %500
    %v503 = vsel %vm226, %v447, 0
    %v506 = vsel %vm226, %v501, 0
    %508 = vmatprep.subr.bf16.mxu0 0
    %509 = vmatpush1.bf16.xpose.msra.mxu0 0
    %510 = vmatprep.subr.bf16.mxu0 0
    %511 = vmatpush1.bf16.xpose.msra.mxu0 0
    %512 = vmatprep.subr.bf16.mxu0 0
    %513 = vmatpush1.bf16.xpose.msra.mxu0 0
    %514 = vmatprep.subr.bf16.mxu0 0
    %515 = vmatpush1.bf16.xpose.msra.mxu0 0
    %516 = vmatprep.subr.bf16.mxu0 0
    %517 = vmatpush1.bf16.xpose.msra.mxu0 0
    %518 = vmatprep.subr.bf16.mxu0 0
    %519 = vmatpush1.bf16.xpose.msra.mxu0 0
    %520 = vmatprep.subr.bf16.mxu0 0
    %521 = vmatpush1.bf16.xpose.msra.mxu0 0
    %522 = vmatprep.subr.bf16.mxu0 0
    %523 = vmatpush1.bf16.xpose.msra.mxu0 %v506
    %524 = vmatprep.subr.bf16.mxu0 0
    %525 = vmatpush2.bf16.xpose.msra.mxu0 0
    %526 = vmatprep.subr.bf16.mxu0 0
    %527 = vmatpush2.bf16.xpose.msra.mxu0 0
    %528 = vmatprep.subr.bf16.mxu0 0
    %529 = vmatpush2.bf16.xpose.msra.mxu0 0
    %530 = vmatprep.subr.bf16.mxu0 0
    %531 = vmatpush2.bf16.xpose.msra.mxu0 0
    %532 = vmatprep.subr.bf16.mxu0 0
    %533 = vmatpush2.bf16.xpose.msra.mxu0 0
    %534 = vmatprep.subr.bf16.mxu0 0
    %535 = vmatpush2.bf16.xpose.msra.mxu0 0
    %536 = vmatprep.subr.bf16.mxu0 0
    %537 = vmatpush2.bf16.xpose.msra.mxu0 0
    %538 = vmatprep.subr.bf16.mxu0 0
    %539 = vmatpush2.bf16.xpose.msra.mxu0 0
    %540 = vmatprep.mubr.bf16.mxu0 0
    %541 = vmatmul.mubr.bf16.gmra.mxu0 %v503
    %v542 = vpop.f32.mrf.mxu0
    %v543 = vadd.f32 0.0, %v542
    %v544 = vpop.f32.mrf.mxu0
    %v545 = vpop.f32.mrf.mxu0
    %v546 = vadd.f32 0.0, %v545
    %v547 = vpop.f32.mrf.mxu0
    %548 = vdwg.mxu0
    %550 = vrot.lane.b32.xlu0 %v472, 64
    %v551 = vpop.permute.xlu0 %550
    %v553 = vsel %vm226, %v448, 0
    %v556 = vsel %vm226, %v551, 0
    %558 = vmatprep.subr.bf16.mxu0 0
    %559 = vmatpush1.bf16.xpose.msra.mxu0 0
    %560 = vmatprep.subr.bf16.mxu0 0
    %561 = vmatpush1.bf16.xpose.msra.mxu0 0
    %562 = vmatprep.subr.bf16.mxu0 0
    %563 = vmatpush1.bf16.xpose.msra.mxu0 0
    %564 = vmatprep.subr.bf16.mxu0 0
    %565 = vmatpush1.bf16.xpose.msra.mxu0 0
    %566 = vmatprep.subr.bf16.mxu0 0
    %567 = vmatpush1.bf16.xpose.msra.mxu0 0
    %568 = vmatprep.subr.bf16.mxu0 0
    %569 = vmatpush1.bf16.xpose.msra.mxu0 0
    %570 = vmatprep.subr.bf16.mxu0 0
    %571 = vmatpush1.bf16.xpose.msra.mxu0 0
    %572 = vmatprep.subr.bf16.mxu0 0
    %573 = vmatpush1.bf16.xpose.msra.mxu0 %v556
    %574 = vmatprep.subr.bf16.mxu0 0
    %575 = vmatpush2.bf16.xpose.msra.mxu0 0
    %576 = vmatprep.subr.bf16.mxu0 0
    %577 = vmatpush2.bf16.xpose.msra.mxu0 0
    %578 = vmatprep.subr.bf16.mxu0 0
    %579 = vmatpush2.bf16.xpose.msra.mxu0 0
    %580 = vmatprep.subr.bf16.mxu0 0
    %581 = vmatpush2.bf16.xpose.msra.mxu0 0
    %582 = vmatprep.subr.bf16.mxu0 0
    %583 = vmatpush2.bf16.xpose.msra.mxu0 0
    %584 = vmatprep.subr.bf16.mxu0 0
    %585 = vmatpush2.bf16.xpose.msra.mxu0 0
    %586 = vmatprep.subr.bf16.mxu0 0
    %587 = vmatpush2.bf16.xpose.msra.mxu0 0
    %588 = vmatprep.subr.bf16.mxu0 0
    %589 = vmatpush2.bf16.xpose.msra.mxu0 0
    %590 = vmatprep.mubr.bf16.mxu0 0
    %591 = vmatmul.mubr.bf16.gmra.mxu0 %v553
    %v592 = vpop.f32.mrf.mxu0
    %v593 = vadd.f32 0.0, %v592
    %v594 = vpop.f32.mrf.mxu0
    %v595 = vpop.f32.mrf.mxu0
    %v596 = vadd.f32 0.0, %v595
    %v597 = vpop.f32.mrf.mxu0
    %598 = vdwg.mxu0
    %600 = vrot.lane.b32.xlu0 %v473, 64
    %v601 = vpop.permute.xlu0 %600
    %v603 = vsel %vm226, %v449, 0
    %v606 = vsel %vm226, %v601, 0
    %608 = vmatprep.subr.bf16.mxu0 0
    %609 = vmatpush1.bf16.xpose.msra.mxu0 0
    %610 = vmatprep.subr.bf16.mxu0 0
    %611 = vmatpush1.bf16.xpose.msra.mxu0 0
    %612 = vmatprep.subr.bf16.mxu0 0
    %613 = vmatpush1.bf16.xpose.msra.mxu0 0
    %614 = vmatprep.subr.bf16.mxu0 0
    %615 = vmatpush1.bf16.xpose.msra.mxu0 0
    %616 = vmatprep.subr.bf16.mxu0 0
    %617 = vmatpush1.bf16.xpose.msra.mxu0 0
    %618 = vmatprep.subr.bf16.mxu0 0
    %619 = vmatpush1.bf16.xpose.msra.mxu0 0
    %620 = vmatprep.subr.bf16.mxu0 0
    %621 = vmatpush1.bf16.xpose.msra.mxu0 0
    %622 = vmatprep.subr.bf16.mxu0 0
    %623 = vmatpush1.bf16.xpose.msra.mxu0 %v606
    %624 = vmatprep.subr.bf16.mxu0 0
    %625 = vmatpush2.bf16.xpose.msra.mxu0 0
    %626 = vmatprep.subr.bf16.mxu0 0
    %627 = vmatpush2.bf16.xpose.msra.mxu0 0
    %628 = vmatprep.subr.bf16.mxu0 0
    %629 = vmatpush2.bf16.xpose.msra.mxu0 0
    %630 = vmatprep.subr.bf16.mxu0 0
    %631 = vmatpush2.bf16.xpose.msra.mxu0 0
    %632 = vmatprep.subr.bf16.mxu0 0
    %633 = vmatpush2.bf16.xpose.msra.mxu0 0
    %634 = vmatprep.subr.bf16.mxu0 0
    %635 = vmatpush2.bf16.xpose.msra.mxu0 0
    %636 = vmatprep.subr.bf16.mxu0 0
    %637 = vmatpush2.bf16.xpose.msra.mxu0 0
    %638 = vmatprep.subr.bf16.mxu0 0
    %639 = vmatpush2.bf16.xpose.msra.mxu0 0
    %640 = vmatprep.mubr.bf16.mxu0 0
    %641 = vmatmul.mubr.bf16.gmra.mxu0 %v603
    %v642 = vpop.f32.mrf.mxu0
    %v643 = vadd.f32 0.0, %v642
    %v644 = vpop.f32.mrf.mxu0
    %v645 = vpop.f32.mrf.mxu0
    %v646 = vadd.f32 0.0, %v645
    %v647 = vpop.f32.mrf.mxu0
    %648 = vdwg.mxu0
    %650 = vrot.lane.b32.xlu0 %v474, 64
    %v651 = vpop.permute.xlu0 %650
    %v653 = vsel %vm226, %v450, 0
    %v656 = vsel %vm226, %v651, 0
    %658 = vmatprep.subr.bf16.mxu0 0
    %659 = vmatpush1.bf16.xpose.msra.mxu0 0
    %660 = vmatprep.subr.bf16.mxu0 0
    %661 = vmatpush1.bf16.xpose.msra.mxu0 0
    %662 = vmatprep.subr.bf16.mxu0 0
    %663 = vmatpush1.bf16.xpose.msra.mxu0 0
    %664 = vmatprep.subr.bf16.mxu0 0
    %665 = vmatpush1.bf16.xpose.msra.mxu0 0
    %666 = vmatprep.subr.bf16.mxu0 0
    %667 = vmatpush1.bf16.xpose.msra.mxu0 0
    %668 = vmatprep.subr.bf16.mxu0 0
    %669 = vmatpush1.bf16.xpose.msra.mxu0 0
    %670 = vmatprep.subr.bf16.mxu0 0
    %671 = vmatpush1.bf16.xpose.msra.mxu0 0
    %672 = vmatprep.subr.bf16.mxu0 0
    %673 = vmatpush1.bf16.xpose.msra.mxu0 %v656
    %674 = vmatprep.subr.bf16.mxu0 0
    %675 = vmatpush2.bf16.xpose.msra.mxu0 0
    %676 = vmatprep.subr.bf16.mxu0 0
    %677 = vmatpush2.bf16.xpose.msra.mxu0 0
    %678 = vmatprep.subr.bf16.mxu0 0
    %679 = vmatpush2.bf16.xpose.msra.mxu0 0
    %680 = vmatprep.subr.bf16.mxu0 0
    %681 = vmatpush2.bf16.xpose.msra.mxu0 0
    %682 = vmatprep.subr.bf16.mxu0 0
    %683 = vmatpush2.bf16.xpose.msra.mxu0 0
    %684 = vmatprep.subr.bf16.mxu0 0
    %685 = vmatpush2.bf16.xpose.msra.mxu0 0
    %686 = vmatprep.subr.bf16.mxu0 0
    %687 = vmatpush2.bf16.xpose.msra.mxu0 0
    %688 = vmatprep.subr.bf16.mxu0 0
    %689 = vmatpush2.bf16.xpose.msra.mxu0 0
    %690 = vmatprep.mubr.bf16.mxu0 0
    %691 = vmatmul.mubr.bf16.gmra.mxu0 %v653
    %v692 = vpop.f32.mrf.mxu0
    %v693 = vadd.f32 0.0, %v692
    %v694 = vpop.f32.mrf.mxu0
    %v695 = vpop.f32.mrf.mxu0
    %v696 = vadd.f32 0.0, %v695
    %v697 = vpop.f32.mrf.mxu0
    %698 = vdwg.mxu0
    %v699 = vsel %vm315, 1, 0
    %v700 = vsel %vm316, 1, 0
    %vm701 = vcmp.eq.s32.totalorder %v699, 1
    %vm702 = vcmp.eq.s32.totalorder %v700, 1
    %v703 = vsel %vm701, %v543, -1e+30
    %v704 = vsel %vm702, %v546, -1e+30
    %v705 = vsel %vm701, %v593, -1e+30
    %v706 = vsel %vm702, %v596, -1e+30
    %v707 = vsel %vm701, %v643, -1e+30
    %v708 = vsel %vm702, %v646, -1e+30
    %v709 = vsel %vm701, %v693, -1e+30
    %v710 = vsel %vm702, %v696, -1e+30
    %v711 = vsel %vm226, %v703, -inf
    %712 = vmax.xlane.f32.xlu0 %v711
    %v713 = vpop.xlane.xlu0 %712
    %v714 = vsel %vm226, %v704, -inf
    %715 = vmax.xlane.f32.xlu0 %v714
    %v716 = vpop.xlane.xlu0 %715
    %v717 = vsel %vm226, %v705, -inf
    %718 = vmax.xlane.f32.xlu0 %v717
    %v719 = vpop.xlane.xlu0 %718
    %v720 = vsel %vm226, %v706, -inf
    %721 = vmax.xlane.f32.xlu0 %v720
    %v722 = vpop.xlane.xlu0 %721
    %v723 = vsel %vm226, %v707, -inf
    %724 = vmax.xlane.f32.xlu0 %v723
    %v725 = vpop.xlane.xlu0 %724
    %v726 = vsel %vm226, %v708, -inf
    %727 = vmax.xlane.f32.xlu0 %v726
    %v728 = vpop.xlane.xlu0 %727
    %v729 = vsel %vm226, %v709, -inf
    %730 = vmax.xlane.f32.xlu0 %v729
    %v731 = vpop.xlane.xlu0 %730
    %v732 = vsel %vm226, %v710, -inf
    %733 = vmax.xlane.f32.xlu0 %v732
    %v734 = vpop.xlane.xlu0 %733
    %v735 = vsub.f32 %v703, %v713
    %v736 = vsub.f32 %v704, %v716
    %v737 = vsub.f32 %v705, %v719
    %v738 = vsub.f32 %v706, %v722
    %v739 = vsub.f32 %v707, %v725
    %v740 = vsub.f32 %v708, %v728
    %v741 = vsub.f32 %v709, %v731
    %v742 = vsub.f32 %v710, %v734
    %v743 = vmul.f32 %v735, 1.442695
    %v744 = vpow.pop %v743
    %v745 = vmul.f32 %v736, 1.442695
    %v746 = vpow.pop %v745
    %v747 = vmul.f32 %v737, 1.442695
    %v748 = vpow.pop %v747
    %v749 = vmul.f32 %v738, 1.442695
    %v750 = vpow.pop %v749
    %v751 = vmul.f32 %v739, 1.442695
    %v752 = vpow.pop %v751
    %v753 = vmul.f32 %v740, 1.442695
    %v754 = vpow.pop %v753
    %v755 = vmul.f32 %v741, 1.442695
    %v756 = vpow.pop %v755
    %v757 = vmul.f32 %v742, 1.442695
    %v758 = vpow.pop %v757
    %v759 = vsel %vm226, %v744, 0.0
    %760 = vadd.xlane.f32.xlu0 %v759
    %v761 = vpop.xlane.xlu0 %760
    %v762 = vsel %vm226, %v746, 0.0
    %763 = vadd.xlane.f32.xlu0 %v762
    %v764 = vpop.xlane.xlu0 %763
    %v765 = vsel %vm226, %v748, 0.0
    %766 = vadd.xlane.f32.xlu0 %v765
    %v767 = vpop.xlane.xlu0 %766
    %v768 = vsel %vm226, %v750, 0.0
    %769 = vadd.xlane.f32.xlu0 %v768
    %v770 = vpop.xlane.xlu0 %769
    %v771 = vsel %vm226, %v752, 0.0
    %772 = vadd.xlane.f32.xlu0 %v771
    %v773 = vpop.xlane.xlu0 %772
    %v774 = vsel %vm226, %v754, 0.0
    %775 = vadd.xlane.f32.xlu0 %v774
    %v776 = vpop.xlane.xlu0 %775
    %v777 = vsel %vm226, %v756, 0.0
    %778 = vadd.xlane.f32.xlu0 %v777
    %v779 = vpop.xlane.xlu0 %778
    %v780 = vsel %vm226, %v758, 0.0
    %781 = vadd.xlane.f32.xlu0 %v780
    %v782 = vpop.xlane.xlu0 %781
    %v783 = vrcp.pop %v761
    %v784 = vrcp.pop %v764
    %v785 = vrcp.pop %v767
    %v786 = vrcp.pop %v770
    %v787 = vrcp.pop %v773
    %v788 = vrcp.pop %v776
    %v789 = vrcp.pop %v779
    %v790 = vrcp.pop %v782
    %v791 = vmul.f32 %v744, %v783
    %v792 = vmul.f32 %v746, %v784
    %v793 = vmul.f32 %v748, %v785
    %v794 = vmul.f32 %v750, %v786
    %v795 = vmul.f32 %v752, %v787
    %v796 = vmul.f32 %v754, %v788
    %v797 = vmul.f32 %v756, %v789
    %v798 = vmul.f32 %v758, %v790
    %v799 = vpack.c.bf16 %v792, %v791
    %v800 = vpack.c.bf16 %v794, %v793
    %v801 = vpack.c.bf16 %v796, %v795
    %v802 = vpack.c.bf16 %v798, %v797
    %v804 = vsel %vm226, %v799, 0
    %806 = vmatprep.subr.bf16.mxu0 0
    %807 = vmatpush1.bf16.msra.mxu0 0
    %808 = vmatprep.subr.bf16.mxu0 0
    %809 = vmatpush1.bf16.msra.mxu0 0
    %810 = vmatprep.subr.bf16.mxu0 0
    %811 = vmatpush1.bf16.msra.mxu0 0
    %812 = vmatprep.subr.bf16.mxu0 0
    %813 = vmatpush1.bf16.msra.mxu0 0
    %814 = vmatprep.subr.bf16.mxu0 0
    %815 = vmatpush1.bf16.msra.mxu0 0
    %816 = vmatprep.subr.bf16.mxu0 0
    %817 = vmatpush1.bf16.msra.mxu0 0
    %818 = vmatprep.subr.bf16.mxu0 0
    %819 = vmatpush1.bf16.msra.mxu0 0
    %820 = vmatprep.subr.bf16.mxu0 0
    %821 = vmatpush1.bf16.msra.mxu0 %v495
    %822 = vmatprep.subr.bf16.mxu0 0
    %823 = vmatpush2.bf16.msra.mxu0 0
    %824 = vmatprep.subr.bf16.mxu0 0
    %825 = vmatpush2.bf16.msra.mxu0 0
    %826 = vmatprep.subr.bf16.mxu0 0
    %827 = vmatpush2.bf16.msra.mxu0 0
    %828 = vmatprep.subr.bf16.mxu0 0
    %829 = vmatpush2.bf16.msra.mxu0 0
    %830 = vmatprep.subr.bf16.mxu0 0
    %831 = vmatpush2.bf16.msra.mxu0 0
    %832 = vmatprep.subr.bf16.mxu0 0
    %833 = vmatpush2.bf16.msra.mxu0 0
    %834 = vmatprep.subr.bf16.mxu0 0
    %835 = vmatpush2.bf16.msra.mxu0 0
    %836 = vmatprep.subr.bf16.mxu0 0
    %837 = vmatpush2.bf16.msra.mxu0 0
    %838 = vmatprep.mubr.bf16.mxu0 0
    %839 = vmatmul.mubr.bf16.gmra.mxu0 %v804
    %v840 = vpop.f32.mrf.mxu0
    %v841 = vadd.f32 0.0, %v840
    %v842 = vpop.f32.mrf.mxu0
    %v843 = vpop.f32.mrf.mxu0
    %v844 = vadd.f32 0.0, %v843
    %v845 = vpop.f32.mrf.mxu0
    %846 = vdwg.mxu0
    %v848 = vsel %vm226, %v800, 0
    %850 = vmatprep.subr.bf16.mxu0 0
    %851 = vmatpush1.bf16.msra.mxu0 0
    %852 = vmatprep.subr.bf16.mxu0 0
    %853 = vmatpush1.bf16.msra.mxu0 0
    %854 = vmatprep.subr.bf16.mxu0 0
    %855 = vmatpush1.bf16.msra.mxu0 0
    %856 = vmatprep.subr.bf16.mxu0 0
    %857 = vmatpush1.bf16.msra.mxu0 0
    %858 = vmatprep.subr.bf16.mxu0 0
    %859 = vmatpush1.bf16.msra.mxu0 0
    %860 = vmatprep.subr.bf16.mxu0 0
    %861 = vmatpush1.bf16.msra.mxu0 0
    %862 = vmatprep.subr.bf16.mxu0 0
    %863 = vmatpush1.bf16.msra.mxu0 0
    %864 = vmatprep.subr.bf16.mxu0 0
    %865 = vmatpush1.bf16.msra.mxu0 %v496
    %866 = vmatprep.subr.bf16.mxu0 0
    %867 = vmatpush2.bf16.msra.mxu0 0
    %868 = vmatprep.subr.bf16.mxu0 0
    %869 = vmatpush2.bf16.msra.mxu0 0
    %870 = vmatprep.subr.bf16.mxu0 0
    %871 = vmatpush2.bf16.msra.mxu0 0
    %872 = vmatprep.subr.bf16.mxu0 0
    %873 = vmatpush2.bf16.msra.mxu0 0
    %874 = vmatprep.subr.bf16.mxu0 0
    %875 = vmatpush2.bf16.msra.mxu0 0
    %876 = vmatprep.subr.bf16.mxu0 0
    %877 = vmatpush2.bf16.msra.mxu0 0
    %878 = vmatprep.subr.bf16.mxu0 0
    %879 = vmatpush2.bf16.msra.mxu0 0
    %880 = vmatprep.subr.bf16.mxu0 0
    %881 = vmatpush2.bf16.msra.mxu0 0
    %882 = vmatprep.mubr.bf16.mxu0 0
    %883 = vmatmul.mubr.bf16.gmra.mxu0 %v848
    %v884 = vpop.f32.mrf.mxu0
    %v885 = vadd.f32 0.0, %v884
    %v886 = vpop.f32.mrf.mxu0
    %v887 = vpop.f32.mrf.mxu0
    %v888 = vadd.f32 0.0, %v887
    %v889 = vpop.f32.mrf.mxu0
    %890 = vdwg.mxu0
    %v892 = vsel %vm226, %v801, 0
    %894 = vmatprep.subr.bf16.mxu0 0
    %895 = vmatpush1.bf16.msra.mxu0 0
    %896 = vmatprep.subr.bf16.mxu0 0
    %897 = vmatpush1.bf16.msra.mxu0 0
    %898 = vmatprep.subr.bf16.mxu0 0
    %899 = vmatpush1.bf16.msra.mxu0 0
    %900 = vmatprep.subr.bf16.mxu0 0
    %901 = vmatpush1.bf16.msra.mxu0 0
    %902 = vmatprep.subr.bf16.mxu0 0
    %903 = vmatpush1.bf16.msra.mxu0 0
    %904 = vmatprep.subr.bf16.mxu0 0
    %905 = vmatpush1.bf16.msra.mxu0 0
    %906 = vmatprep.subr.bf16.mxu0 0
    %907 = vmatpush1.bf16.msra.mxu0 0
    %908 = vmatprep.subr.bf16.mxu0 0
    %909 = vmatpush1.bf16.msra.mxu0 %v497
    %910 = vmatprep.subr.bf16.mxu0 0
    %911 = vmatpush2.bf16.msra.mxu0 0
    %912 = vmatprep.subr.bf16.mxu0 0
    %913 = vmatpush2.bf16.msra.mxu0 0
    %914 = vmatprep.subr.bf16.mxu0 0
    %915 = vmatpush2.bf16.msra.mxu0 0
    %916 = vmatprep.subr.bf16.mxu0 0
    %917 = vmatpush2.bf16.msra.mxu0 0
    %918 = vmatprep.subr.bf16.mxu0 0
    %919 = vmatpush2.bf16.msra.mxu0 0
    %920 = vmatprep.subr.bf16.mxu0 0
    %921 = vmatpush2.bf16.msra.mxu0 0
    %922 = vmatprep.subr.bf16.mxu0 0
    %923 = vmatpush2.bf16.msra.mxu0 0
    %924 = vmatprep.subr.bf16.mxu0 0
    %925 = vmatpush2.bf16.msra.mxu0 0
    %926 = vmatprep.mubr.bf16.mxu0 0
    %927 = vmatmul.mubr.bf16.gmra.mxu0 %v892
    %v928 = vpop.f32.mrf.mxu0
    %v929 = vadd.f32 0.0, %v928
    %v930 = vpop.f32.mrf.mxu0
    %v931 = vpop.f32.mrf.mxu0
    %v932 = vadd.f32 0.0, %v931
    %v933 = vpop.f32.mrf.mxu0
    %934 = vdwg.mxu0
    %v936 = vsel %vm226, %v802, 0
    %938 = vmatprep.subr.bf16.mxu0 0
    %939 = vmatpush1.bf16.msra.mxu0 0
    %940 = vmatprep.subr.bf16.mxu0 0
    %941 = vmatpush1.bf16.msra.mxu0 0
    %942 = vmatprep.subr.bf16.mxu0 0
    %943 = vmatpush1.bf16.msra.mxu0 0
    %944 = vmatprep.subr.bf16.mxu0 0
    %945 = vmatpush1.bf16.msra.mxu0 0
    %946 = vmatprep.subr.bf16.mxu0 0
    %947 = vmatpush1.bf16.msra.mxu0 0
    %948 = vmatprep.subr.bf16.mxu0 0
    %949 = vmatpush1.bf16.msra.mxu0 0
    %950 = vmatprep.subr.bf16.mxu0 0
    %951 = vmatpush1.bf16.msra.mxu0 0
    %952 = vmatprep.subr.bf16.mxu0 0
    %953 = vmatpush1.bf16.msra.mxu0 %v498
    %954 = vmatprep.subr.bf16.mxu0 0
    %955 = vmatpush2.bf16.msra.mxu0 0
    %956 = vmatprep.subr.bf16.mxu0 0
    %957 = vmatpush2.bf16.msra.mxu0 0
    %958 = vmatprep.subr.bf16.mxu0 0
    %959 = vmatpush2.bf16.msra.mxu0 0
    %960 = vmatprep.subr.bf16.mxu0 0
    %961 = vmatpush2.bf16.msra.mxu0 0
    %962 = vmatprep.subr.bf16.mxu0 0
    %963 = vmatpush2.bf16.msra.mxu0 0
    %964 = vmatprep.subr.bf16.mxu0 0
    %965 = vmatpush2.bf16.msra.mxu0 0
    %966 = vmatprep.subr.bf16.mxu0 0
    %967 = vmatpush2.bf16.msra.mxu0 0
    %968 = vmatprep.subr.bf16.mxu0 0
    %969 = vmatpush2.bf16.msra.mxu0 0
    %970 = vmatprep.mubr.bf16.mxu0 0
    %971 = vmatmul.mubr.bf16.gmra.mxu0 %v936
    %v972 = vpop.f32.mrf.mxu0
    %v973 = vadd.f32 0.0, %v972
    %v974 = vpop.f32.mrf.mxu0
    %v975 = vpop.f32.mrf.mxu0
    %v976 = vadd.f32 0.0, %v975
    %v977 = vpop.f32.mrf.mxu0
    %978 = vdwg.mxu0
    %981 = vrot.lane.b32.xlu0 %v885, 16
    %v982 = vpop.permute.xlu0 %981
    %983 = vrot.lane.b32.xlu0 %v888, 16
    %v984 = vpop.permute.xlu0 %983
    %989 = vrot.lane.b32.xlu0 %v929, 32
    %v990 = vpop.permute.xlu0 %989
    %991 = vrot.lane.b32.xlu0 %v932, 32
    %v992 = vpop.permute.xlu0 %991
    %997 = vrot.lane.b32.xlu0 %v973, 48
    %v998 = vpop.permute.xlu0 %997
    %999 = vrot.lane.b32.xlu0 %v976, 48
    %v1000 = vpop.permute.xlu0 %999
    %v1003 = vsel %vm226, %v841, %v982
    %v1004 = vsel %vm226, %v844, %v984
    %vm1005 = vcmask 261120
    %v1006 = vsel %vm1005, %v1003, %v990
    %v1007 = vsel %vm1005, %v1004, %v992
    %vm1008 = vcmask 392192
    %v1009 = vsel %vm1008, %v1006, %v998
    %v1010 = vsel %vm1008, %v1007, %v1000
    %v1011 = vpack.c.bf16 %v1010, %v1009
    %v1012 = vld [vmem:[%s6] sm:$0xf]
    %v1013 = vld [vmem:[%s6 + $0x4] sm:$0xf]
    %v1014 = vld [vmem:[%s6 + $0x8] sm:$0xf]
    %v1015 = vld [vmem:[%s6 + $0xc] sm:$0xf]
    %v1016 = vld [vmem:[%s6 + $0x10] sm:$0xf]
    %v1017 = vld [vmem:[%s6 + $0x14] sm:$0xf]
    %v1018 = vld [vmem:[%s6 + $0x18] sm:$0xf]
    %v1019 = vld [vmem:[%s6 + $0x1c] sm:$0xf]
    %v1020 = vld [vmem:[#allocation5] sm:$0x1]
    %v1022 = vlaneseq
    %v1023 = vshrl.u32 %v1022, 7
    %v1024 = vsub.s32 0, %v1023
    %v1025 = vrot.slane %v1020, %v1024
    %v1035 = vunpack.c.l.b16 %v1012
    %v1036 = vunpack.c.l.b16 %v1013
    %v1037 = vunpack.c.l.b16 %v1014
    %v1038 = vunpack.c.l.b16 %v1015
    %v1039 = vunpack.c.l.b16 %v1016
    %v1040 = vunpack.c.l.b16 %v1017
    %v1041 = vunpack.c.l.b16 %v1018
    %v1042 = vunpack.c.l.b16 %v1019
    %v1043 = vpack.c.b16 %v1036, %v1035
    %v1044 = vpack.c.b16 %v1038, %v1037
    %v1045 = vpack.c.b16 %v1040, %v1039
    %v1046 = vpack.c.b16 %v1042, %v1041
    %v1052 = vsel %vm378, %v1011, 0
    %1054 = vmatprep.subr.bf16.mxu0 0
    %1055 = vmatpush1.bf16.msra.mxu0 0
    %1056 = vmatprep.subr.bf16.mxu0 0
    %1057 = vmatpush1.bf16.msra.mxu0 0
    %1058 = vmatprep.subr.bf16.mxu0 0
    %1059 = vmatpush1.bf16.msra.mxu0 0
    %1060 = vmatprep.subr.bf16.mxu0 0
    %1061 = vmatpush1.bf16.msra.mxu0 0
    %1062 = vmatprep.subr.bf16.mxu0 0
    %1063 = vmatpush1.bf16.msra.mxu0 %v1046
    %1064 = vmatprep.subr.bf16.mxu0 0
    %1065 = vmatpush1.bf16.msra.mxu0 %v1045
    %1066 = vmatprep.subr.bf16.mxu0 0
    %1067 = vmatpush1.bf16.msra.mxu0 %v1044
    %1068 = vmatprep.subr.bf16.mxu0 0
    %1069 = vmatpush1.bf16.msra.mxu0 %v1043
    %1070 = vmatprep.subr.bf16.mxu0 0
    %1071 = vmatpush2.bf16.msra.mxu0 0
    %1072 = vmatprep.subr.bf16.mxu0 0
    %1073 = vmatpush2.bf16.msra.mxu0 0
    %1074 = vmatprep.subr.bf16.mxu0 0
    %1075 = vmatpush2.bf16.msra.mxu0 0
    %1076 = vmatprep.subr.bf16.mxu0 0
    %1077 = vmatpush2.bf16.msra.mxu0 0
    %1078 = vmatprep.subr.bf16.mxu0 0
    %1079 = vmatpush2.bf16.msra.mxu0 0
    %1080 = vmatprep.subr.bf16.mxu0 0
    %1081 = vmatpush2.bf16.msra.mxu0 0
    %1082 = vmatprep.subr.bf16.mxu0 0
    %1083 = vmatpush2.bf16.msra.mxu0 0
    %1084 = vmatprep.subr.bf16.mxu0 0
    %1085 = vmatpush2.bf16.msra.mxu0 0
    %1086 = vmatprep.mubr.bf16.mxu0 0
    %1087 = vmatmul.mubr.bf16.gmra.mxu0 %v1052
    %v1088 = vpop.f32.mrf.mxu0
    %v1089 = vadd.f32 %v1025, %v1088
    %v1090 = vpop.f32.mrf.mxu0
    %v1091 = vpop.f32.mrf.mxu0
    %v1092 = vadd.f32 %v1025, %v1091
    %v1093 = vpop.f32.mrf.mxu0
    %1094 = vdwg.mxu0
    %v1095 = vadd.f32 %v272, %v1089
    %v1096 = vadd.f32 %v273, %v1092
    %v1097 = vld [vmem:[#allocation7] sm:$0x1]
    %v1098 = vld [vmem:[#allocation8] sm:$0x1]
    %v1099 = vsel %vm378, %v1095, 0.0
    %1100 = vadd.xlane.f32.xlu0 %v1099
    %v1101 = vpop.xlane.xlu0 %1100
    %v1102 = vsel %vm378, %v1096, 0.0
    %1103 = vadd.xlane.f32.xlu0 %v1102
    %v1104 = vpop.xlane.xlu0 %1103
    %v1105 = vrcp.pop 64.0
    %v1106 = vmul.f32 %v1101, %v1105
    %v1107 = vmul.f32 %v1104, %v1105
    %v1108 = vsub.f32 %v1095, %v1106
    %v1109 = vsub.f32 %v1096, %v1107
    %v1110 = vmul.f32 %v1108, %v1108
    %v1111 = vmul.f32 %v1109, %v1109
    %v1112 = vsel %vm378, %v1110, 0.0
    %1113 = vadd.xlane.f32.xlu0 %v1112
    %v1114 = vpop.xlane.xlu0 %1113
    %v1115 = vsel %vm378, %v1111, 0.0
    %1116 = vadd.xlane.f32.xlu0 %v1115
    %v1117 = vpop.xlane.xlu0 %1116
    %v1118 = vmul.f32 %v1114, %v1105
    %v1119 = vmul.f32 %v1117, %v1105
    %v1120 = vadd.f32 %v1118, 1e-05
    %v1121 = vadd.f32 %v1119, 1e-05
    %v1122 = vrsqrt.pop %v1120
    %v1123 = vrsqrt.pop %v1121
    %v1124 = vmul.f32 %v1108, %v1122
    %v1125 = vmul.f32 %v1109, %v1123
    %v1127 = vlaneseq
    %v1128 = vshrl.u32 %v1127, 7
    %v1129 = vsub.s32 0, %v1128
    %v1130 = vrot.slane %v1097, %v1129
    %v1132 = vmul.f32 %v1124, %v1130
    %v1133 = vmul.f32 %v1125, %v1130
    %v1135 = vlaneseq
    %v1136 = vshrl.u32 %v1135, 7
    %v1137 = vsub.s32 0, %v1136
    %v1138 = vrot.slane %v1098, %v1137
    %v1140 = vadd.f32 %v1132, %v1138
    %v1141 = vadd.f32 %v1133, %v1138
    %v1142 = vpack.c.bf16 %v1141, %v1140
    %v1143 = vld [vmem:[#allocation10] sm:$0xf]
    %v1144 = vld [vmem:[#allocation10 + $0x4] sm:$0xf]
    %v1145 = vld [vmem:[#allocation10 + $0x8] sm:$0xf]
    %v1146 = vld [vmem:[#allocation10 + $0xc] sm:$0xf]
    %v1147 = vld [vmem:[#allocation10 + $0x10] sm:$0xf]
    %v1148 = vld [vmem:[#allocation10 + $0x14] sm:$0xf]
    %v1149 = vld [vmem:[#allocation10 + $0x18] sm:$0xf]
    %v1150 = vld [vmem:[#allocation10 + $0x1c] sm:$0xf]
    %v1151 = vld [vmem:[#allocation11] sm:$0x1]
    %v1153 = vlaneseq
    %v1154 = vshrl.u32 %v1153, 7
    %v1155 = vsub.s32 0, %v1154
    %v1156 = vrot.slane %v1151, %v1155
    %v1166 = vunpack.c.l.b16 %v1143
    %v1167 = vunpack.c.l.b16 %v1144
    %v1168 = vunpack.c.l.b16 %v1145
    %v1169 = vunpack.c.l.b16 %v1146
    %v1170 = vunpack.c.l.b16 %v1147
    %v1171 = vunpack.c.l.b16 %v1148
    %v1172 = vunpack.c.l.b16 %v1149
    %v1173 = vunpack.c.l.b16 %v1150
    %v1174 = vpack.c.b16 %v1167, %v1166
    %v1175 = vpack.c.b16 %v1169, %v1168
    %v1176 = vpack.c.b16 %v1171, %v1170
    %v1177 = vpack.c.b16 %v1173, %v1172
    %v1183 = vsel %vm378, %v1142, 0
    %1185 = vmatprep.subr.bf16.mxu0 0
    %1186 = vmatpush1.bf16.msra.mxu0 0
    %1187 = vmatprep.subr.bf16.mxu0 0
    %1188 = vmatpush1.bf16.msra.mxu0 0
    %1189 = vmatprep.subr.bf16.mxu0 0
    %1190 = vmatpush1.bf16.msra.mxu0 0
    %1191 = vmatprep.subr.bf16.mxu0 0
    %1192 = vmatpush1.bf16.msra.mxu0 0
    %1193 = vmatprep.subr.bf16.mxu0 0
    %1194 = vmatpush1.bf16.msra.mxu0 %v1177
    %1195 = vmatprep.subr.bf16.mxu0 0
    %1196 = vmatpush1.bf16.msra.mxu0 %v1176
    %1197 = vmatprep.subr.bf16.mxu0 0
    %1198 = vmatpush1.bf16.msra.mxu0 %v1175
    %1199 = vmatprep.subr.bf16.mxu0 0
    %1200 = vmatpush1.bf16.msra.mxu0 %v1174
    %1201 = vmatprep.subr.bf16.mxu0 0
    %1202 = vmatpush2.bf16.msra.mxu0 0
    %1203 = vmatprep.subr.bf16.mxu0 0
    %1204 = vmatpush2.bf16.msra.mxu0 0
    %1205 = vmatprep.subr.bf16.mxu0 0
    %1206 = vmatpush2.bf16.msra.mxu0 0
    %1207 = vmatprep.subr.bf16.mxu0 0
    %1208 = vmatpush2.bf16.msra.mxu0 0
    %1209 = vmatprep.subr.bf16.mxu0 0
    %1210 = vmatpush2.bf16.msra.mxu0 0
    %1211 = vmatprep.subr.bf16.mxu0 0
    %1212 = vmatpush2.bf16.msra.mxu0 0
    %1213 = vmatprep.subr.bf16.mxu0 0
    %1214 = vmatpush2.bf16.msra.mxu0 0
    %1215 = vmatprep.subr.bf16.mxu0 0
    %1216 = vmatpush2.bf16.msra.mxu0 0
    %1217 = vmatprep.mubr.bf16.mxu0 0
    %1218 = vmatmul.mubr.bf16.gmra.mxu0 %v1183
    %v1219 = vpop.f32.mrf.mxu0
    %v1220 = vadd.f32 %v1156, %v1219
    %v1221 = vpop.f32.mrf.mxu0
    %v1222 = vpop.f32.mrf.mxu0
    %v1223 = vadd.f32 %v1156, %v1222
    %v1224 = vpop.f32.mrf.mxu0
    %1225 = vdwg.mxu0
    %v1226 = vmax.f32 %v1220, 0.0
    %v1227 = vmax.f32 %v1223, 0.0
    %v1228 = vpack.c.bf16 %v1227, %v1226
    %v1229 = vld [vmem:[%s12] sm:$0xf]
    %v1230 = vld [vmem:[%s12 + $0x4] sm:$0xf]
    %v1231 = vld [vmem:[%s12 + $0x8] sm:$0xf]
    %v1232 = vld [vmem:[%s12 + $0xc] sm:$0xf]
    %v1233 = vld [vmem:[%s12 + $0x10] sm:$0xf]
    %v1234 = vld [vmem:[%s12 + $0x14] sm:$0xf]
    %v1235 = vld [vmem:[%s12 + $0x18] sm:$0xf]
    %v1236 = vld [vmem:[%s12 + $0x1c] sm:$0xf]
    %v1237 = vld [vmem:[%s12 + $0x20] sm:$0xf]
    %v1238 = vld [vmem:[%s12 + $0x24] sm:$0xf]
    %v1239 = vld [vmem:[%s12 + $0x28] sm:$0xf]
    %v1240 = vld [vmem:[%s12 + $0x2c] sm:$0xf]
    %v1241 = vld [vmem:[%s12 + $0x30] sm:$0xf]
    %v1242 = vld [vmem:[%s12 + $0x34] sm:$0xf]
    %v1243 = vld [vmem:[%s12 + $0x38] sm:$0xf]
    %v1244 = vld [vmem:[%s12 + $0x3c] sm:$0xf]
    %v1245 = vld [vmem:[#allocation13] sm:$0x1]
    %v1247 = vlaneseq
    %v1248 = vshrl.u32 %v1247, 7
    %v1249 = vsub.s32 0, %v1248
    %v1250 = vrot.slane %v1245, %v1249
    %v1268 = vunpack.c.l.b16 %v1229
    %v1269 = vunpack.c.l.b16 %v1230
    %v1270 = vunpack.c.l.b16 %v1231
    %v1271 = vunpack.c.l.b16 %v1232
    %v1272 = vunpack.c.l.b16 %v1233
    %v1273 = vunpack.c.l.b16 %v1234
    %v1274 = vunpack.c.l.b16 %v1235
    %v1275 = vunpack.c.l.b16 %v1236
    %v1276 = vunpack.c.l.b16 %v1237
    %v1277 = vunpack.c.l.b16 %v1238
    %v1278 = vunpack.c.l.b16 %v1239
    %v1279 = vunpack.c.l.b16 %v1240
    %v1280 = vunpack.c.l.b16 %v1241
    %v1281 = vunpack.c.l.b16 %v1242
    %v1282 = vunpack.c.l.b16 %v1243
    %v1283 = vunpack.c.l.b16 %v1244
    %v1284 = vpack.c.b16 %v1269, %v1268
    %v1285 = vpack.c.b16 %v1271, %v1270
    %v1286 = vpack.c.b16 %v1273, %v1272
    %v1287 = vpack.c.b16 %v1275, %v1274
    %v1288 = vpack.c.b16 %v1277, %v1276
    %v1289 = vpack.c.b16 %v1279, %v1278
    %v1290 = vpack.c.b16 %v1281, %v1280
    %v1291 = vpack.c.b16 %v1283, %v1282
    %1300 = vmatprep.subr.bf16.mxu0 0
    %1301 = vmatpush1.bf16.msra.mxu0 %v1291
    %1302 = vmatprep.subr.bf16.mxu0 0
    %1303 = vmatpush1.bf16.msra.mxu0 %v1290
    %1304 = vmatprep.subr.bf16.mxu0 0
    %1305 = vmatpush1.bf16.msra.mxu0 %v1289
    %1306 = vmatprep.subr.bf16.mxu0 0
    %1307 = vmatpush1.bf16.msra.mxu0 %v1288
    %1308 = vmatprep.subr.bf16.mxu0 0
    %1309 = vmatpush1.bf16.msra.mxu0 %v1287
    %1310 = vmatprep.subr.bf16.mxu0 0
    %1311 = vmatpush1.bf16.msra.mxu0 %v1286
    %1312 = vmatprep.subr.bf16.mxu0 0
    %1313 = vmatpush1.bf16.msra.mxu0 %v1285
    %1314 = vmatprep.subr.bf16.mxu0 0
    %1315 = vmatpush1.bf16.msra.mxu0 %v1284
    %1316 = vmatprep.subr.bf16.mxu0 0
    %1317 = vmatpush2.bf16.msra.mxu0 0
    %1318 = vmatprep.subr.bf16.mxu0 0
    %1319 = vmatpush2.bf16.msra.mxu0 0
    %1320 = vmatprep.subr.bf16.mxu0 0
    %1321 = vmatpush2.bf16.msra.mxu0 0
    %1322 = vmatprep.subr.bf16.mxu0 0
    %1323 = vmatpush2.bf16.msra.mxu0 0
    %1324 = vmatprep.subr.bf16.mxu0 0
    %1325 = vmatpush2.bf16.msra.mxu0 0
    %1326 = vmatprep.subr.bf16.mxu0 0
    %1327 = vmatpush2.bf16.msra.mxu0 0
    %1328 = vmatprep.subr.bf16.mxu0 0
    %1329 = vmatpush2.bf16.msra.mxu0 0
    %1330 = vmatprep.subr.bf16.mxu0 0
    %1331 = vmatpush2.bf16.msra.mxu0 0
    %1332 = vmatprep.mubr.bf16.mxu0 0
    %1333 = vmatmul.mubr.bf16.gmra.mxu0 %v1228
    %v1334 = vpop.f32.mrf.mxu0
    %v1335 = vadd.f32 %v1250, %v1334
    %v1336 = vpop.f32.mrf.mxu0
    %v1337 = vpop.f32.mrf.mxu0
    %v1338 = vadd.f32 %v1250, %v1337
    %v1339 = vpop.f32.mrf.mxu0
    %1340 = vdwg.mxu0
    %v1341 = vadd.f32 %v1140, %v1335
    %v1342 = vadd.f32 %v1141, %v1338
    %v1343 = vld [vmem:[#allocation14] sm:$0x1]
    %v1344 = vld [vmem:[#allocation16] sm:$0x1]
    %v1345 = vsel %vm378, %v1341, 0.0
    %1346 = vadd.xlane.f32.xlu0 %v1345
    %v1347 = vpop.xlane.xlu0 %1346
    %v1348 = vsel %vm378, %v1342, 0.0
    %1349 = vadd.xlane.f32.xlu0 %v1348
    %v1350 = vpop.xlane.xlu0 %1349
    %v1351 = vmul.f32 %v1347, %v1105
    %v1352 = vmul.f32 %v1350, %v1105
    %v1353 = vsub.f32 %v1341, %v1351
    %v1354 = vsub.f32 %v1342, %v1352
    %v1355 = vmul.f32 %v1353, %v1353
    %v1356 = vmul.f32 %v1354, %v1354
    %v1357 = vsel %vm378, %v1355, 0.0
    %1358 = vadd.xlane.f32.xlu0 %v1357
    %v1359 = vpop.xlane.xlu0 %1358
    %v1360 = vsel %vm378, %v1356, 0.0
    %1361 = vadd.xlane.f32.xlu0 %v1360
    %v1362 = vpop.xlane.xlu0 %1361
    %v1363 = vmul.f32 %v1359, %v1105
    %v1364 = vmul.f32 %v1362, %v1105
    %v1365 = vadd.f32 %v1363, 1e-05
    %v1366 = vadd.f32 %v1364, 1e-05
    %v1367 = vrsqrt.pop %v1365
    %v1368 = vrsqrt.pop %v1366
    %v1369 = vmul.f32 %v1353, %v1367
    %v1370 = vmul.f32 %v1354, %v1368
    %v1372 = vlaneseq
    %v1373 = vshrl.u32 %v1372, 7
    %v1374 = vsub.s32 0, %v1373
    %v1375 = vrot.slane %v1343, %v1374
    %v1377 = vmul.f32 %v1369, %v1375
    %v1378 = vmul.f32 %v1370, %v1375
    %v1380 = vlaneseq
    %v1381 = vshrl.u32 %v1380, 7
    %v1382 = vsub.s32 0, %v1381
    %v1383 = vrot.slane %v1344, %v1382
    %v1385 = vadd.f32 %v1377, %v1383
    %v1386 = vadd.f32 %v1378, %v1383
    %v1387 = vpack.c.bf16 %v1386, %v1385
    %s1388 = scalar_lea.vmem %s4, 64
    %v1389 = vld [vmem:[%s1388] sm:$0xff]
    %v1390 = vld [vmem:[%s1388 + $0x8] sm:$0xff]
    %v1391 = vld [vmem:[%s1388 + $0x10] sm:$0xff]
    %v1392 = vld [vmem:[%s1388 + $0x18] sm:$0xff]
    %v1393 = vld [vmem:[%s1388 + $0x20] sm:$0xff]
    %v1394 = vld [vmem:[%s1388 + $0x28] sm:$0xff]
    %v1395 = vld [vmem:[%s1388 + $0x30] sm:$0xff]
    %v1396 = vld [vmem:[%s1388 + $0x38] sm:$0xff]
    %s1397 = scalar_lea.vmem %s5, 2
    %v1398 = vld [vmem:[%s1397] sm:$0x3]
    %v1400 = vlaneseq
    %v1401 = vshrl.u32 %v1400, 7
    %v1402 = vsub.s32 0, %v1401
    %v1403 = vrot.slane %v1398, %v1402
    %v1404 = vlaneseq
    %v1405 = vshrl.u32 %v1404, 7
    %v1406 = vsub.s32 1, %v1405
    %v1407 = vrot.slane %v1398, %v1406
    %v1418 = vunpack.c.l.b16 %v1389
    %v1419 = vunpack.c.h.b16 %v1389
    %v1420 = vunpack.c.l.b16 %v1390
    %v1421 = vunpack.c.h.b16 %v1390
    %v1422 = vunpack.c.l.b16 %v1391
    %v1423 = vunpack.c.h.b16 %v1391
    %v1424 = vunpack.c.l.b16 %v1392
    %v1425 = vunpack.c.h.b16 %v1392
    %v1426 = vunpack.c.l.b16 %v1393
    %v1427 = vunpack.c.h.b16 %v1393
    %v1428 = vunpack.c.l.b16 %v1394
    %v1429 = vunpack.c.h.b16 %v1394
    %v1430 = vunpack.c.l.b16 %v1395
    %v1431 = vunpack.c.h.b16 %v1395
    %v1432 = vunpack.c.l.b16 %v1396
    %v1433 = vunpack.c.h.b16 %v1396
    %v1434 = vpack.c.b16 %v1420, %v1418
    %v1435 = vpack.c.b16 %v1421, %v1419
    %v1436 = vpack.c.b16 %v1424, %v1422
    %v1437 = vpack.c.b16 %v1425, %v1423
    %v1438 = vpack.c.b16 %v1428, %v1426
    %v1439 = vpack.c.b16 %v1429, %v1427
    %v1440 = vpack.c.b16 %v1432, %v1430
    %v1441 = vpack.c.b16 %v1433, %v1431
    %v1451 = vsel %vm378, %v1387, 0
    %1453 = vmatprep.subr.bf16.mxu0 0
    %1454 = vmatpush1.bf16.msra.mxu0 0
    %1455 = vmatprep.subr.bf16.mxu0 0
    %1456 = vmatpush1.bf16.msra.mxu0 0
    %1457 = vmatprep.subr.bf16.mxu0 0
    %1458 = vmatpush1.bf16.msra.mxu0 0
    %1459 = vmatprep.subr.bf16.mxu0 0
    %1460 = vmatpush1.bf16.msra.mxu0 0
    %1461 = vmatprep.subr.bf16.mxu0 %v1441
    %1462 = vmatpush1.bf16.msra.mxu0 %v1440
    %1463 = vmatprep.subr.bf16.mxu0 %v1439
    %1464 = vmatpush1.bf16.msra.mxu0 %v1438
    %1465 = vmatprep.subr.bf16.mxu0 %v1437
    %1466 = vmatpush1.bf16.msra.mxu0 %v1436
    %1467 = vmatprep.subr.bf16.mxu0 %v1435
    %1468 = vmatpush1.bf16.msra.mxu0 %v1434
    %1469 = vmatprep.subr.bf16.mxu0 0
    %1470 = vmatpush2.bf16.msra.mxu0 0
    %1471 = vmatprep.subr.bf16.mxu0 0
    %1472 = vmatpush2.bf16.msra.mxu0 0
    %1473 = vmatprep.subr.bf16.mxu0 0
    %1474 = vmatpush2.bf16.msra.mxu0 0
    %1475 = vmatprep.subr.bf16.mxu0 0
    %1476 = vmatpush2.bf16.msra.mxu0 0
    %1477 = vmatprep.subr.bf16.mxu0 0
    %1478 = vmatpush2.bf16.msra.mxu0 0
    %1479 = vmatprep.subr.bf16.mxu0 0
    %1480 = vmatpush2.bf16.msra.mxu0 0
    %1481 = vmatprep.subr.bf16.mxu0 0
    %1482 = vmatpush2.bf16.msra.mxu0 0
    %1483 = vmatprep.subr.bf16.mxu0 0
    %1484 = vmatpush2.bf16.msra.mxu0 0
    %1485 = vmatprep.mubr.bf16.mxu0 0
    %1486 = vmatmul.mubr.bf16.gmra.mxu0 %v1451
    %v1487 = vpop.f32.mrf.mxu0
    %v1488 = vadd.f32 %v1403, %v1487
    %v1489 = vpop.f32.mrf.mxu0
    %v1490 = vadd.f32 %v1407, %v1489
    %v1491 = vpop.f32.mrf.mxu0
    %v1492 = vadd.f32 %v1403, %v1491
    %v1493 = vpop.f32.mrf.mxu0
    %v1494 = vadd.f32 %v1407, %v1493
    %1495 = vdwg.mxu0
    %v1496 = vmul.f32 %v1488, 0.25
    %v1497 = vmul.f32 %v1492, 0.25
    %1500 = vrot.lane.b32.xlu0 %v1496, 112
    %v1501 = vpop.permute.xlu0 %1500
    %1502 = vrot.lane.b32.xlu0 %v1497, 112
    %v1503 = vpop.permute.xlu0 %1502
    %1506 = vrot.lane.b32.xlu0 %v1496, 96
    %v1507 = vpop.permute.xlu0 %1506
    %1508 = vrot.lane.b32.xlu0 %v1497, 96
    %v1509 = vpop.permute.xlu0 %1508
    %1512 = vrot.lane.b32.xlu0 %v1496, 80
    %v1513 = vpop.permute.xlu0 %1512
    %1514 = vrot.lane.b32.xlu0 %v1497, 80
    %v1515 = vpop.permute.xlu0 %1514
    %v1518 = vpack.c.bf16 %v1497, %v1496
    %v1519 = vpack.c.bf16 %v1503, %v1501
    %v1520 = vpack.c.bf16 %v1509, %v1507
    %v1521 = vpack.c.bf16 %v1515, %v1513
    %1524 = vrot.lane.b32.xlu0 %v1488, 112
    %v1525 = vpop.permute.xlu0 %1524
    %1526 = vrot.lane.b32.xlu0 %v1492, 112
    %v1527 = vpop.permute.xlu0 %1526
    %1530 = vrot.lane.b32.xlu0 %v1488, 96
    %v1531 = vpop.permute.xlu0 %1530
    %1532 = vrot.lane.b32.xlu0 %v1492, 96
    %v1533 = vpop.permute.xlu0 %1532
    %1536 = vrot.lane.b32.xlu0 %v1488, 80
    %v1537 = vpop.permute.xlu0 %1536
    %1538 = vrot.lane.b32.xlu0 %v1492, 80
    %v1539 = vpop.permute.xlu0 %1538
    %v1542 = vpack.c.bf16 %v1492, %v1488
    %v1543 = vpack.c.bf16 %v1527, %v1525
    %v1544 = vpack.c.bf16 %v1533, %v1531
    %v1545 = vpack.c.bf16 %v1539, %v1537
    %1548 = vrot.lane.b32.xlu0 %v1490, 112
    %v1549 = vpop.permute.xlu0 %1548
    %1550 = vrot.lane.b32.xlu0 %v1494, 112
    %v1551 = vpop.permute.xlu0 %1550
    %1554 = vrot.lane.b32.xlu0 %v1490, 96
    %v1555 = vpop.permute.xlu0 %1554
    %1556 = vrot.lane.b32.xlu0 %v1494, 96
    %v1557 = vpop.permute.xlu0 %1556
    %1560 = vrot.lane.b32.xlu0 %v1490, 80
    %v1561 = vpop.permute.xlu0 %1560
    %1562 = vrot.lane.b32.xlu0 %v1494, 80
    %v1563 = vpop.permute.xlu0 %1562
    %v1566 = vpack.c.bf16 %v1494, %v1490
    %v1567 = vpack.c.bf16 %v1551, %v1549
    %v1568 = vpack.c.bf16 %v1557, %v1555
    %v1569 = vpack.c.bf16 %v1563, %v1561
    %1571 = vrot.lane.b32.xlu0 %v1542, 64
    %v1572 = vpop.permute.xlu0 %1571
    %v1574 = vsel %vm226, %v1518, 0
    %v1577 = vsel %vm226, %v1572, 0
    %1579 = vmatprep.subr.bf16.mxu0 0
    %1580 = vmatpush1.bf16.xpose.msra.mxu0 0
    %1581 = vmatprep.subr.bf16.mxu0 0
    %1582 = vmatpush1.bf16.xpose.msra.mxu0 0
    %1583 = vmatprep.subr.bf16.mxu0 0
    %1584 = vmatpush1.bf16.xpose.msra.mxu0 0
    %1585 = vmatprep.subr.bf16.mxu0 0
    %1586 = vmatpush1.bf16.xpose.msra.mxu0 0
    %1587 = vmatprep.subr.bf16.mxu0 0
    %1588 = vmatpush1.bf16.xpose.msra.mxu0 0
    %1589 = vmatprep.subr.bf16.mxu0 0
    %1590 = vmatpush1.bf16.xpose.msra.mxu0 0
    %1591 = vmatprep.subr.bf16.mxu0 0
    %1592 = vmatpush1.bf16.xpose.msra.mxu0 0
    %1593 = vmatprep.subr.bf16.mxu0 0
    %1594 = vmatpush1.bf16.xpose.msra.mxu0 %v1577
    %1595 = vmatprep.subr.bf16.mxu0 0
    %1596 = vmatpush2.bf16.xpose.msra.mxu0 0
    %1597 = vmatprep.subr.bf16.mxu0 0
    %1598 = vmatpush2.bf16.xpose.msra.mxu0 0
    %1599 = vmatprep.subr.bf16.mxu0 0
    %1600 = vmatpush2.bf16.xpose.msra.mxu0 0
    %1601 = vmatprep.subr.bf16.mxu0 0
    %1602 = vmatpush2.bf16.xpose.msra.mxu0 0
    %1603 = vmatprep.subr.bf16.mxu0 0
    %1604 = vmatpush2.bf16.xpose.msra.mxu0 0
    %1605 = vmatprep.subr.bf16.mxu0 0
    %1606 = vmatpush2.bf16.xpose.msra.mxu0 0
    %1607 = vmatprep.subr.bf16.mxu0 0
    %1608 = vmatpush2.bf16.xpose.msra.mxu0 0
    %1609 = vmatprep.subr.bf16.mxu0 0
    %1610 = vmatpush2.bf16.xpose.msra.mxu0 0
    %1611 = vmatprep.mubr.bf16.mxu0 0
    %1612 = vmatmul.mubr.bf16.gmra.mxu0 %v1574
    %v1613 = vpop.f32.mrf.mxu0
    %v1614 = vadd.f32 0.0, %v1613
    %v1615 = vpop.f32.mrf.mxu0
    %v1616 = vpop.f32.mrf.mxu0
    %v1617 = vadd.f32 0.0, %v1616
    %v1618 = vpop.f32.mrf.mxu0
    %1619 = vdwg.mxu0
    %1621 = vrot.lane.b32.xlu0 %v1543, 64
    %v1622 = vpop.permute.xlu0 %1621
    %v1624 = vsel %vm226, %v1519, 0
    %v1627 = vsel %vm226, %v1622, 0
    %1629 = vmatprep.subr.bf16.mxu0 0
    %1630 = vmatpush1.bf16.xpose.msra.mxu0 0
    %1631 = vmatprep.subr.bf16.mxu0 0
    %1632 = vmatpush1.bf16.xpose.msra.mxu0 0
    %1633 = vmatprep.subr.bf16.mxu0 0
    %1634 = vmatpush1.bf16.xpose.msra.mxu0 0
    %1635 = vmatprep.subr.bf16.mxu0 0
    %1636 = vmatpush1.bf16.xpose.msra.mxu0 0
    %1637 = vmatprep.subr.bf16.mxu0 0
    %1638 = vmatpush1.bf16.xpose.msra.mxu0 0
    %1639 = vmatprep.subr.bf16.mxu0 0
    %1640 = vmatpush1.bf16.xpose.msra.mxu0 0
    %1641 = vmatprep.subr.bf16.mxu0 0
    %1642 = vmatpush1.bf16.xpose.msra.mxu0 0
    %1643 = vmatprep.subr.bf16.mxu0 0
    %1644 = vmatpush1.bf16.xpose.msra.mxu0 %v1627
    %1645 = vmatprep.subr.bf16.mxu0 0
    %1646 = vmatpush2.bf16.xpose.msra.mxu0 0
    %1647 = vmatprep.subr.bf16.mxu0 0
    %1648 = vmatpush2.bf16.xpose.msra.mxu0 0
    %1649 = vmatprep.subr.bf16.mxu0 0
    %1650 = vmatpush2.bf16.xpose.msra.mxu0 0
    %1651 = vmatprep.subr.bf16.mxu0 0
    %1652 = vmatpush2.bf16.xpose.msra.mxu0 0
    %1653 = vmatprep.subr.bf16.mxu0 0
    %1654 = vmatpush2.bf16.xpose.msra.mxu0 0
    %1655 = vmatprep.subr.bf16.mxu0 0
    %1656 = vmatpush2.bf16.xpose.msra.mxu0 0
    %1657 = vmatprep.subr.bf16.mxu0 0
    %1658 = vmatpush2.bf16.xpose.msra.mxu0 0
    %1659 = vmatprep.subr.bf16.mxu0 0
    %1660 = vmatpush2.bf16.xpose.msra.mxu0 0
    %1661 = vmatprep.mubr.bf16.mxu0 0
    %1662 = vmatmul.mubr.bf16.gmra.mxu0 %v1624
    %v1663 = vpop.f32.mrf.mxu0
    %v1664 = vadd.f32 0.0, %v1663
    %v1665 = vpop.f32.mrf.mxu0
    %v1666 = vpop.f32.mrf.mxu0
    %v1667 = vadd.f32 0.0, %v1666
    %v1668 = vpop.f32.mrf.mxu0
    %1669 = vdwg.mxu0
    %1671 = vrot.lane.b32.xlu0 %v1544, 64
    %v1672 = vpop.permute.xlu0 %1671
    %v1674 = vsel %vm226, %v1520, 0
    %v1677 = vsel %vm226, %v1672, 0
    %1679 = vmatprep.subr.bf16.mxu0 0
    %1680 = vmatpush1.bf16.xpose.msra.mxu0 0
    %1681 = vmatprep.subr.bf16.mxu0 0
    %1682 = vmatpush1.bf16.xpose.msra.mxu0 0
    %1683 = vmatprep.subr.bf16.mxu0 0
    %1684 = vmatpush1.bf16.xpose.msra.mxu0 0
    %1685 = vmatprep.subr.bf16.mxu0 0
    %1686 = vmatpush1.bf16.xpose.msra.mxu0 0
    %1687 = vmatprep.subr.bf16.mxu0 0
    %1688 = vmatpush1.bf16.xpose.msra.mxu0 0
    %1689 = vmatprep.subr.bf16.mxu0 0
    %1690 = vmatpush1.bf16.xpose.msra.mxu0 0
    %1691 = vmatprep.subr.bf16.mxu0 0
    %1692 = vmatpush1.bf16.xpose.msra.mxu0 0
    %1693 = vmatprep.subr.bf16.mxu0 0
    %1694 = vmatpush1.bf16.xpose.msra.mxu0 %v1677
    %1695 = vmatprep.subr.bf16.mxu0 0
    %1696 = vmatpush2.bf16.xpose.msra.mxu0 0
    %1697 = vmatprep.subr.bf16.mxu0 0
    %1698 = vmatpush2.bf16.xpose.msra.mxu0 0
    %1699 = vmatprep.subr.bf16.mxu0 0
    %1700 = vmatpush2.bf16.xpose.msra.mxu0 0
    %1701 = vmatprep.subr.bf16.mxu0 0
    %1702 = vmatpush2.bf16.xpose.msra.mxu0 0
    %1703 = vmatprep.subr.bf16.mxu0 0
    %1704 = vmatpush2.bf16.xpose.msra.mxu0 0
    %1705 = vmatprep.subr.bf16.mxu0 0
    %1706 = vmatpush2.bf16.xpose.msra.mxu0 0
    %1707 = vmatprep.subr.bf16.mxu0 0
    %1708 = vmatpush2.bf16.xpose.msra.mxu0 0
    %1709 = vmatprep.subr.bf16.mxu0 0
    %1710 = vmatpush2.bf16.xpose.msra.mxu0 0
    %1711 = vmatprep.mubr.bf16.mxu0 0
    %1712 = vmatmul.mubr.bf16.gmra.mxu0 %v1674
    %v1713 = vpop.f32.mrf.mxu0
    %v1714 = vadd.f32 0.0, %v1713
    %v1715 = vpop.f32.mrf.mxu0
    %v1716 = vpop.f32.mrf.mxu0
    %v1717 = vadd.f32 0.0, %v1716
    %v1718 = vpop.f32.mrf.mxu0
    %1719 = vdwg.mxu0
    %1721 = vrot.lane.b32.xlu0 %v1545, 64
    %v1722 = vpop.permute.xlu0 %1721
    %v1724 = vsel %vm226, %v1521, 0
    %v1727 = vsel %vm226, %v1722, 0
    %1729 = vmatprep.subr.bf16.mxu0 0
    %1730 = vmatpush1.bf16.xpose.msra.mxu0 0
    %1731 = vmatprep.subr.bf16.mxu0 0
    %1732 = vmatpush1.bf16.xpose.msra.mxu0 0
    %1733 = vmatprep.subr.bf16.mxu0 0
    %1734 = vmatpush1.bf16.xpose.msra.mxu0 0
    %1735 = vmatprep.subr.bf16.mxu0 0
    %1736 = vmatpush1.bf16.xpose.msra.mxu0 0
    %1737 = vmatprep.subr.bf16.mxu0 0
    %1738 = vmatpush1.bf16.xpose.msra.mxu0 0
    %1739 = vmatprep.subr.bf16.mxu0 0
    %1740 = vmatpush1.bf16.xpose.msra.mxu0 0
    %1741 = vmatprep.subr.bf16.mxu0 0
    %1742 = vmatpush1.bf16.xpose.msra.mxu0 0
    %1743 = vmatprep.subr.bf16.mxu0 0
    %1744 = vmatpush1.bf16.xpose.msra.mxu0 %v1727
    %1745 = vmatprep.subr.bf16.mxu0 0
    %1746 = vmatpush2.bf16.xpose.msra.mxu0 0
    %1747 = vmatprep.subr.bf16.mxu0 0
    %1748 = vmatpush2.bf16.xpose.msra.mxu0 0
    %1749 = vmatprep.subr.bf16.mxu0 0
    %1750 = vmatpush2.bf16.xpose.msra.mxu0 0
    %1751 = vmatprep.subr.bf16.mxu0 0
    %1752 = vmatpush2.bf16.xpose.msra.mxu0 0
    %1753 = vmatprep.subr.bf16.mxu0 0
    %1754 = vmatpush2.bf16.xpose.msra.mxu0 0
    %1755 = vmatprep.subr.bf16.mxu0 0
    %1756 = vmatpush2.bf16.xpose.msra.mxu0 0
    %1757 = vmatprep.subr.bf16.mxu0 0
    %1758 = vmatpush2.bf16.xpose.msra.mxu0 0
    %1759 = vmatprep.subr.bf16.mxu0 0
    %1760 = vmatpush2.bf16.xpose.msra.mxu0 0
    %1761 = vmatprep.mubr.bf16.mxu0 0
    %1762 = vmatmul.mubr.bf16.gmra.mxu0 %v1724
    %v1763 = vpop.f32.mrf.mxu0
    %v1764 = vadd.f32 0.0, %v1763
    %v1765 = vpop.f32.mrf.mxu0
    %v1766 = vpop.f32.mrf.mxu0
    %v1767 = vadd.f32 0.0, %v1766
    %v1768 = vpop.f32.mrf.mxu0
    %1769 = vdwg.mxu0
    %v1770 = vsel %vm701, %v1614, -1e+30
    %v1771 = vsel %vm702, %v1617, -1e+30
    %v1772 = vsel %vm701, %v1664, -1e+30
    %v1773 = vsel %vm702, %v1667, -1e+30
    %v1774 = vsel %vm701, %v1714, -1e+30
    %v1775 = vsel %vm702, %v1717, -1e+30
    %v1776 = vsel %vm701, %v1764, -1e+30
    %v1777 = vsel %vm702, %v1767, -1e+30
    %v1778 = vsel %vm226, %v1770, -inf
    %1779 = vmax.xlane.f32.xlu0 %v1778
    %v1780 = vpop.xlane.xlu0 %1779
    %v1781 = vsel %vm226, %v1771, -inf
    %1782 = vmax.xlane.f32.xlu0 %v1781
    %v1783 = vpop.xlane.xlu0 %1782
    %v1784 = vsel %vm226, %v1772, -inf
    %1785 = vmax.xlane.f32.xlu0 %v1784
    %v1786 = vpop.xlane.xlu0 %1785
    %v1787 = vsel %vm226, %v1773, -inf
    %1788 = vmax.xlane.f32.xlu0 %v1787
    %v1789 = vpop.xlane.xlu0 %1788
    %v1790 = vsel %vm226, %v1774, -inf
    %1791 = vmax.xlane.f32.xlu0 %v1790
    %v1792 = vpop.xlane.xlu0 %1791
    %v1793 = vsel %vm226, %v1775, -inf
    %1794 = vmax.xlane.f32.xlu0 %v1793
    %v1795 = vpop.xlane.xlu0 %1794
    %v1796 = vsel %vm226, %v1776, -inf
    %1797 = vmax.xlane.f32.xlu0 %v1796
    %v1798 = vpop.xlane.xlu0 %1797
    %v1799 = vsel %vm226, %v1777, -inf
    %1800 = vmax.xlane.f32.xlu0 %v1799
    %v1801 = vpop.xlane.xlu0 %1800
    %v1802 = vsub.f32 %v1770, %v1780
    %v1803 = vsub.f32 %v1771, %v1783
    %v1804 = vsub.f32 %v1772, %v1786
    %v1805 = vsub.f32 %v1773, %v1789
    %v1806 = vsub.f32 %v1774, %v1792
    %v1807 = vsub.f32 %v1775, %v1795
    %v1808 = vsub.f32 %v1776, %v1798
    %v1809 = vsub.f32 %v1777, %v1801
    %v1810 = vmul.f32 %v1802, 1.442695
    %v1811 = vpow.pop %v1810
    %v1812 = vmul.f32 %v1803, 1.442695
    %v1813 = vpow.pop %v1812
    %v1814 = vmul.f32 %v1804, 1.442695
    %v1815 = vpow.pop %v1814
    %v1816 = vmul.f32 %v1805, 1.442695
    %v1817 = vpow.pop %v1816
    %v1818 = vmul.f32 %v1806, 1.442695
    %v1819 = vpow.pop %v1818
    %v1820 = vmul.f32 %v1807, 1.442695
    %v1821 = vpow.pop %v1820
    %v1822 = vmul.f32 %v1808, 1.442695
    %v1823 = vpow.pop %v1822
    %v1824 = vmul.f32 %v1809, 1.442695
    %v1825 = vpow.pop %v1824
    %v1826 = vsel %vm226, %v1811, 0.0
    %1827 = vadd.xlane.f32.xlu0 %v1826
    %v1828 = vpop.xlane.xlu0 %1827
    %v1829 = vsel %vm226, %v1813, 0.0
    %1830 = vadd.xlane.f32.xlu0 %v1829
    %v1831 = vpop.xlane.xlu0 %1830
    %v1832 = vsel %vm226, %v1815, 0.0
    %1833 = vadd.xlane.f32.xlu0 %v1832
    %v1834 = vpop.xlane.xlu0 %1833
    %v1835 = vsel %vm226, %v1817, 0.0
    %1836 = vadd.xlane.f32.xlu0 %v1835
    %v1837 = vpop.xlane.xlu0 %1836
    %v1838 = vsel %vm226, %v1819, 0.0
    %1839 = vadd.xlane.f32.xlu0 %v1838
    %v1840 = vpop.xlane.xlu0 %1839
    %v1841 = vsel %vm226, %v1821, 0.0
    %1842 = vadd.xlane.f32.xlu0 %v1841
    %v1843 = vpop.xlane.xlu0 %1842
    %v1844 = vsel %vm226, %v1823, 0.0
    %1845 = vadd.xlane.f32.xlu0 %v1844
    %v1846 = vpop.xlane.xlu0 %1845
    %v1847 = vsel %vm226, %v1825, 0.0
    %1848 = vadd.xlane.f32.xlu0 %v1847
    %v1849 = vpop.xlane.xlu0 %1848
    %v1850 = vrcp.pop %v1828
    %v1851 = vrcp.pop %v1831
    %v1852 = vrcp.pop %v1834
    %v1853 = vrcp.pop %v1837
    %v1854 = vrcp.pop %v1840
    %v1855 = vrcp.pop %v1843
    %v1856 = vrcp.pop %v1846
    %v1857 = vrcp.pop %v1849
    %v1858 = vmul.f32 %v1811, %v1850
    %v1859 = vmul.f32 %v1813, %v1851
    %v1860 = vmul.f32 %v1815, %v1852
    %v1861 = vmul.f32 %v1817, %v1853
    %v1862 = vmul.f32 %v1819, %v1854
    %v1863 = vmul.f32 %v1821, %v1855
    %v1864 = vmul.f32 %v1823, %v1856
    %v1865 = vmul.f32 %v1825, %v1857
    %v1866 = vpack.c.bf16 %v1859, %v1858
    %v1867 = vpack.c.bf16 %v1861, %v1860
    %v1868 = vpack.c.bf16 %v1863, %v1862
    %v1869 = vpack.c.bf16 %v1865, %v1864
    %v1871 = vsel %vm226, %v1866, 0
    %1873 = vmatprep.subr.bf16.mxu0 0
    %1874 = vmatpush1.bf16.msra.mxu0 0
    %1875 = vmatprep.subr.bf16.mxu0 0
    %1876 = vmatpush1.bf16.msra.mxu0 0
    %1877 = vmatprep.subr.bf16.mxu0 0
    %1878 = vmatpush1.bf16.msra.mxu0 0
    %1879 = vmatprep.subr.bf16.mxu0 0
    %1880 = vmatpush1.bf16.msra.mxu0 0
    %1881 = vmatprep.subr.bf16.mxu0 0
    %1882 = vmatpush1.bf16.msra.mxu0 0
    %1883 = vmatprep.subr.bf16.mxu0 0
    %1884 = vmatpush1.bf16.msra.mxu0 0
    %1885 = vmatprep.subr.bf16.mxu0 0
    %1886 = vmatpush1.bf16.msra.mxu0 0
    %1887 = vmatprep.subr.bf16.mxu0 0
    %1888 = vmatpush1.bf16.msra.mxu0 %v1566
    %1889 = vmatprep.subr.bf16.mxu0 0
    %1890 = vmatpush2.bf16.msra.mxu0 0
    %1891 = vmatprep.subr.bf16.mxu0 0
    %1892 = vmatpush2.bf16.msra.mxu0 0
    %1893 = vmatprep.subr.bf16.mxu0 0
    %1894 = vmatpush2.bf16.msra.mxu0 0
    %1895 = vmatprep.subr.bf16.mxu0 0
    %1896 = vmatpush2.bf16.msra.mxu0 0
    %1897 = vmatprep.subr.bf16.mxu0 0
    %1898 = vmatpush2.bf16.msra.mxu0 0
    %1899 = vmatprep.subr.bf16.mxu0 0
    %1900 = vmatpush2.bf16.msra.mxu0 0
    %1901 = vmatprep.subr.bf16.mxu0 0
    %1902 = vmatpush2.bf16.msra.mxu0 0
    %1903 = vmatprep.subr.bf16.mxu0 0
    %1904 = vmatpush2.bf16.msra.mxu0 0
    %1905 = vmatprep.mubr.bf16.mxu0 0
    %1906 = vmatmul.mubr.bf16.gmra.mxu0 %v1871
    %v1907 = vpop.f32.mrf.mxu0
    %v1908 = vadd.f32 0.0, %v1907
    %v1909 = vpop.f32.mrf.mxu0
    %v1910 = vpop.f32.mrf.mxu0
    %v1911 = vadd.f32 0.0, %v1910
    %v1912 = vpop.f32.mrf.mxu0
    %1913 = vdwg.mxu0
    %v1915 = vsel %vm226, %v1867, 0
    %1917 = vmatprep.subr.bf16.mxu0 0
    %1918 = vmatpush1.bf16.msra.mxu0 0
    %1919 = vmatprep.subr.bf16.mxu0 0
    %1920 = vmatpush1.bf16.msra.mxu0 0
    %1921 = vmatprep.subr.bf16.mxu0 0
    %1922 = vmatpush1.bf16.msra.mxu0 0
    %1923 = vmatprep.subr.bf16.mxu0 0
    %1924 = vmatpush1.bf16.msra.mxu0 0
    %1925 = vmatprep.subr.bf16.mxu0 0
    %1926 = vmatpush1.bf16.msra.mxu0 0
    %1927 = vmatprep.subr.bf16.mxu0 0
    %1928 = vmatpush1.bf16.msra.mxu0 0
    %1929 = vmatprep.subr.bf16.mxu0 0
    %1930 = vmatpush1.bf16.msra.mxu0 0
    %1931 = vmatprep.subr.bf16.mxu0 0
    %1932 = vmatpush1.bf16.msra.mxu0 %v1567
    %1933 = vmatprep.subr.bf16.mxu0 0
    %1934 = vmatpush2.bf16.msra.mxu0 0
    %1935 = vmatprep.subr.bf16.mxu0 0
    %1936 = vmatpush2.bf16.msra.mxu0 0
    %1937 = vmatprep.subr.bf16.mxu0 0
    %1938 = vmatpush2.bf16.msra.mxu0 0
    %1939 = vmatprep.subr.bf16.mxu0 0
    %1940 = vmatpush2.bf16.msra.mxu0 0
    %1941 = vmatprep.subr.bf16.mxu0 0
    %1942 = vmatpush2.bf16.msra.mxu0 0
    %1943 = vmatprep.subr.bf16.mxu0 0
    %1944 = vmatpush2.bf16.msra.mxu0 0
    %1945 = vmatprep.subr.bf16.mxu0 0
    %1946 = vmatpush2.bf16.msra.mxu0 0
    %1947 = vmatprep.subr.bf16.mxu0 0
    %1948 = vmatpush2.bf16.msra.mxu0 0
    %1949 = vmatprep.mubr.bf16.mxu0 0
    %1950 = vmatmul.mubr.bf16.gmra.mxu0 %v1915
    %v1951 = vpop.f32.mrf.mxu0
    %v1952 = vadd.f32 0.0, %v1951
    %v1953 = vpop.f32.mrf.mxu0
    %v1954 = vpop.f32.mrf.mxu0
    %v1955 = vadd.f32 0.0, %v1954
    %v1956 = vpop.f32.mrf.mxu0
    %1957 = vdwg.mxu0
    %v1959 = vsel %vm226, %v1868, 0
    %1961 = vmatprep.subr.bf16.mxu0 0
    %1962 = vmatpush1.bf16.msra.mxu0 0
    %1963 = vmatprep.subr.bf16.mxu0 0
    %1964 = vmatpush1.bf16.msra.mxu0 0
    %1965 = vmatprep.subr.bf16.mxu0 0
    %1966 = vmatpush1.bf16.msra.mxu0 0
    %1967 = vmatprep.subr.bf16.mxu0 0
    %1968 = vmatpush1.bf16.msra.mxu0 0
    %1969 = vmatprep.subr.bf16.mxu0 0
    %1970 = vmatpush1.bf16.msra.mxu0 0
    %1971 = vmatprep.subr.bf16.mxu0 0
    %1972 = vmatpush1.bf16.msra.mxu0 0
    %1973 = vmatprep.subr.bf16.mxu0 0
    %1974 = vmatpush1.bf16.msra.mxu0 0
    %1975 = vmatprep.subr.bf16.mxu0 0
    %1976 = vmatpush1.bf16.msra.mxu0 %v1568
    %1977 = vmatprep.subr.bf16.mxu0 0
    %1978 = vmatpush2.bf16.msra.mxu0 0
    %1979 = vmatprep.subr.bf16.mxu0 0
    %1980 = vmatpush2.bf16.msra.mxu0 0
    %1981 = vmatprep.subr.bf16.mxu0 0
    %1982 = vmatpush2.bf16.msra.mxu0 0
    %1983 = vmatprep.subr.bf16.mxu0 0
    %1984 = vmatpush2.bf16.msra.mxu0 0
    %1985 = vmatprep.subr.bf16.mxu0 0
    %1986 = vmatpush2.bf16.msra.mxu0 0
    %1987 = vmatprep.subr.bf16.mxu0 0
    %1988 = vmatpush2.bf16.msra.mxu0 0
    %1989 = vmatprep.subr.bf16.mxu0 0
    %1990 = vmatpush2.bf16.msra.mxu0 0
    %1991 = vmatprep.subr.bf16.mxu0 0
    %1992 = vmatpush2.bf16.msra.mxu0 0
    %1993 = vmatprep.mubr.bf16.mxu0 0
    %1994 = vmatmul.mubr.bf16.gmra.mxu0 %v1959
    %v1995 = vpop.f32.mrf.mxu0
    %v1996 = vadd.f32 0.0, %v1995
    %v1997 = vpop.f32.mrf.mxu0
    %v1998 = vpop.f32.mrf.mxu0
    %v1999 = vadd.f32 0.0, %v1998
    %v2000 = vpop.f32.mrf.mxu0
    %2001 = vdwg.mxu0
    %v2003 = vsel %vm226, %v1869, 0
    %2005 = vmatprep.subr.bf16.mxu0 0
    %2006 = vmatpush1.bf16.msra.mxu0 0
    %2007 = vmatprep.subr.bf16.mxu0 0
    %2008 = vmatpush1.bf16.msra.mxu0 0
    %2009 = vmatprep.subr.bf16.mxu0 0
    %2010 = vmatpush1.bf16.msra.mxu0 0
    %2011 = vmatprep.subr.bf16.mxu0 0
    %2012 = vmatpush1.bf16.msra.mxu0 0
    %2013 = vmatprep.subr.bf16.mxu0 0
    %2014 = vmatpush1.bf16.msra.mxu0 0
    %2015 = vmatprep.subr.bf16.mxu0 0
    %2016 = vmatpush1.bf16.msra.mxu0 0
    %2017 = vmatprep.subr.bf16.mxu0 0
    %2018 = vmatpush1.bf16.msra.mxu0 0
    %2019 = vmatprep.subr.bf16.mxu0 0
    %2020 = vmatpush1.bf16.msra.mxu0 %v1569
    %2021 = vmatprep.subr.bf16.mxu0 0
    %2022 = vmatpush2.bf16.msra.mxu0 0
    %2023 = vmatprep.subr.bf16.mxu0 0
    %2024 = vmatpush2.bf16.msra.mxu0 0
    %2025 = vmatprep.subr.bf16.mxu0 0
    %2026 = vmatpush2.bf16.msra.mxu0 0
    %2027 = vmatprep.subr.bf16.mxu0 0
    %2028 = vmatpush2.bf16.msra.mxu0 0
    %2029 = vmatprep.subr.bf16.mxu0 0
    %2030 = vmatpush2.bf16.msra.mxu0 0
    %2031 = vmatprep.subr.bf16.mxu0 0
    %2032 = vmatpush2.bf16.msra.mxu0 0
    %2033 = vmatprep.subr.bf16.mxu0 0
    %2034 = vmatpush2.bf16.msra.mxu0 0
    %2035 = vmatprep.subr.bf16.mxu0 0
    %2036 = vmatpush2.bf16.msra.mxu0 0
    %2037 = vmatprep.mubr.bf16.mxu0 0
    %2038 = vmatmul.mubr.bf16.gmra.mxu0 %v2003
    %v2039 = vpop.f32.mrf.mxu0
    %v2040 = vadd.f32 0.0, %v2039
    %v2041 = vpop.f32.mrf.mxu0
    %v2042 = vpop.f32.mrf.mxu0
    %v2043 = vadd.f32 0.0, %v2042
    %v2044 = vpop.f32.mrf.mxu0
    %2045 = vdwg.mxu0
    %2048 = vrot.lane.b32.xlu0 %v1952, 16
    %v2049 = vpop.permute.xlu0 %2048
    %2050 = vrot.lane.b32.xlu0 %v1955, 16
    %v2051 = vpop.permute.xlu0 %2050
    %2056 = vrot.lane.b32.xlu0 %v1996, 32
    %v2057 = vpop.permute.xlu0 %2056
    %2058 = vrot.lane.b32.xlu0 %v1999, 32
    %v2059 = vpop.permute.xlu0 %2058
    %2064 = vrot.lane.b32.xlu0 %v2040, 48
    %v2065 = vpop.permute.xlu0 %2064
    %2066 = vrot.lane.b32.xlu0 %v2043, 48
    %v2067 = vpop.permute.xlu0 %2066
    %v2070 = vsel %vm226, %v1908, %v2049
    %v2071 = vsel %vm226, %v1911, %v2051
    %v2072 = vsel %vm1005, %v2070, %v2057
    %v2073 = vsel %vm1005, %v2071, %v2059
    %v2074 = vsel %vm1008, %v2072, %v2065
    %v2075 = vsel %vm1008, %v2073, %v2067
    %v2076 = vpack.c.bf16 %v2075, %v2074
    %s2077 = scalar_lea.vmem %s6, 32
    %v2078 = vld [vmem:[%s2077] sm:$0xf]
    %v2079 = vld [vmem:[%s2077 + $0x4] sm:$0xf]
    %v2080 = vld [vmem:[%s2077 + $0x8] sm:$0xf]
    %v2081 = vld [vmem:[%s2077 + $0xc] sm:$0xf]
    %v2082 = vld [vmem:[%s2077 + $0x10] sm:$0xf]
    %v2083 = vld [vmem:[%s2077 + $0x14] sm:$0xf]
    %v2084 = vld [vmem:[%s2077 + $0x18] sm:$0xf]
    %v2085 = vld [vmem:[%s2077 + $0x1c] sm:$0xf]
    %s2086 = scalar_lea.vmem [#allocation5], 1
    %v2087 = vld [vmem:[%s2086] sm:$0x1]
    %v2089 = vlaneseq
    %v2090 = vshrl.u32 %v2089, 7
    %v2091 = vsub.s32 0, %v2090
    %v2092 = vrot.slane %v2087, %v2091
    %v2102 = vunpack.c.l.b16 %v2078
    %v2103 = vunpack.c.l.b16 %v2079
    %v2104 = vunpack.c.l.b16 %v2080
    %v2105 = vunpack.c.l.b16 %v2081
    %v2106 = vunpack.c.l.b16 %v2082
    %v2107 = vunpack.c.l.b16 %v2083
    %v2108 = vunpack.c.l.b16 %v2084
    %v2109 = vunpack.c.l.b16 %v2085
    %v2110 = vpack.c.b16 %v2103, %v2102
    %v2111 = vpack.c.b16 %v2105, %v2104
    %v2112 = vpack.c.b16 %v2107, %v2106
    %v2113 = vpack.c.b16 %v2109, %v2108
    %v2119 = vsel %vm378, %v2076, 0
    %2121 = vmatprep.subr.bf16.mxu0 0
    %2122 = vmatpush1.bf16.msra.mxu0 0
    %2123 = vmatprep.subr.bf16.mxu0 0
    %2124 = vmatpush1.bf16.msra.mxu0 0
    %2125 = vmatprep.subr.bf16.mxu0 0
    %2126 = vmatpush1.bf16.msra.mxu0 0
    %2127 = vmatprep.subr.bf16.mxu0 0
    %2128 = vmatpush1.bf16.msra.mxu0 0
    %2129 = vmatprep.subr.bf16.mxu0 0
    %2130 = vmatpush1.bf16.msra.mxu0 %v2113
    %2131 = vmatprep.subr.bf16.mxu0 0
    %2132 = vmatpush1.bf16.msra.mxu0 %v2112
    %2133 = vmatprep.subr.bf16.mxu0 0
    %2134 = vmatpush1.bf16.msra.mxu0 %v2111
    %2135 = vmatprep.subr.bf16.mxu0 0
    %2136 = vmatpush1.bf16.msra.mxu0 %v2110
    %2137 = vmatprep.subr.bf16.mxu0 0
    %2138 = vmatpush2.bf16.msra.mxu0 0
    %2139 = vmatprep.subr.bf16.mxu0 0
    %2140 = vmatpush2.bf16.msra.mxu0 0
    %2141 = vmatprep.subr.bf16.mxu0 0
    %2142 = vmatpush2.bf16.msra.mxu0 0
    %2143 = vmatprep.subr.bf16.mxu0 0
    %2144 = vmatpush2.bf16.msra.mxu0 0
    %2145 = vmatprep.subr.bf16.mxu0 0
    %2146 = vmatpush2.bf16.msra.mxu0 0
    %2147 = vmatprep.subr.bf16.mxu0 0
    %2148 = vmatpush2.bf16.msra.mxu0 0
    %2149 = vmatprep.subr.bf16.mxu0 0
    %2150 = vmatpush2.bf16.msra.mxu0 0
    %2151 = vmatprep.subr.bf16.mxu0 0
    %2152 = vmatpush2.bf16.msra.mxu0 0
    %2153 = vmatprep.mubr.bf16.mxu0 0
    %2154 = vmatmul.mubr.bf16.gmra.mxu0 %v2119
    %v2155 = vpop.f32.mrf.mxu0
    %v2156 = vadd.f32 %v2092, %v2155
    %v2157 = vpop.f32.mrf.mxu0
    %v2158 = vpop.f32.mrf.mxu0
    %v2159 = vadd.f32 %v2092, %v2158
    %v2160 = vpop.f32.mrf.mxu0
    %2161 = vdwg.mxu0
    %v2162 = vadd.f32 %v1385, %v2156
    %v2163 = vadd.f32 %v1386, %v2159
    %s2164 = scalar_lea.vmem [#allocation7], 1
    %v2165 = vld [vmem:[%s2164] sm:$0x1]
    %s2166 = scalar_lea.vmem [#allocation8], 1
    %v2167 = vld [vmem:[%s2166] sm:$0x1]
    %v2168 = vsel %vm378, %v2162, 0.0
    %2169 = vadd.xlane.f32.xlu0 %v2168
    %v2170 = vpop.xlane.xlu0 %2169
    %v2171 = vsel %vm378, %v2163, 0.0
    %2172 = vadd.xlane.f32.xlu0 %v2171
    %v2173 = vpop.xlane.xlu0 %2172
    %v2174 = vmul.f32 %v2170, %v1105
    %v2175 = vmul.f32 %v2173, %v1105
    %v2176 = vsub.f32 %v2162, %v2174
    %v2177 = vsub.f32 %v2163, %v2175
    %v2178 = vmul.f32 %v2176, %v2176
    %v2179 = vmul.f32 %v2177, %v2177
    %v2180 = vsel %vm378, %v2178, 0.0
    %2181 = vadd.xlane.f32.xlu0 %v2180
    %v2182 = vpop.xlane.xlu0 %2181
    %v2183 = vsel %vm378, %v2179, 0.0
    %2184 = vadd.xlane.f32.xlu0 %v2183
    %v2185 = vpop.xlane.xlu0 %2184
    %v2186 = vmul.f32 %v2182, %v1105
    %v2187 = vmul.f32 %v2185, %v1105
    %v2188 = vadd.f32 %v2186, 1e-05
    %v2189 = vadd.f32 %v2187, 1e-05
    %v2190 = vrsqrt.pop %v2188
    %v2191 = vrsqrt.pop %v2189
    %v2192 = vmul.f32 %v2176, %v2190
    %v2193 = vmul.f32 %v2177, %v2191
    %v2195 = vlaneseq
    %v2196 = vshrl.u32 %v2195, 7
    %v2197 = vsub.s32 0, %v2196
    %v2198 = vrot.slane %v2165, %v2197
    %v2200 = vmul.f32 %v2192, %v2198
    %v2201 = vmul.f32 %v2193, %v2198
    %v2203 = vlaneseq
    %v2204 = vshrl.u32 %v2203, 7
    %v2205 = vsub.s32 0, %v2204
    %v2206 = vrot.slane %v2167, %v2205
    %v2208 = vadd.f32 %v2200, %v2206
    %v2209 = vadd.f32 %v2201, %v2206
    %v2210 = vpack.c.bf16 %v2209, %v2208
    %s2211 = scalar_lea.vmem [#allocation10], 32
    %v2212 = vld [vmem:[%s2211] sm:$0xf]
    %v2213 = vld [vmem:[%s2211 + $0x4] sm:$0xf]
    %v2214 = vld [vmem:[%s2211 + $0x8] sm:$0xf]
    %v2215 = vld [vmem:[%s2211 + $0xc] sm:$0xf]
    %v2216 = vld [vmem:[%s2211 + $0x10] sm:$0xf]
    %v2217 = vld [vmem:[%s2211 + $0x14] sm:$0xf]
    %v2218 = vld [vmem:[%s2211 + $0x18] sm:$0xf]
    %v2219 = vld [vmem:[%s2211 + $0x1c] sm:$0xf]
    %s2220 = scalar_lea.vmem [#allocation11], 1
    %v2221 = vld [vmem:[%s2220] sm:$0x1]
    %v2223 = vlaneseq
    %v2224 = vshrl.u32 %v2223, 7
    %v2225 = vsub.s32 0, %v2224
    %v2226 = vrot.slane %v2221, %v2225
    %v2236 = vunpack.c.l.b16 %v2212
    %v2237 = vunpack.c.l.b16 %v2213
    %v2238 = vunpack.c.l.b16 %v2214
    %v2239 = vunpack.c.l.b16 %v2215
    %v2240 = vunpack.c.l.b16 %v2216
    %v2241 = vunpack.c.l.b16 %v2217
    %v2242 = vunpack.c.l.b16 %v2218
    %v2243 = vunpack.c.l.b16 %v2219
    %v2244 = vpack.c.b16 %v2237, %v2236
    %v2245 = vpack.c.b16 %v2239, %v2238
    %v2246 = vpack.c.b16 %v2241, %v2240
    %v2247 = vpack.c.b16 %v2243, %v2242
    %v2253 = vsel %vm378, %v2210, 0
    %2255 = vmatprep.subr.bf16.mxu0 0
    %2256 = vmatpush1.bf16.msra.mxu0 0
    %2257 = vmatprep.subr.bf16.mxu0 0
    %2258 = vmatpush1.bf16.msra.mxu0 0
    %2259 = vmatprep.subr.bf16.mxu0 0
    %2260 = vmatpush1.bf16.msra.mxu0 0
    %2261 = vmatprep.subr.bf16.mxu0 0
    %2262 = vmatpush1.bf16.msra.mxu0 0
    %2263 = vmatprep.subr.bf16.mxu0 0
    %2264 = vmatpush1.bf16.msra.mxu0 %v2247
    %2265 = vmatprep.subr.bf16.mxu0 0
    %2266 = vmatpush1.bf16.msra.mxu0 %v2246
    %2267 = vmatprep.subr.bf16.mxu0 0
    %2268 = vmatpush1.bf16.msra.mxu0 %v2245
    %2269 = vmatprep.subr.bf16.mxu0 0
    %2270 = vmatpush1.bf16.msra.mxu0 %v2244
    %2271 = vmatprep.subr.bf16.mxu0 0
    %2272 = vmatpush2.bf16.msra.mxu0 0
    %2273 = vmatprep.subr.bf16.mxu0 0
    %2274 = vmatpush2.bf16.msra.mxu0 0
    %2275 = vmatprep.subr.bf16.mxu0 0
    %2276 = vmatpush2.bf16.msra.mxu0 0
    %2277 = vmatprep.subr.bf16.mxu0 0
    %2278 = vmatpush2.bf16.msra.mxu0 0
    %2279 = vmatprep.subr.bf16.mxu0 0
    %2280 = vmatpush2.bf16.msra.mxu0 0
    %2281 = vmatprep.subr.bf16.mxu0 0
    %2282 = vmatpush2.bf16.msra.mxu0 0
    %2283 = vmatprep.subr.bf16.mxu0 0
    %2284 = vmatpush2.bf16.msra.mxu0 0
    %2285 = vmatprep.subr.bf16.mxu0 0
    %2286 = vmatpush2.bf16.msra.mxu0 0
    %2287 = vmatprep.mubr.bf16.mxu0 0
    %2288 = vmatmul.mubr.bf16.gmra.mxu0 %v2253
    %v2289 = vpop.f32.mrf.mxu0
    %v2290 = vadd.f32 %v2226, %v2289
    %v2291 = vpop.f32.mrf.mxu0
    %v2292 = vpop.f32.mrf.mxu0
    %v2293 = vadd.f32 %v2226, %v2292
    %v2294 = vpop.f32.mrf.mxu0
    %2295 = vdwg.mxu0
    %v2296 = vmax.f32 %v2290, 0.0
    %v2297 = vmax.f32 %v2293, 0.0
    %v2298 = vpack.c.bf16 %v2297, %v2296
    %s2299 = scalar_lea.vmem %s12, 64
    %v2300 = vld [vmem:[%s2299] sm:$0xf]
    %v2301 = vld [vmem:[%s2299 + $0x4] sm:$0xf]
    %v2302 = vld [vmem:[%s2299 + $0x8] sm:$0xf]
    %v2303 = vld [vmem:[%s2299 + $0xc] sm:$0xf]
    %v2304 = vld [vmem:[%s2299 + $0x10] sm:$0xf]
    %v2305 = vld [vmem:[%s2299 + $0x14] sm:$0xf]
    %v2306 = vld [vmem:[%s2299 + $0x18] sm:$0xf]
    %v2307 = vld [vmem:[%s2299 + $0x1c] sm:$0xf]
    %v2308 = vld [vmem:[%s2299 + $0x20] sm:$0xf]
    %v2309 = vld [vmem:[%s2299 + $0x24] sm:$0xf]
    %v2310 = vld [vmem:[%s2299 + $0x28] sm:$0xf]
    %v2311 = vld [vmem:[%s2299 + $0x2c] sm:$0xf]
    %v2312 = vld [vmem:[%s2299 + $0x30] sm:$0xf]
    %v2313 = vld [vmem:[%s2299 + $0x34] sm:$0xf]
    %v2314 = vld [vmem:[%s2299 + $0x38] sm:$0xf]
    %v2315 = vld [vmem:[%s2299 + $0x3c] sm:$0xf]
    %s2316 = scalar_lea.vmem [#allocation13], 1
    %v2317 = vld [vmem:[%s2316] sm:$0x1]
    %v2319 = vlaneseq
    %v2320 = vshrl.u32 %v2319, 7
    %v2321 = vsub.s32 0, %v2320
    %v2322 = vrot.slane %v2317, %v2321
    %v2340 = vunpack.c.l.b16 %v2300
    %v2341 = vunpack.c.l.b16 %v2301
    %v2342 = vunpack.c.l.b16 %v2302
    %v2343 = vunpack.c.l.b16 %v2303
    %v2344 = vunpack.c.l.b16 %v2304
    %v2345 = vunpack.c.l.b16 %v2305
    %v2346 = vunpack.c.l.b16 %v2306
    %v2347 = vunpack.c.l.b16 %v2307
    %v2348 = vunpack.c.l.b16 %v2308
    %v2349 = vunpack.c.l.b16 %v2309
    %v2350 = vunpack.c.l.b16 %v2310
    %v2351 = vunpack.c.l.b16 %v2311
    %v2352 = vunpack.c.l.b16 %v2312
    %v2353 = vunpack.c.l.b16 %v2313
    %v2354 = vunpack.c.l.b16 %v2314
    %v2355 = vunpack.c.l.b16 %v2315
    %v2356 = vpack.c.b16 %v2341, %v2340
    %v2357 = vpack.c.b16 %v2343, %v2342
    %v2358 = vpack.c.b16 %v2345, %v2344
    %v2359 = vpack.c.b16 %v2347, %v2346
    %v2360 = vpack.c.b16 %v2349, %v2348
    %v2361 = vpack.c.b16 %v2351, %v2350
    %v2362 = vpack.c.b16 %v2353, %v2352
    %v2363 = vpack.c.b16 %v2355, %v2354
    %2372 = vmatprep.subr.bf16.mxu0 0
    %2373 = vmatpush1.bf16.msra.mxu0 %v2363
    %2374 = vmatprep.subr.bf16.mxu0 0
    %2375 = vmatpush1.bf16.msra.mxu0 %v2362
    %2376 = vmatprep.subr.bf16.mxu0 0
    %2377 = vmatpush1.bf16.msra.mxu0 %v2361
    %2378 = vmatprep.subr.bf16.mxu0 0
    %2379 = vmatpush1.bf16.msra.mxu0 %v2360
    %2380 = vmatprep.subr.bf16.mxu0 0
    %2381 = vmatpush1.bf16.msra.mxu0 %v2359
    %2382 = vmatprep.subr.bf16.mxu0 0
    %2383 = vmatpush1.bf16.msra.mxu0 %v2358
    %2384 = vmatprep.subr.bf16.mxu0 0
    %2385 = vmatpush1.bf16.msra.mxu0 %v2357
    %2386 = vmatprep.subr.bf16.mxu0 0
    %2387 = vmatpush1.bf16.msra.mxu0 %v2356
    %2388 = vmatprep.subr.bf16.mxu0 0
    %2389 = vmatpush2.bf16.msra.mxu0 0
    %2390 = vmatprep.subr.bf16.mxu0 0
    %2391 = vmatpush2.bf16.msra.mxu0 0
    %2392 = vmatprep.subr.bf16.mxu0 0
    %2393 = vmatpush2.bf16.msra.mxu0 0
    %2394 = vmatprep.subr.bf16.mxu0 0
    %2395 = vmatpush2.bf16.msra.mxu0 0
    %2396 = vmatprep.subr.bf16.mxu0 0
    %2397 = vmatpush2.bf16.msra.mxu0 0
    %2398 = vmatprep.subr.bf16.mxu0 0
    %2399 = vmatpush2.bf16.msra.mxu0 0
    %2400 = vmatprep.subr.bf16.mxu0 0
    %2401 = vmatpush2.bf16.msra.mxu0 0
    %2402 = vmatprep.subr.bf16.mxu0 0
    %2403 = vmatpush2.bf16.msra.mxu0 0
    %2404 = vmatprep.mubr.bf16.mxu0 0
    %2405 = vmatmul.mubr.bf16.gmra.mxu0 %v2298
    %v2406 = vpop.f32.mrf.mxu0
    %v2407 = vadd.f32 %v2322, %v2406
    %v2408 = vpop.f32.mrf.mxu0
    %v2409 = vpop.f32.mrf.mxu0
    %v2410 = vadd.f32 %v2322, %v2409
    %v2411 = vpop.f32.mrf.mxu0
    %2412 = vdwg.mxu0
    %v2413 = vadd.f32 %v2208, %v2407
    %v2414 = vadd.f32 %v2209, %v2410
    %s2415 = scalar_lea.vmem [#allocation14], 1
    %v2416 = vld [vmem:[%s2415] sm:$0x1]
    %s2417 = scalar_lea.vmem [#allocation16], 1
    %v2418 = vld [vmem:[%s2417] sm:$0x1]
    %v2419 = vsel %vm378, %v2413, 0.0
    %2420 = vadd.xlane.f32.xlu0 %v2419
    %v2421 = vpop.xlane.xlu0 %2420
    %v2422 = vsel %vm378, %v2414, 0.0
    %2423 = vadd.xlane.f32.xlu0 %v2422
    %v2424 = vpop.xlane.xlu0 %2423
    %v2425 = vmul.f32 %v2421, %v1105
    %v2426 = vmul.f32 %v2424, %v1105
    %v2427 = vsub.f32 %v2413, %v2425
    %v2428 = vsub.f32 %v2414, %v2426
    %v2429 = vmul.f32 %v2427, %v2427
    %v2430 = vmul.f32 %v2428, %v2428
    %v2431 = vsel %vm378, %v2429, 0.0
    %2432 = vadd.xlane.f32.xlu0 %v2431
    %v2433 = vpop.xlane.xlu0 %2432
    %v2434 = vsel %vm378, %v2430, 0.0
    %2435 = vadd.xlane.f32.xlu0 %v2434
    %v2436 = vpop.xlane.xlu0 %2435
    %v2437 = vmul.f32 %v2433, %v1105
    %v2438 = vmul.f32 %v2436, %v1105
    %v2439 = vadd.f32 %v2437, 1e-05
    %v2440 = vadd.f32 %v2438, 1e-05
    %v2441 = vrsqrt.pop %v2439
    %v2442 = vrsqrt.pop %v2440
    %v2443 = vmul.f32 %v2427, %v2441
    %v2444 = vmul.f32 %v2428, %v2442
    %v2446 = vlaneseq
    %v2447 = vshrl.u32 %v2446, 7
    %v2448 = vsub.s32 0, %v2447
    %v2449 = vrot.slane %v2416, %v2448
    %v2451 = vmul.f32 %v2443, %v2449
    %v2452 = vmul.f32 %v2444, %v2449
    %v2454 = vlaneseq
    %v2455 = vshrl.u32 %v2454, 7
    %v2456 = vsub.s32 0, %v2455
    %v2457 = vrot.slane %v2418, %v2456
    %v2459 = vadd.f32 %v2451, %v2457
    %v2460 = vadd.f32 %v2452, %v2457
    %v2462 = vrot.slane %v2459, 7
    %v2465 = vrot.slane %v2460, 6
    %vm2467 = vcmask 1040384
    %v2468 = vsel %vm2467, %v2462, %v2465
    %v2469 = vpack.c.bf16 %v2468, %v2468
    %v2470 = vld [vmem:[#allocation17] sm:$0xf]
    %v2471 = vld [vmem:[#allocation17 + $0x4] sm:$0xf]
    %v2472 = vld [vmem:[#allocation17 + $0x8] sm:$0xf]
    %v2473 = vld [vmem:[#allocation17 + $0xc] sm:$0xf]
    %v2474 = vld [vmem:[#allocation17 + $0x10] sm:$0xf]
    %v2475 = vld [vmem:[#allocation17 + $0x14] sm:$0xf]
    %v2476 = vld [vmem:[#allocation17 + $0x18] sm:$0xf]
    %v2477 = vld [vmem:[#allocation17 + $0x1c] sm:$0xf]
    %v2478 = vld [vmem:[#allocation19] sm:$0x1]
    %v2480 = vlaneseq
    %v2481 = vshrl.u32 %v2480, 7
    %v2482 = vsub.s32 0, %v2481
    %v2483 = vrot.slane %v2478, %v2482
    %v2493 = vunpack.c.l.b16 %v2470
    %v2494 = vunpack.c.l.b16 %v2471
    %v2495 = vunpack.c.l.b16 %v2472
    %v2496 = vunpack.c.l.b16 %v2473
    %v2497 = vunpack.c.l.b16 %v2474
    %v2498 = vunpack.c.l.b16 %v2475
    %v2499 = vunpack.c.l.b16 %v2476
    %v2500 = vunpack.c.l.b16 %v2477
    %v2501 = vpack.c.b16 %v2494, %v2493
    %v2502 = vpack.c.b16 %v2496, %v2495
    %v2503 = vpack.c.b16 %v2498, %v2497
    %v2504 = vpack.c.b16 %v2500, %v2499
    %v2510 = vsel %vm378, %v2469, 0
    %2512 = vmatprep.subr.bf16.mxu0 0
    %2513 = vmatpush1.bf16.msra.mxu0 0
    %2514 = vmatprep.subr.bf16.mxu0 0
    %2515 = vmatpush1.bf16.msra.mxu0 0
    %2516 = vmatprep.subr.bf16.mxu0 0
    %2517 = vmatpush1.bf16.msra.mxu0 0
    %2518 = vmatprep.subr.bf16.mxu0 0
    %2519 = vmatpush1.bf16.msra.mxu0 0
    %2520 = vmatprep.subr.bf16.mxu0 0
    %2521 = vmatpush1.bf16.msra.mxu0 %v2504
    %2522 = vmatprep.subr.bf16.mxu0 0
    %2523 = vmatpush1.bf16.msra.mxu0 %v2503
    %2524 = vmatprep.subr.bf16.mxu0 0
    %2525 = vmatpush1.bf16.msra.mxu0 %v2502
    %2526 = vmatprep.subr.bf16.mxu0 0
    %2527 = vmatpush1.bf16.msra.mxu0 %v2501
    %2528 = vmatprep.subr.bf16.mxu0 0
    %2529 = vmatpush2.bf16.msra.mxu0 0
    %2530 = vmatprep.subr.bf16.mxu0 0
    %2531 = vmatpush2.bf16.msra.mxu0 0
    %2532 = vmatprep.subr.bf16.mxu0 0
    %2533 = vmatpush2.bf16.msra.mxu0 0
    %2534 = vmatprep.subr.bf16.mxu0 0
    %2535 = vmatpush2.bf16.msra.mxu0 0
    %2536 = vmatprep.subr.bf16.mxu0 0
    %2537 = vmatpush2.bf16.msra.mxu0 0
    %2538 = vmatprep.subr.bf16.mxu0 0
    %2539 = vmatpush2.bf16.msra.mxu0 0
    %2540 = vmatprep.subr.bf16.mxu0 0
    %2541 = vmatpush2.bf16.msra.mxu0 0
    %2542 = vmatprep.subr.bf16.mxu0 0
    %2543 = vmatpush2.bf16.msra.mxu0 0
    %2544 = vmatprep.mubr.bf16.mxu0 0
    %2545 = vmatmul.mubr.bf16.gmra.mxu0 %v2510
    %v2546 = vpop.f32.mrf.mxu0
    %v2547 = vadd.f32 %v2483, %v2546
    %v2548 = vpop.f32.mrf.mxu0
    %v2549 = vpop.f32.mrf.mxu0
    %v2550 = vpop.f32.mrf.mxu0
    %2551 = vdwg.mxu0
    %2552 = vst [vmem:[#allocation20] sm:$0x3] %v2547
    // Predicated region
    $region118: #{forward.1} parent=1 // pred_check
      _
    $region119: #{forward.1} parent=1 // pred_check_branch
      %2554 = sbr.rel (0) target = $region121
    $region120: #{forward.1} parent=1 // pred_region
      %s2556 = ssub.s32 32, 32
      %2557 = vsyncadd [#allocation4], %s2556
      %s2559 = sshll.u32 [#allocation20], 4
      %s2560 = int_to_ptr.vmem [resolvable:$true] %s2559
      %2562 = dma.vmem_to_hbm [thread:$0]  %s2560, 32, %s18, [#allocation4]
    $region121: #{forward.1} parent=1 // pred_fallthru
      _
    // Predicated region
    $region122: #{forward.1} parent=1 // pred_check
      _
    $region123: #{forward.1} parent=1 // pred_check_branch
      %2564 = sbr.rel (0) target = $region125
    $region124: #{forward.1} parent=1 // pred_region
      %2565 = dma.done [#allocation4], 32
    $region125: #{forward.1} parent=1 // pred_fallthru
      _
    %2566 = vsyncpa [#allocation3], 1
    %2567 = vsyncpa [#allocation6], 1
    %2568 = vsyncpa [#allocation9], 1
    %2569 = vsyncpa [#allocation12], 1
    %2570 = vsyncpa [#allocation15], 1
    %2571 = vsyncpa [#allocation18], 1
    %2572 = vsyncpa [#allocation4], 1

</llo_original>
